<compile_context>
chip_gen: v7x
topology: tpu7x:2x2x1
jax: 0.10.0
libtpu: 0.0.40
codegen_flags: <defaults>
</compile_context>

<pallas_src>
import functools
import math

import jax
import jax.numpy as jnp
from jax.experimental import pallas as pl
from jax.experimental.pallas import tpu as pltpu

# ---------------- model config (small, consistent with the module) ----------------
VOCAB = 50            # input_size
HIDDEN = 32           # hidden_size
NUM_LAYERS = 2
NUM_HEADS = 2
HEAD_DIM = HIDDEN // NUM_HEADS
INTERMEDIATE = 512
MAX_POS = 2500
NUM_LABELS = 4
LN_EPS = 1e-12


# ---------------- in-kernel math helpers ----------------
def _erf_approx(x):
    # TODO(synk): exact lax.erf lowering on Mosaic is unverified; Abramowitz-Stegun
    # 7.1.26 polynomial (max abs err ~1.5e-7) uses only exp/mul/add.
    p = 0.3275911
    a1, a2, a3, a4, a5 = 0.254829592, -0.284496736, 1.421413741, -1.453152027, 1.061405429
    sgn = jnp.where(x >= 0.0, 1.0, -1.0)
    ax = jnp.abs(x)
    t = 1.0 / (1.0 + p * ax)
    poly = ((((a5 * t + a4) * t + a3) * t + a2) * t + a1) * t
    return sgn * (1.0 - poly * jnp.exp(-ax * ax))


def _gelu(x):
    # BERT gelu: x * 0.5 * (1 + erf(x / sqrt(2)))
    return x * 0.5 * (1.0 + _erf_approx(x * (1.0 / math.sqrt(2.0))))


def _layer_norm(x, g, b):
    u = jnp.mean(x, axis=-1, keepdims=True)
    d = x - u
    var = jnp.mean(d * d, axis=-1, keepdims=True)
    return d * jax.lax.rsqrt(var + LN_EPS) * g + b


# ---------------- the single fused kernel ----------------
def _fused_bert_kernel(
    emb_ref, mask_ref,
    emb_ln_g_ref, emb_ln_b_ref,
    qkv_w_ref, qkv_b_ref,
    ao_w_ref, ao_b_ref, ao_ln_g_ref, ao_ln_b_ref,
    i_w_ref, i_b_ref,
    o_w_ref, o_b_ref, o_ln_g_ref, o_ln_b_ref,
    pool_w_ref, pool_b_ref,
    cls_w_ref, cls_b_ref,
    logits_ref,
    *, batch, seq, num_heads, head_dim, num_layers):
    H = num_heads * head_dim
    scale = 1.0 / math.sqrt(head_dim)

    # embeddings LayerNorm (dropout = identity in eval mode)
    x = _layer_norm(emb_ref[...], emb_ln_g_ref[...], emb_ln_b_ref[...])   # [B*S, H]
    mask = mask_ref[...]                                                  # [B, 1, S]

    for l in range(num_layers):
        # ---- fused QKV projection: one [B*S,H] x [H,3H] matmul ----
        qkv = jnp.dot(x, qkv_w_ref[l], preferred_element_type=jnp.float32) + qkv_b_ref[l]
        q = qkv[:, 0 * H:1 * H]
        k = qkv[:, 1 * H:2 * H]
        v = qkv[:, 2 * H:3 * H]

        # ---- attention, unrolled over (batch, head) with static slices ----
        ctx_rows = []
        for b in range(batch):
            r0 = b * seq
            m_b = mask[b]                                    # [1, S] additive mask
            head_outs = []
            for hh in range(num_heads):
                c0 = hh * head_dim
                q_bh = q[r0:r0 + seq, c0:c0 + head_dim]      # [S, Dh]
                k_bh = k[r0:r0 + seq, c0:c0 + head_dim]
                v_bh = v[r0:r0 + seq, c0:c0 + head_dim]
                s = jax.lax.dot_general(q_bh, k_bh, (((1,), (1,)), ((), ())),
                                        preferred_element_type=jnp.float32)
                s = s * scale + m_b                          # [S, S]
                s = s - jnp.max(s, axis=-1, keepdims=True)   # stable softmax
                p = jnp.exp(s)
                denom = jnp.sum(p, axis=-1, keepdims=True)
                p = p * pl.reciprocal(denom, approx=True)
                head_outs.append(jnp.dot(p, v_bh, preferred_element_type=jnp.float32))
            ctx_rows.append(jnp.concatenate(head_outs, axis=-1))          # [S, H]
        ctx = jnp.concatenate(ctx_rows, axis=0)                            # [B*S, H]

        # ---- attention output dense + fused residual add + LayerNorm ----
        a_out = jnp.dot(ctx, ao_w_ref[l], preferred_element_type=jnp.float32) + ao_b_ref[l]
        x = _layer_norm(a_out + x, ao_ln_g_ref[l], ao_ln_b_ref[l])

        # ---- FFN: intermediate (GELU) + output dense + fused add + LayerNorm ----
        inter = jnp.dot(x, i_w_ref[l], preferred_element_type=jnp.float32) + i_b_ref[l]
        inter = _gelu(inter)
        out = jnp.dot(inter, o_w_ref[l], preferred_element_type=jnp.float32) + o_b_ref[l]
        x = _layer_norm(out + x, o_ln_g_ref[l], o_ln_b_ref[l])

    # ---- pooler (first token per sequence) + classifier, fused epilogue ----
    first = jnp.concatenate([x[b * seq:b * seq + 1, :] for b in range(batch)], axis=0)  # [B, H]
    pooled = jnp.tanh(
        jnp.dot(first, pool_w_ref[...], preferred_element_type=jnp.float32) + pool_b_ref[...])
    logits = jnp.dot(pooled, cls_w_ref[...], preferred_element_type=jnp.float32) + cls_b_ref[...]
    logits_ref[...] = logits.astype(logits_ref.dtype)


def _full_vmem_spec(arr):
    nd = arr.ndim
    return pl.BlockSpec(tuple(arr.shape), lambda i, _nd=nd: (0,) * _nd)


# ---------------- parameter construction (deterministic, synthetic) ----------------
def init_params(key):
    def normal(k, shape):
        return 0.02 * jax.random.normal(k, shape, dtype=jnp.float32)

    keys = iter(jax.random.split(key, 16))
    L, H, I = NUM_LAYERS, HIDDEN, INTERMEDIATE
    return {
        "word_emb": normal(next(keys), (VOCAB, H)),
        "pos_emb": normal(next(keys), (MAX_POS, H)),
        "tok_emb": normal(next(keys), (2, H)),
        "emb_ln_g": jnp.ones((1, H), jnp.float32),
        "emb_ln_b": jnp.zeros((1, H), jnp.float32),
        # per-layer weights stacked along a leading layer axis; QKV fused along columns
        "qkv_w": normal(next(keys), (L, H, 3 * H)),
        "qkv_b": jnp.zeros((L, 1, 3 * H), jnp.float32),
        "ao_w": normal(next(keys), (L, H, H)),
        "ao_b": jnp.zeros((L, 1, H), jnp.float32),
        "ao_ln_g": jnp.ones((L, 1, H), jnp.float32),
        "ao_ln_b": jnp.zeros((L, 1, H), jnp.float32),
        "i_w": normal(next(keys), (L, H, I)),
        "i_b": jnp.zeros((L, 1, I), jnp.float32),
        "o_w": normal(next(keys), (L, I, H)),
        "o_b": jnp.zeros((L, 1, H), jnp.float32),
        "o_ln_g": jnp.ones((L, 1, H), jnp.float32),
        "o_ln_b": jnp.zeros((L, 1, H), jnp.float32),
        "pool_w": normal(next(keys), (H, H)),
        "pool_b": jnp.zeros((1, H), jnp.float32),
        "cls_w": normal(next(keys), (H, NUM_LABELS)),
        "cls_b": jnp.zeros((1, NUM_LABELS), jnp.float32),
    }


# ---------------- forward pass: embedding gathers in JAX, everything else fused ----------------
def my_bert_forward(params, input_ids, token_type_ids=None, attention_mask=None):
    B, S = input_ids.shape
    if token_type_ids is None:
        token_type_ids = jnp.zeros_like(input_ids)
    if attention_mask is None:
        attention_mask = jnp.ones_like(input_ids)
    ext_mask = ((1.0 - attention_mask.astype(jnp.float32)) * -10000.0).reshape(B, 1, S)

    # TODO(synk): embedding table gathers stay in JAX glue (no clean tiny-scale Pallas gather).
    pos_ids = jnp.arange(S, dtype=jnp.int32)
    emb = (params["word_emb"][input_ids]
           + params["pos_emb"][pos_ids][None, :, :]
           + params["tok_emb"][token_type_ids]).reshape(B * S, HIDDEN)

    inputs = [
        emb, ext_mask,
        params["emb_ln_g"], params["emb_ln_b"],
        params["qkv_w"], params["qkv_b"],
        params["ao_w"], params["ao_b"], params["ao_ln_g"], params["ao_ln_b"],
        params["i_w"], params["i_b"],
        params["o_w"], params["o_b"], params["o_ln_g"], params["o_ln_b"],
        params["pool_w"], params["pool_b"],
        params["cls_w"], params["cls_b"],
    ]

    kern = functools.partial(
        _fused_bert_kernel, batch=B, seq=S,
        num_heads=NUM_HEADS, head_dim=HEAD_DIM, num_layers=NUM_LAYERS)

    logits = pl.pallas_call(
        kern,
        out_shape=jax.ShapeDtypeStruct((B, NUM_LABELS), jnp.float32),
        grid=(1,),
        in_specs=[_full_vmem_spec(a) for a in inputs],
        out_specs=pl.BlockSpec((B, NUM_LABELS), lambda i: (0, 0)),
        compiler_params=pltpu.CompilerParams(dimension_semantics=("arbitrary",)),
    )(*inputs)
    return {"output": logits}


if __name__ == "__main__":
    key = jax.random.PRNGKey(0)
    pkey, dkey = jax.random.split(key)
    params = init_params(pkey)

    B, S = 2, 8
    input_ids = jax.random.randint(dkey, (B, S), 0, VOCAB, dtype=jnp.int32)
    token_type_ids = jnp.zeros((B, S), jnp.int32)
    attention_mask = jnp.ones((B, S), jnp.int32)

    fwd = jax.jit(my_bert_forward)
    out = fwd(params, input_ids, token_type_ids, attention_mask)
    logits = jax.block_until_ready(out["output"])
    assert logits.shape == (B, NUM_LABELS), logits.shape
    assert bool(jnp.all(jnp.isfinite(logits)))
    print("KERNEL_OK")
</pallas_src>

<mosaic_0001>
module attributes {stable_mosaic.version = 11 : i64} {
  func.func @_fused_bert_kernel(%arg0: i32, %arg1: memref<16x32xf32, #tpu.memory_space<vmem>>, %arg2: memref<2x1x8xf32, #tpu.memory_space<vmem>>, %arg3: memref<1x32xf32, #tpu.memory_space<vmem>>, %arg4: memref<1x32xf32, #tpu.memory_space<vmem>>, %arg5: memref<2x32x96xf32, #tpu.memory_space<vmem>>, %arg6: memref<2x1x96xf32, #tpu.memory_space<vmem>>, %arg7: memref<2x32x32xf32, #tpu.memory_space<vmem>>, %arg8: memref<2x1x32xf32, #tpu.memory_space<vmem>>, %arg9: memref<2x1x32xf32, #tpu.memory_space<vmem>>, %arg10: memref<2x1x32xf32, #tpu.memory_space<vmem>>, %arg11: memref<2x32x512xf32, #tpu.memory_space<vmem>>, %arg12: memref<2x1x512xf32, #tpu.memory_space<vmem>>, %arg13: memref<2x512x32xf32, #tpu.memory_space<vmem>>, %arg14: memref<2x1x32xf32, #tpu.memory_space<vmem>>, %arg15: memref<2x1x32xf32, #tpu.memory_space<vmem>>, %arg16: memref<2x1x32xf32, #tpu.memory_space<vmem>>, %arg17: memref<32x32xf32, #tpu.memory_space<vmem>>, %arg18: memref<1x32xf32, #tpu.memory_space<vmem>>, %arg19: memref<32x4xf32, #tpu.memory_space<vmem>>, %arg20: memref<1x4xf32, #tpu.memory_space<vmem>>, %arg21: memref<2x4xf32, #tpu.memory_space<vmem>>) attributes {dimension_semantics = [#tpu.dimension_semantics<arbitrary>], iteration_bounds = array<i64: 1>, scalar_prefetch = 0 : i64, scratch_operands = 0 : i64, tpu.core_type = #tpu.core_type<tc>, window_params = [{pipeline_mode = #tpu.pipeline_mode<synchronous>, transform_indices = @transform_0, window_bounds = array<i64: 16, 32>}, {pipeline_mode = #tpu.pipeline_mode<synchronous>, transform_indices = @transform_1, window_bounds = array<i64: 2, 1, 8>}, {pipeline_mode = #tpu.pipeline_mode<synchronous>, transform_indices = @transform_2, window_bounds = array<i64: 1, 32>}, {pipeline_mode = #tpu.pipeline_mode<synchronous>, transform_indices = @transform_3, window_bounds = array<i64: 1, 32>}, {pipeline_mode = #tpu.pipeline_mode<synchronous>, transform_indices = @transform_4, window_bounds = array<i64: 2, 32, 96>}, {pipeline_mode = #tpu.pipeline_mode<synchronous>, transform_indices = @transform_5, window_bounds = array<i64: 2, 1, 96>}, {pipeline_mode = #tpu.pipeline_mode<synchronous>, transform_indices = @transform_6, window_bounds = array<i64: 2, 32, 32>}, {pipeline_mode = #tpu.pipeline_mode<synchronous>, transform_indices = @transform_7, window_bounds = array<i64: 2, 1, 32>}, {pipeline_mode = #tpu.pipeline_mode<synchronous>, transform_indices = @transform_8, window_bounds = array<i64: 2, 1, 32>}, {pipeline_mode = #tpu.pipeline_mode<synchronous>, transform_indices = @transform_9, window_bounds = array<i64: 2, 1, 32>}, {pipeline_mode = #tpu.pipeline_mode<synchronous>, transform_indices = @transform_10, window_bounds = array<i64: 2, 32, 512>}, {pipeline_mode = #tpu.pipeline_mode<synchronous>, transform_indices = @transform_11, window_bounds = array<i64: 2, 1, 512>}, {pipeline_mode = #tpu.pipeline_mode<synchronous>, transform_indices = @transform_12, window_bounds = array<i64: 2, 512, 32>}, {pipeline_mode = #tpu.pipeline_mode<synchronous>, transform_indices = @transform_13, window_bounds = array<i64: 2, 1, 32>}, {pipeline_mode = #tpu.pipeline_mode<synchronous>, transform_indices = @transform_14, window_bounds = array<i64: 2, 1, 32>}, {pipeline_mode = #tpu.pipeline_mode<synchronous>, transform_indices = @transform_15, window_bounds = array<i64: 2, 1, 32>}, {pipeline_mode = #tpu.pipeline_mode<synchronous>, transform_indices = @transform_16, window_bounds = array<i64: 32, 32>}, {pipeline_mode = #tpu.pipeline_mode<synchronous>, transform_indices = @transform_17, window_bounds = array<i64: 1, 32>}, {pipeline_mode = #tpu.pipeline_mode<synchronous>, transform_indices = @transform_18, window_bounds = array<i64: 32, 4>}, {pipeline_mode = #tpu.pipeline_mode<synchronous>, transform_indices = @transform_19, window_bounds = array<i64: 1, 4>}, {pipeline_mode = #tpu.pipeline_mode<synchronous>, transform_indices = @transform_20, window_bounds = array<i64: 2, 4>}]} {
    %c0 = arith.constant 0 : index
    %c0_0 = arith.constant 0 : index
    %0 = vector.load %arg1[%c0, %c0_0] : memref<16x32xf32, #tpu.memory_space<vmem>>, vector<16x32xf32>
    %c0_1 = arith.constant 0 : index
    %c0_2 = arith.constant 0 : index
    %1 = vector.load %arg3[%c0_1, %c0_2] : memref<1x32xf32, #tpu.memory_space<vmem>>, vector<1x32xf32>
    %c0_3 = arith.constant 0 : index
    %c0_4 = arith.constant 0 : index
    %2 = vector.load %arg4[%c0_3, %c0_4] : memref<1x32xf32, #tpu.memory_space<vmem>>, vector<1x32xf32>
    %cst = arith.constant dense<0.000000e+00> : vector<16xf32>
    %3 = vector.multi_reduction <add>, %0, %cst [1] : vector<16x32xf32> to vector<16xf32>
    %4 = vector.shape_cast %3 : vector<16xf32> to vector<16x1xf32>
    %cst_5 = arith.constant 3.200000e+01 : f32
    %5 = vector.broadcast %cst_5 : f32 to vector<16x1xf32>
    %6 = arith.divf %4, %5 : vector<16x1xf32>
    %7 = vector.broadcast %6 : vector<16x1xf32> to vector<16x32xf32>
    %8 = arith.subf %0, %7 : vector<16x32xf32>
    %9 = arith.mulf %8, %8 : vector<16x32xf32>
    %cst_6 = arith.constant dense<0.000000e+00> : vector<16xf32>
    %10 = vector.multi_reduction <add>, %9, %cst_6 [1] : vector<16x32xf32> to vector<16xf32>
    %11 = vector.shape_cast %10 : vector<16xf32> to vector<16x1xf32>
    %cst_7 = arith.constant 3.200000e+01 : f32
    %12 = vector.broadcast %cst_7 : f32 to vector<16x1xf32>
    %13 = arith.divf %11, %12 : vector<16x1xf32>
    %cst_8 = arith.constant 9.99999996E-13 : f32
    %14 = vector.broadcast %cst_8 : f32 to vector<16x1xf32>
    %15 = arith.addf %13, %14 : vector<16x1xf32>
    %16 = math.rsqrt %15 : vector<16x1xf32>
    %17 = vector.broadcast %16 : vector<16x1xf32> to vector<16x32xf32>
    %18 = arith.mulf %8, %17 : vector<16x32xf32>
    %19 = vector.broadcast %1 : vector<1x32xf32> to vector<16x32xf32>
    %20 = arith.mulf %18, %19 : vector<16x32xf32>
    %21 = vector.broadcast %2 : vector<1x32xf32> to vector<16x32xf32>
    %22 = arith.addf %20, %21 : vector<16x32xf32>
    %c0_9 = arith.constant 0 : index
    %c0_10 = arith.constant 0 : index
    %c0_11 = arith.constant 0 : index
    %23 = vector.load %arg2[%c0_9, %c0_10, %c0_11] : memref<2x1x8xf32, #tpu.memory_space<vmem>>, vector<2x1x8xf32>
    %c0_12 = arith.constant 0 : index
    %c0_13 = arith.constant 0 : index
    %c0_14 = arith.constant 0 : index
    %24 = vector.load %arg5[%c0_12, %c0_13, %c0_14] : memref<2x32x96xf32, #tpu.memory_space<vmem>>, vector<1x32x96xf32>
    %25 = vector.shape_cast %24 : vector<1x32x96xf32> to vector<32x96xf32>
    %cst_15 = arith.constant dense<0.000000e+00> : vector<16x96xf32>
    %26 = tpu.matmul %22, %25, %cst_15 {dimension_numbers = #tpu.dot_dimension_numbers<[1], [0], [0], [1], [0, 0, 1, 1], [], []>} : vector<16x32xf32>, vector<32x96xf32>, vector<16x96xf32> -> vector<16x96xf32>
    %c0_16 = arith.constant 0 : index
    %c0_17 = arith.constant 0 : index
    %c0_18 = arith.constant 0 : index
    %27 = vector.load %arg6[%c0_16, %c0_17, %c0_18] : memref<2x1x96xf32, #tpu.memory_space<vmem>>, vector<1x1x96xf32>
    %28 = vector.shape_cast %27 : vector<1x1x96xf32> to vector<1x96xf32>
    %29 = vector.broadcast %28 : vector<1x96xf32> to vector<16x96xf32>
    %30 = arith.addf %26, %29 : vector<16x96xf32>
    %31 = vector.extract_strided_slice %30 {offsets = [0, 0], sizes = [16, 32], strides = [1, 1]} : vector<16x96xf32> to vector<16x32xf32>
    %32 = vector.extract_strided_slice %30 {offsets = [0, 32], sizes = [16, 32], strides = [1, 1]} : vector<16x96xf32> to vector<16x32xf32>
    %33 = vector.extract_strided_slice %30 {offsets = [0, 64], sizes = [16, 32], strides = [1, 1]} : vector<16x96xf32> to vector<16x32xf32>
    %34 = vector.extract_strided_slice %23 {offsets = [0, 0, 0], sizes = [1, 1, 8], strides = [1, 1, 1]} : vector<2x1x8xf32> to vector<1x1x8xf32>
    %35 = vector.shape_cast %34 : vector<1x1x8xf32> to vector<1x8xf32>
    %36 = vector.extract_strided_slice %31 {offsets = [0, 0], sizes = [8, 16], strides = [1, 1]} : vector<16x32xf32> to vector<8x16xf32>
    %37 = vector.extract_strided_slice %32 {offsets = [0, 0], sizes = [8, 16], strides = [1, 1]} : vector<16x32xf32> to vector<8x16xf32>
    %38 = vector.extract_strided_slice %33 {offsets = [0, 0], sizes = [8, 16], strides = [1, 1]} : vector<16x32xf32> to vector<8x16xf32>
    %cst_19 = arith.constant dense<0.000000e+00> : vector<8x8xf32>
    %39 = tpu.matmul %36, %37, %cst_19 {dimension_numbers = #tpu.dot_dimension_numbers<[1], [1], [0], [0], [0, 0, 1, 0], [], []>} : vector<8x16xf32>, vector<8x16xf32>, vector<8x8xf32> -> vector<8x8xf32>
    %cst_20 = arith.constant 2.500000e-01 : f32
    %40 = vector.broadcast %cst_20 : f32 to vector<8x8xf32>
    %41 = arith.mulf %39, %40 : vector<8x8xf32>
    %42 = vector.broadcast %35 : vector<1x8xf32> to vector<8x8xf32>
    %43 = arith.addf %41, %42 : vector<8x8xf32>
    %cst_21 = arith.constant dense<0xFF800000> : vector<8xf32>
    %44 = vector.multi_reduction <maximumf>, %43, %cst_21 [1] : vector<8x8xf32> to vector<8xf32>
    %45 = vector.shape_cast %44 : vector<8xf32> to vector<8x1xf32>
    %46 = vector.broadcast %45 : vector<8x1xf32> to vector<8x8xf32>
    %47 = arith.subf %43, %46 : vector<8x8xf32>
    %48 = math.exp %47 : vector<8x8xf32>
    %cst_22 = arith.constant dense<0.000000e+00> : vector<8xf32>
    %49 = vector.multi_reduction <add>, %48, %cst_22 [1] : vector<8x8xf32> to vector<8xf32>
    %50 = vector.shape_cast %49 : vector<8xf32> to vector<8x1xf32>
    %51 = tpu.reciprocal %50 {approx = true} : vector<8x1xf32> -> vector<8x1xf32>
    %52 = vector.broadcast %51 : vector<8x1xf32> to vector<8x8xf32>
    %53 = arith.mulf %48, %52 : vector<8x8xf32>
    %cst_23 = arith.constant dense<0.000000e+00> : vector<8x16xf32>
    %54 = tpu.matmul %53, %38, %cst_23 {dimension_numbers = #tpu.dot_dimension_numbers<[1], [0], [0], [1], [0, 0, 1, 1], [], []>} : vector<8x8xf32>, vector<8x16xf32>, vector<8x16xf32> -> vector<8x16xf32>
    %55 = vector.extract_strided_slice %31 {offsets = [0, 16], sizes = [8, 16], strides = [1, 1]} : vector<16x32xf32> to vector<8x16xf32>
    %56 = vector.extract_strided_slice %32 {offsets = [0, 16], sizes = [8, 16], strides = [1, 1]} : vector<16x32xf32> to vector<8x16xf32>
    %57 = vector.extract_strided_slice %33 {offsets = [0, 16], sizes = [8, 16], strides = [1, 1]} : vector<16x32xf32> to vector<8x16xf32>
    %cst_24 = arith.constant dense<0.000000e+00> : vector<8x8xf32>
    %58 = tpu.matmul %55, %56, %cst_24 {dimension_numbers = #tpu.dot_dimension_numbers<[1], [1], [0], [0], [0, 0, 1, 0], [], []>} : vector<8x16xf32>, vector<8x16xf32>, vector<8x8xf32> -> vector<8x8xf32>
    %cst_25 = arith.constant 2.500000e-01 : f32
    %59 = vector.broadcast %cst_25 : f32 to vector<8x8xf32>
    %60 = arith.mulf %58, %59 : vector<8x8xf32>
    %61 = vector.broadcast %35 : vector<1x8xf32> to vector<8x8xf32>
    %62 = arith.addf %60, %61 : vector<8x8xf32>
    %cst_26 = arith.constant dense<0xFF800000> : vector<8xf32>
    %63 = vector.multi_reduction <maximumf>, %62, %cst_26 [1] : vector<8x8xf32> to vector<8xf32>
    %64 = vector.shape_cast %63 : vector<8xf32> to vector<8x1xf32>
    %65 = vector.broadcast %64 : vector<8x1xf32> to vector<8x8xf32>
    %66 = arith.subf %62, %65 : vector<8x8xf32>
    %67 = math.exp %66 : vector<8x8xf32>
    %cst_27 = arith.constant dense<0.000000e+00> : vector<8xf32>
    %68 = vector.multi_reduction <add>, %67, %cst_27 [1] : vector<8x8xf32> to vector<8xf32>
    %69 = vector.shape_cast %68 : vector<8xf32> to vector<8x1xf32>
    %70 = tpu.reciprocal %69 {approx = true} : vector<8x1xf32> -> vector<8x1xf32>
    %71 = vector.broadcast %70 : vector<8x1xf32> to vector<8x8xf32>
    %72 = arith.mulf %67, %71 : vector<8x8xf32>
    %cst_28 = arith.constant dense<0.000000e+00> : vector<8x16xf32>
    %73 = tpu.matmul %72, %57, %cst_28 {dimension_numbers = #tpu.dot_dimension_numbers<[1], [0], [0], [1], [0, 0, 1, 1], [], []>} : vector<8x8xf32>, vector<8x16xf32>, vector<8x16xf32> -> vector<8x16xf32>
    %74 = tpu.concatenate %54, %73 in 1 : vector<8x16xf32>, vector<8x16xf32> -> vector<8x32xf32>
    %75 = vector.extract_strided_slice %23 {offsets = [1, 0, 0], sizes = [1, 1, 8], strides = [1, 1, 1]} : vector<2x1x8xf32> to vector<1x1x8xf32>
    %76 = vector.shape_cast %75 : vector<1x1x8xf32> to vector<1x8xf32>
    %77 = vector.extract_strided_slice %31 {offsets = [8, 0], sizes = [8, 16], strides = [1, 1]} : vector<16x32xf32> to vector<8x16xf32>
    %78 = vector.extract_strided_slice %32 {offsets = [8, 0], sizes = [8, 16], strides = [1, 1]} : vector<16x32xf32> to vector<8x16xf32>
    %79 = vector.extract_strided_slice %33 {offsets = [8, 0], sizes = [8, 16], strides = [1, 1]} : vector<16x32xf32> to vector<8x16xf32>
    %cst_29 = arith.constant dense<0.000000e+00> : vector<8x8xf32>
    %80 = tpu.matmul %77, %78, %cst_29 {dimension_numbers = #tpu.dot_dimension_numbers<[1], [1], [0], [0], [0, 0, 1, 0], [], []>} : vector<8x16xf32>, vector<8x16xf32>, vector<8x8xf32> -> vector<8x8xf32>
    %cst_30 = arith.constant 2.500000e-01 : f32
    %81 = vector.broadcast %cst_30 : f32 to vector<8x8xf32>
    %82 = arith.mulf %80, %81 : vector<8x8xf32>
    %83 = vector.broadcast %76 : vector<1x8xf32> to vector<8x8xf32>
    %84 = arith.addf %82, %83 : vector<8x8xf32>
    %cst_31 = arith.constant dense<0xFF800000> : vector<8xf32>
    %85 = vector.multi_reduction <maximumf>, %84, %cst_31 [1] : vector<8x8xf32> to vector<8xf32>
    %86 = vector.shape_cast %85 : vector<8xf32> to vector<8x1xf32>
    %87 = vector.broadcast %86 : vector<8x1xf32> to vector<8x8xf32>
    %88 = arith.subf %84, %87 : vector<8x8xf32>
    %89 = math.exp %88 : vector<8x8xf32>
    %cst_32 = arith.constant dense<0.000000e+00> : vector<8xf32>
    %90 = vector.multi_reduction <add>, %89, %cst_32 [1] : vector<8x8xf32> to vector<8xf32>
    %91 = vector.shape_cast %90 : vector<8xf32> to vector<8x1xf32>
    %92 = tpu.reciprocal %91 {approx = true} : vector<8x1xf32> -> vector<8x1xf32>
    %93 = vector.broadcast %92 : vector<8x1xf32> to vector<8x8xf32>
    %94 = arith.mulf %89, %93 : vector<8x8xf32>
    %cst_33 = arith.constant dense<0.000000e+00> : vector<8x16xf32>
    %95 = tpu.matmul %94, %79, %cst_33 {dimension_numbers = #tpu.dot_dimension_numbers<[1], [0], [0], [1], [0, 0, 1, 1], [], []>} : vector<8x8xf32>, vector<8x16xf32>, vector<8x16xf32> -> vector<8x16xf32>
    %96 = vector.extract_strided_slice %31 {offsets = [8, 16], sizes = [8, 16], strides = [1, 1]} : vector<16x32xf32> to vector<8x16xf32>
    %97 = vector.extract_strided_slice %32 {offsets = [8, 16], sizes = [8, 16], strides = [1, 1]} : vector<16x32xf32> to vector<8x16xf32>
    %98 = vector.extract_strided_slice %33 {offsets = [8, 16], sizes = [8, 16], strides = [1, 1]} : vector<16x32xf32> to vector<8x16xf32>
    %cst_34 = arith.constant dense<0.000000e+00> : vector<8x8xf32>
    %99 = tpu.matmul %96, %97, %cst_34 {dimension_numbers = #tpu.dot_dimension_numbers<[1], [1], [0], [0], [0, 0, 1, 0], [], []>} : vector<8x16xf32>, vector<8x16xf32>, vector<8x8xf32> -> vector<8x8xf32>
    %cst_35 = arith.constant 2.500000e-01 : f32
    %100 = vector.broadcast %cst_35 : f32 to vector<8x8xf32>
    %101 = arith.mulf %99, %100 : vector<8x8xf32>
    %102 = vector.broadcast %76 : vector<1x8xf32> to vector<8x8xf32>
    %103 = arith.addf %101, %102 : vector<8x8xf32>
    %cst_36 = arith.constant dense<0xFF800000> : vector<8xf32>
    %104 = vector.multi_reduction <maximumf>, %103, %cst_36 [1] : vector<8x8xf32> to vector<8xf32>
    %105 = vector.shape_cast %104 : vector<8xf32> to vector<8x1xf32>
    %106 = vector.broadcast %105 : vector<8x1xf32> to vector<8x8xf32>
    %107 = arith.subf %103, %106 : vector<8x8xf32>
    %108 = math.exp %107 : vector<8x8xf32>
    %cst_37 = arith.constant dense<0.000000e+00> : vector<8xf32>
    %109 = vector.multi_reduction <add>, %108, %cst_37 [1] : vector<8x8xf32> to vector<8xf32>
    %110 = vector.shape_cast %109 : vector<8xf32> to vector<8x1xf32>
    %111 = tpu.reciprocal %110 {approx = true} : vector<8x1xf32> -> vector<8x1xf32>
    %112 = vector.broadcast %111 : vector<8x1xf32> to vector<8x8xf32>
    %113 = arith.mulf %108, %112 : vector<8x8xf32>
    %cst_38 = arith.constant dense<0.000000e+00> : vector<8x16xf32>
    %114 = tpu.matmul %113, %98, %cst_38 {dimension_numbers = #tpu.dot_dimension_numbers<[1], [0], [0], [1], [0, 0, 1, 1], [], []>} : vector<8x8xf32>, vector<8x16xf32>, vector<8x16xf32> -> vector<8x16xf32>
    %115 = tpu.concatenate %95, %114 in 1 : vector<8x16xf32>, vector<8x16xf32> -> vector<8x32xf32>
    %116 = tpu.concatenate %74, %115 in 0 : vector<8x32xf32>, vector<8x32xf32> -> vector<16x32xf32>
    %c0_39 = arith.constant 0 : index
    %c0_40 = arith.constant 0 : index
    %c0_41 = arith.constant 0 : index
    %117 = vector.load %arg7[%c0_39, %c0_40, %c0_41] : memref<2x32x32xf32, #tpu.memory_space<vmem>>, vector<1x32x32xf32>
    %118 = vector.shape_cast %117 : vector<1x32x32xf32> to vector<32x32xf32>
    %cst_42 = arith.constant dense<0.000000e+00> : vector<16x32xf32>
    %119 = tpu.matmul %116, %118, %cst_42 {dimension_numbers = #tpu.dot_dimension_numbers<[1], [0], [0], [1], [0, 0, 1, 1], [], []>} : vector<16x32xf32>, vector<32x32xf32>, vector<16x32xf32> -> vector<16x32xf32>
    %c0_43 = arith.constant 0 : index
    %c0_44 = arith.constant 0 : index
    %c0_45 = arith.constant 0 : index
    %120 = vector.load %arg8[%c0_43, %c0_44, %c0_45] : memref<2x1x32xf32, #tpu.memory_space<vmem>>, vector<1x1x32xf32>
    %121 = vector.shape_cast %120 : vector<1x1x32xf32> to vector<1x32xf32>
    %122 = vector.broadcast %121 : vector<1x32xf32> to vector<16x32xf32>
    %123 = arith.addf %119, %122 : vector<16x32xf32>
    %124 = arith.addf %123, %22 : vector<16x32xf32>
    %c0_46 = arith.constant 0 : index
    %c0_47 = arith.constant 0 : index
    %c0_48 = arith.constant 0 : index
    %125 = vector.load %arg9[%c0_46, %c0_47, %c0_48] : memref<2x1x32xf32, #tpu.memory_space<vmem>>, vector<1x1x32xf32>
    %126 = vector.shape_cast %125 : vector<1x1x32xf32> to vector<1x32xf32>
    %c0_49 = arith.constant 0 : index
    %c0_50 = arith.constant 0 : index
    %c0_51 = arith.constant 0 : index
    %127 = vector.load %arg10[%c0_49, %c0_50, %c0_51] : memref<2x1x32xf32, #tpu.memory_space<vmem>>, vector<1x1x32xf32>
    %128 = vector.shape_cast %127 : vector<1x1x32xf32> to vector<1x32xf32>
    %cst_52 = arith.constant dense<0.000000e+00> : vector<16xf32>
    %129 = vector.multi_reduction <add>, %124, %cst_52 [1] : vector<16x32xf32> to vector<16xf32>
    %130 = vector.shape_cast %129 : vector<16xf32> to vector<16x1xf32>
    %cst_53 = arith.constant 3.200000e+01 : f32
    %131 = vector.broadcast %cst_53 : f32 to vector<16x1xf32>
    %132 = arith.divf %130, %131 : vector<16x1xf32>
    %133 = vector.broadcast %132 : vector<16x1xf32> to vector<16x32xf32>
    %134 = arith.subf %124, %133 : vector<16x32xf32>
    %135 = arith.mulf %134, %134 : vector<16x32xf32>
    %cst_54 = arith.constant dense<0.000000e+00> : vector<16xf32>
    %136 = vector.multi_reduction <add>, %135, %cst_54 [1] : vector<16x32xf32> to vector<16xf32>
    %137 = vector.shape_cast %136 : vector<16xf32> to vector<16x1xf32>
    %cst_55 = arith.constant 3.200000e+01 : f32
    %138 = vector.broadcast %cst_55 : f32 to vector<16x1xf32>
    %139 = arith.divf %137, %138 : vector<16x1xf32>
    %cst_56 = arith.constant 9.99999996E-13 : f32
    %140 = vector.broadcast %cst_56 : f32 to vector<16x1xf32>
    %141 = arith.addf %139, %140 : vector<16x1xf32>
    %142 = math.rsqrt %141 : vector<16x1xf32>
    %143 = vector.broadcast %142 : vector<16x1xf32> to vector<16x32xf32>
    %144 = arith.mulf %134, %143 : vector<16x32xf32>
    %145 = vector.broadcast %126 : vector<1x32xf32> to vector<16x32xf32>
    %146 = arith.mulf %144, %145 : vector<16x32xf32>
    %147 = vector.broadcast %128 : vector<1x32xf32> to vector<16x32xf32>
    %148 = arith.addf %146, %147 : vector<16x32xf32>
    %c0_57 = arith.constant 0 : index
    %c0_58 = arith.constant 0 : index
    %c0_59 = arith.constant 0 : index
    %149 = vector.load %arg11[%c0_57, %c0_58, %c0_59] : memref<2x32x512xf32, #tpu.memory_space<vmem>>, vector<1x32x512xf32>
    %150 = vector.shape_cast %149 : vector<1x32x512xf32> to vector<32x512xf32>
    %cst_60 = arith.constant dense<0.000000e+00> : vector<16x512xf32>
    %151 = tpu.matmul %148, %150, %cst_60 {dimension_numbers = #tpu.dot_dimension_numbers<[1], [0], [0], [1], [0, 0, 1, 1], [], []>} : vector<16x32xf32>, vector<32x512xf32>, vector<16x512xf32> -> vector<16x512xf32>
    %c0_61 = arith.constant 0 : index
    %c0_62 = arith.constant 0 : index
    %c0_63 = arith.constant 0 : index
    %152 = vector.load %arg12[%c0_61, %c0_62, %c0_63] : memref<2x1x512xf32, #tpu.memory_space<vmem>>, vector<1x1x512xf32>
    %153 = vector.shape_cast %152 : vector<1x1x512xf32> to vector<1x512xf32>
    %154 = vector.broadcast %153 : vector<1x512xf32> to vector<16x512xf32>
    %155 = arith.addf %151, %154 : vector<16x512xf32>
    %cst_64 = arith.constant 5.000000e-01 : f32
    %156 = vector.broadcast %cst_64 : f32 to vector<16x512xf32>
    %157 = arith.mulf %155, %156 : vector<16x512xf32>
    %cst_65 = arith.constant 0.707106769 : f32
    %158 = vector.broadcast %cst_65 : f32 to vector<16x512xf32>
    %159 = arith.mulf %155, %158 : vector<16x512xf32>
    %cst_66 = arith.constant 0.000000e+00 : f32
    %160 = vector.broadcast %cst_66 : f32 to vector<16x512xf32>
    %161 = arith.cmpf oge, %159, %160 : vector<16x512xf32>
    %cst_67 = arith.constant 1.000000e+00 : f32
    %cst_68 = arith.constant -1.000000e+00 : f32
    %162 = vector.broadcast %cst_67 : f32 to vector<16x512xf32>
    %163 = vector.broadcast %cst_68 : f32 to vector<16x512xf32>
    %164 = arith.select %161, %162, %163 : vector<16x512xi1>, vector<16x512xf32>
    %165 = math.absf %159 : vector<16x512xf32>
    %cst_69 = arith.constant 0.327591091 : f32
    %166 = vector.broadcast %cst_69 : f32 to vector<16x512xf32>
    %167 = arith.mulf %166, %165 : vector<16x512xf32>
    %cst_70 = arith.constant 1.000000e+00 : f32
    %168 = vector.broadcast %cst_70 : f32 to vector<16x512xf32>
    %169 = arith.addf %168, %167 : vector<16x512xf32>
    %cst_71 = arith.constant 1.000000e+00 : f32
    %170 = vector.broadcast %cst_71 : f32 to vector<16x512xf32>
    %171 = arith.divf %170, %169 : vector<16x512xf32>
    %cst_72 = arith.constant 1.06140542 : f32
    %172 = vector.broadcast %cst_72 : f32 to vector<16x512xf32>
    %173 = arith.mulf %172, %171 : vector<16x512xf32>
    %cst_73 = arith.constant -1.45315206 : f32
    %174 = vector.broadcast %cst_73 : f32 to vector<16x512xf32>
    %175 = arith.addf %173, %174 : vector<16x512xf32>
    %176 = arith.mulf %175, %171 : vector<16x512xf32>
    %cst_74 = arith.constant 1.42141378 : f32
    %177 = vector.broadcast %cst_74 : f32 to vector<16x512xf32>
    %178 = arith.addf %176, %177 : vector<16x512xf32>
    %179 = arith.mulf %178, %171 : vector<16x512xf32>
    %cst_75 = arith.constant -0.284496725 : f32
    %180 = vector.broadcast %cst_75 : f32 to vector<16x512xf32>
    %181 = arith.addf %179, %180 : vector<16x512xf32>
    %182 = arith.mulf %181, %171 : vector<16x512xf32>
    %cst_76 = arith.constant 0.254829586 : f32
    %183 = vector.broadcast %cst_76 : f32 to vector<16x512xf32>
    %184 = arith.addf %182, %183 : vector<16x512xf32>
    %185 = arith.mulf %184, %171 : vector<16x512xf32>
    %cst_77 = arith.constant 0.000000e+00 : f32
    %186 = vector.broadcast %cst_77 : f32 to vector<16x512xf32>
    %187 = arith.subf %186, %165 : vector<16x512xf32>
    %188 = arith.mulf %187, %165 : vector<16x512xf32>
    %189 = math.exp %188 : vector<16x512xf32>
    %190 = arith.mulf %185, %189 : vector<16x512xf32>
    %cst_78 = arith.constant 1.000000e+00 : f32
    %191 = vector.broadcast %cst_78 : f32 to vector<16x512xf32>
    %192 = arith.subf %191, %190 : vector<16x512xf32>
    %193 = arith.mulf %164, %192 : vector<16x512xf32>
    %cst_79 = arith.constant 1.000000e+00 : f32
    %194 = vector.broadcast %cst_79 : f32 to vector<16x512xf32>
    %195 = arith.addf %194, %193 : vector<16x512xf32>
    %196 = arith.mulf %157, %195 : vector<16x512xf32>
    %c0_80 = arith.constant 0 : index
    %c0_81 = arith.constant 0 : index
    %c0_82 = arith.constant 0 : index
    %197 = vector.load %arg13[%c0_80, %c0_81, %c0_82] : memref<2x512x32xf32, #tpu.memory_space<vmem>>, vector<1x512x32xf32>
    %198 = vector.shape_cast %197 : vector<1x512x32xf32> to vector<512x32xf32>
    %cst_83 = arith.constant dense<0.000000e+00> : vector<16x32xf32>
    %199 = tpu.matmul %196, %198, %cst_83 {dimension_numbers = #tpu.dot_dimension_numbers<[1], [0], [0], [1], [0, 0, 1, 1], [], []>} : vector<16x512xf32>, vector<512x32xf32>, vector<16x32xf32> -> vector<16x32xf32>
    %c0_84 = arith.constant 0 : index
    %c0_85 = arith.constant 0 : index
    %c0_86 = arith.constant 0 : index
    %200 = vector.load %arg14[%c0_84, %c0_85, %c0_86] : memref<2x1x32xf32, #tpu.memory_space<vmem>>, vector<1x1x32xf32>
    %201 = vector.shape_cast %200 : vector<1x1x32xf32> to vector<1x32xf32>
    %202 = vector.broadcast %201 : vector<1x32xf32> to vector<16x32xf32>
    %203 = arith.addf %199, %202 : vector<16x32xf32>
    %204 = arith.addf %203, %148 : vector<16x32xf32>
    %c0_87 = arith.constant 0 : index
    %c0_88 = arith.constant 0 : index
    %c0_89 = arith.constant 0 : index
    %205 = vector.load %arg15[%c0_87, %c0_88, %c0_89] : memref<2x1x32xf32, #tpu.memory_space<vmem>>, vector<1x1x32xf32>
    %206 = vector.shape_cast %205 : vector<1x1x32xf32> to vector<1x32xf32>
    %c0_90 = arith.constant 0 : index
    %c0_91 = arith.constant 0 : index
    %c0_92 = arith.constant 0 : index
    %207 = vector.load %arg16[%c0_90, %c0_91, %c0_92] : memref<2x1x32xf32, #tpu.memory_space<vmem>>, vector<1x1x32xf32>
    %208 = vector.shape_cast %207 : vector<1x1x32xf32> to vector<1x32xf32>
    %cst_93 = arith.constant dense<0.000000e+00> : vector<16xf32>
    %209 = vector.multi_reduction <add>, %204, %cst_93 [1] : vector<16x32xf32> to vector<16xf32>
    %210 = vector.shape_cast %209 : vector<16xf32> to vector<16x1xf32>
    %cst_94 = arith.constant 3.200000e+01 : f32
    %211 = vector.broadcast %cst_94 : f32 to vector<16x1xf32>
    %212 = arith.divf %210, %211 : vector<16x1xf32>
    %213 = vector.broadcast %212 : vector<16x1xf32> to vector<16x32xf32>
    %214 = arith.subf %204, %213 : vector<16x32xf32>
    %215 = arith.mulf %214, %214 : vector<16x32xf32>
    %cst_95 = arith.constant dense<0.000000e+00> : vector<16xf32>
    %216 = vector.multi_reduction <add>, %215, %cst_95 [1] : vector<16x32xf32> to vector<16xf32>
    %217 = vector.shape_cast %216 : vector<16xf32> to vector<16x1xf32>
    %cst_96 = arith.constant 3.200000e+01 : f32
    %218 = vector.broadcast %cst_96 : f32 to vector<16x1xf32>
    %219 = arith.divf %217, %218 : vector<16x1xf32>
    %cst_97 = arith.constant 9.99999996E-13 : f32
    %220 = vector.broadcast %cst_97 : f32 to vector<16x1xf32>
    %221 = arith.addf %219, %220 : vector<16x1xf32>
    %222 = math.rsqrt %221 : vector<16x1xf32>
    %223 = vector.broadcast %222 : vector<16x1xf32> to vector<16x32xf32>
    %224 = arith.mulf %214, %223 : vector<16x32xf32>
    %225 = vector.broadcast %206 : vector<1x32xf32> to vector<16x32xf32>
    %226 = arith.mulf %224, %225 : vector<16x32xf32>
    %227 = vector.broadcast %208 : vector<1x32xf32> to vector<16x32xf32>
    %228 = arith.addf %226, %227 : vector<16x32xf32>
    %c1 = arith.constant 1 : index
    %c0_98 = arith.constant 0 : index
    %c0_99 = arith.constant 0 : index
    %229 = vector.load %arg5[%c1, %c0_98, %c0_99] : memref<2x32x96xf32, #tpu.memory_space<vmem>>, vector<1x32x96xf32>
    %230 = vector.shape_cast %229 : vector<1x32x96xf32> to vector<32x96xf32>
    %cst_100 = arith.constant dense<0.000000e+00> : vector<16x96xf32>
    %231 = tpu.matmul %228, %230, %cst_100 {dimension_numbers = #tpu.dot_dimension_numbers<[1], [0], [0], [1], [0, 0, 1, 1], [], []>} : vector<16x32xf32>, vector<32x96xf32>, vector<16x96xf32> -> vector<16x96xf32>
    %c1_101 = arith.constant 1 : index
    %c0_102 = arith.constant 0 : index
    %c0_103 = arith.constant 0 : index
    %232 = vector.load %arg6[%c1_101, %c0_102, %c0_103] : memref<2x1x96xf32, #tpu.memory_space<vmem>>, vector<1x1x96xf32>
    %233 = vector.shape_cast %232 : vector<1x1x96xf32> to vector<1x96xf32>
    %234 = vector.broadcast %233 : vector<1x96xf32> to vector<16x96xf32>
    %235 = arith.addf %231, %234 : vector<16x96xf32>
    %236 = vector.extract_strided_slice %235 {offsets = [0, 0], sizes = [16, 32], strides = [1, 1]} : vector<16x96xf32> to vector<16x32xf32>
    %237 = vector.extract_strided_slice %235 {offsets = [0, 32], sizes = [16, 32], strides = [1, 1]} : vector<16x96xf32> to vector<16x32xf32>
    %238 = vector.extract_strided_slice %235 {offsets = [0, 64], sizes = [16, 32], strides = [1, 1]} : vector<16x96xf32> to vector<16x32xf32>
    %239 = vector.extract_strided_slice %23 {offsets = [0, 0, 0], sizes = [1, 1, 8], strides = [1, 1, 1]} : vector<2x1x8xf32> to vector<1x1x8xf32>
    %240 = vector.shape_cast %239 : vector<1x1x8xf32> to vector<1x8xf32>
    %241 = vector.extract_strided_slice %236 {offsets = [0, 0], sizes = [8, 16], strides = [1, 1]} : vector<16x32xf32> to vector<8x16xf32>
    %242 = vector.extract_strided_slice %237 {offsets = [0, 0], sizes = [8, 16], strides = [1, 1]} : vector<16x32xf32> to vector<8x16xf32>
    %243 = vector.extract_strided_slice %238 {offsets = [0, 0], sizes = [8, 16], strides = [1, 1]} : vector<16x32xf32> to vector<8x16xf32>
    %cst_104 = arith.constant dense<0.000000e+00> : vector<8x8xf32>
    %244 = tpu.matmul %241, %242, %cst_104 {dimension_numbers = #tpu.dot_dimension_numbers<[1], [1], [0], [0], [0, 0, 1, 0], [], []>} : vector<8x16xf32>, vector<8x16xf32>, vector<8x8xf32> -> vector<8x8xf32>
    %cst_105 = arith.constant 2.500000e-01 : f32
    %245 = vector.broadcast %cst_105 : f32 to vector<8x8xf32>
    %246 = arith.mulf %244, %245 : vector<8x8xf32>
    %247 = vector.broadcast %240 : vector<1x8xf32> to vector<8x8xf32>
    %248 = arith.addf %246, %247 : vector<8x8xf32>
    %cst_106 = arith.constant dense<0xFF800000> : vector<8xf32>
    %249 = vector.multi_reduction <maximumf>, %248, %cst_106 [1] : vector<8x8xf32> to vector<8xf32>
    %250 = vector.shape_cast %249 : vector<8xf32> to vector<8x1xf32>
    %251 = vector.broadcast %250 : vector<8x1xf32> to vector<8x8xf32>
    %252 = arith.subf %248, %251 : vector<8x8xf32>
    %253 = math.exp %252 : vector<8x8xf32>
    %cst_107 = arith.constant dense<0.000000e+00> : vector<8xf32>
    %254 = vector.multi_reduction <add>, %253, %cst_107 [1] : vector<8x8xf32> to vector<8xf32>
    %255 = vector.shape_cast %254 : vector<8xf32> to vector<8x1xf32>
    %256 = tpu.reciprocal %255 {approx = true} : vector<8x1xf32> -> vector<8x1xf32>
    %257 = vector.broadcast %256 : vector<8x1xf32> to vector<8x8xf32>
    %258 = arith.mulf %253, %257 : vector<8x8xf32>
    %cst_108 = arith.constant dense<0.000000e+00> : vector<8x16xf32>
    %259 = tpu.matmul %258, %243, %cst_108 {dimension_numbers = #tpu.dot_dimension_numbers<[1], [0], [0], [1], [0, 0, 1, 1], [], []>} : vector<8x8xf32>, vector<8x16xf32>, vector<8x16xf32> -> vector<8x16xf32>
    %260 = vector.extract_strided_slice %236 {offsets = [0, 16], sizes = [8, 16], strides = [1, 1]} : vector<16x32xf32> to vector<8x16xf32>
    %261 = vector.extract_strided_slice %237 {offsets = [0, 16], sizes = [8, 16], strides = [1, 1]} : vector<16x32xf32> to vector<8x16xf32>
    %262 = vector.extract_strided_slice %238 {offsets = [0, 16], sizes = [8, 16], strides = [1, 1]} : vector<16x32xf32> to vector<8x16xf32>
    %cst_109 = arith.constant dense<0.000000e+00> : vector<8x8xf32>
    %263 = tpu.matmul %260, %261, %cst_109 {dimension_numbers = #tpu.dot_dimension_numbers<[1], [1], [0], [0], [0, 0, 1, 0], [], []>} : vector<8x16xf32>, vector<8x16xf32>, vector<8x8xf32> -> vector<8x8xf32>
    %cst_110 = arith.constant 2.500000e-01 : f32
    %264 = vector.broadcast %cst_110 : f32 to vector<8x8xf32>
    %265 = arith.mulf %263, %264 : vector<8x8xf32>
    %266 = vector.broadcast %240 : vector<1x8xf32> to vector<8x8xf32>
    %267 = arith.addf %265, %266 : vector<8x8xf32>
    %cst_111 = arith.constant dense<0xFF800000> : vector<8xf32>
    %268 = vector.multi_reduction <maximumf>, %267, %cst_111 [1] : vector<8x8xf32> to vector<8xf32>
    %269 = vector.shape_cast %268 : vector<8xf32> to vector<8x1xf32>
    %270 = vector.broadcast %269 : vector<8x1xf32> to vector<8x8xf32>
    %271 = arith.subf %267, %270 : vector<8x8xf32>
    %272 = math.exp %271 : vector<8x8xf32>
    %cst_112 = arith.constant dense<0.000000e+00> : vector<8xf32>
    %273 = vector.multi_reduction <add>, %272, %cst_112 [1] : vector<8x8xf32> to vector<8xf32>
    %274 = vector.shape_cast %273 : vector<8xf32> to vector<8x1xf32>
    %275 = tpu.reciprocal %274 {approx = true} : vector<8x1xf32> -> vector<8x1xf32>
    %276 = vector.broadcast %275 : vector<8x1xf32> to vector<8x8xf32>
    %277 = arith.mulf %272, %276 : vector<8x8xf32>
    %cst_113 = arith.constant dense<0.000000e+00> : vector<8x16xf32>
    %278 = tpu.matmul %277, %262, %cst_113 {dimension_numbers = #tpu.dot_dimension_numbers<[1], [0], [0], [1], [0, 0, 1, 1], [], []>} : vector<8x8xf32>, vector<8x16xf32>, vector<8x16xf32> -> vector<8x16xf32>
    %279 = tpu.concatenate %259, %278 in 1 : vector<8x16xf32>, vector<8x16xf32> -> vector<8x32xf32>
    %280 = vector.extract_strided_slice %23 {offsets = [1, 0, 0], sizes = [1, 1, 8], strides = [1, 1, 1]} : vector<2x1x8xf32> to vector<1x1x8xf32>
    %281 = vector.shape_cast %280 : vector<1x1x8xf32> to vector<1x8xf32>
    %282 = vector.extract_strided_slice %236 {offsets = [8, 0], sizes = [8, 16], strides = [1, 1]} : vector<16x32xf32> to vector<8x16xf32>
    %283 = vector.extract_strided_slice %237 {offsets = [8, 0], sizes = [8, 16], strides = [1, 1]} : vector<16x32xf32> to vector<8x16xf32>
    %284 = vector.extract_strided_slice %238 {offsets = [8, 0], sizes = [8, 16], strides = [1, 1]} : vector<16x32xf32> to vector<8x16xf32>
    %cst_114 = arith.constant dense<0.000000e+00> : vector<8x8xf32>
    %285 = tpu.matmul %282, %283, %cst_114 {dimension_numbers = #tpu.dot_dimension_numbers<[1], [1], [0], [0], [0, 0, 1, 0], [], []>} : vector<8x16xf32>, vector<8x16xf32>, vector<8x8xf32> -> vector<8x8xf32>
    %cst_115 = arith.constant 2.500000e-01 : f32
    %286 = vector.broadcast %cst_115 : f32 to vector<8x8xf32>
    %287 = arith.mulf %285, %286 : vector<8x8xf32>
    %288 = vector.broadcast %281 : vector<1x8xf32> to vector<8x8xf32>
    %289 = arith.addf %287, %288 : vector<8x8xf32>
    %cst_116 = arith.constant dense<0xFF800000> : vector<8xf32>
    %290 = vector.multi_reduction <maximumf>, %289, %cst_116 [1] : vector<8x8xf32> to vector<8xf32>
    %291 = vector.shape_cast %290 : vector<8xf32> to vector<8x1xf32>
    %292 = vector.broadcast %291 : vector<8x1xf32> to vector<8x8xf32>
    %293 = arith.subf %289, %292 : vector<8x8xf32>
    %294 = math.exp %293 : vector<8x8xf32>
    %cst_117 = arith.constant dense<0.000000e+00> : vector<8xf32>
    %295 = vector.multi_reduction <add>, %294, %cst_117 [1] : vector<8x8xf32> to vector<8xf32>
    %296 = vector.shape_cast %295 : vector<8xf32> to vector<8x1xf32>
    %297 = tpu.reciprocal %296 {approx = true} : vector<8x1xf32> -> vector<8x1xf32>
    %298 = vector.broadcast %297 : vector<8x1xf32> to vector<8x8xf32>
    %299 = arith.mulf %294, %298 : vector<8x8xf32>
    %cst_118 = arith.constant dense<0.000000e+00> : vector<8x16xf32>
    %300 = tpu.matmul %299, %284, %cst_118 {dimension_numbers = #tpu.dot_dimension_numbers<[1], [0], [0], [1], [0, 0, 1, 1], [], []>} : vector<8x8xf32>, vector<8x16xf32>, vector<8x16xf32> -> vector<8x16xf32>
    %301 = vector.extract_strided_slice %236 {offsets = [8, 16], sizes = [8, 16], strides = [1, 1]} : vector<16x32xf32> to vector<8x16xf32>
    %302 = vector.extract_strided_slice %237 {offsets = [8, 16], sizes = [8, 16], strides = [1, 1]} : vector<16x32xf32> to vector<8x16xf32>
    %303 = vector.extract_strided_slice %238 {offsets = [8, 16], sizes = [8, 16], strides = [1, 1]} : vector<16x32xf32> to vector<8x16xf32>
    %cst_119 = arith.constant dense<0.000000e+00> : vector<8x8xf32>
    %304 = tpu.matmul %301, %302, %cst_119 {dimension_numbers = #tpu.dot_dimension_numbers<[1], [1], [0], [0], [0, 0, 1, 0], [], []>} : vector<8x16xf32>, vector<8x16xf32>, vector<8x8xf32> -> vector<8x8xf32>
    %cst_120 = arith.constant 2.500000e-01 : f32
    %305 = vector.broadcast %cst_120 : f32 to vector<8x8xf32>
    %306 = arith.mulf %304, %305 : vector<8x8xf32>
    %307 = vector.broadcast %281 : vector<1x8xf32> to vector<8x8xf32>
    %308 = arith.addf %306, %307 : vector<8x8xf32>
    %cst_121 = arith.constant dense<0xFF800000> : vector<8xf32>
    %309 = vector.multi_reduction <maximumf>, %308, %cst_121 [1] : vector<8x8xf32> to vector<8xf32>
    %310 = vector.shape_cast %309 : vector<8xf32> to vector<8x1xf32>
    %311 = vector.broadcast %310 : vector<8x1xf32> to vector<8x8xf32>
    %312 = arith.subf %308, %311 : vector<8x8xf32>
    %313 = math.exp %312 : vector<8x8xf32>
    %cst_122 = arith.constant dense<0.000000e+00> : vector<8xf32>
    %314 = vector.multi_reduction <add>, %313, %cst_122 [1] : vector<8x8xf32> to vector<8xf32>
    %315 = vector.shape_cast %314 : vector<8xf32> to vector<8x1xf32>
    %316 = tpu.reciprocal %315 {approx = true} : vector<8x1xf32> -> vector<8x1xf32>
    %317 = vector.broadcast %316 : vector<8x1xf32> to vector<8x8xf32>
    %318 = arith.mulf %313, %317 : vector<8x8xf32>
    %cst_123 = arith.constant dense<0.000000e+00> : vector<8x16xf32>
    %319 = tpu.matmul %318, %303, %cst_123 {dimension_numbers = #tpu.dot_dimension_numbers<[1], [0], [0], [1], [0, 0, 1, 1], [], []>} : vector<8x8xf32>, vector<8x16xf32>, vector<8x16xf32> -> vector<8x16xf32>
    %320 = tpu.concatenate %300, %319 in 1 : vector<8x16xf32>, vector<8x16xf32> -> vector<8x32xf32>
    %321 = tpu.concatenate %279, %320 in 0 : vector<8x32xf32>, vector<8x32xf32> -> vector<16x32xf32>
    %c1_124 = arith.constant 1 : index
    %c0_125 = arith.constant 0 : index
    %c0_126 = arith.constant 0 : index
    %322 = vector.load %arg7[%c1_124, %c0_125, %c0_126] : memref<2x32x32xf32, #tpu.memory_space<vmem>>, vector<1x32x32xf32>
    %323 = vector.shape_cast %322 : vector<1x32x32xf32> to vector<32x32xf32>
    %cst_127 = arith.constant dense<0.000000e+00> : vector<16x32xf32>
    %324 = tpu.matmul %321, %323, %cst_127 {dimension_numbers = #tpu.dot_dimension_numbers<[1], [0], [0], [1], [0, 0, 1, 1], [], []>} : vector<16x32xf32>, vector<32x32xf32>, vector<16x32xf32> -> vector<16x32xf32>
    %c1_128 = arith.constant 1 : index
    %c0_129 = arith.constant 0 : index
    %c0_130 = arith.constant 0 : index
    %325 = vector.load %arg8[%c1_128, %c0_129, %c0_130] : memref<2x1x32xf32, #tpu.memory_space<vmem>>, vector<1x1x32xf32>
    %326 = vector.shape_cast %325 : vector<1x1x32xf32> to vector<1x32xf32>
    %327 = vector.broadcast %326 : vector<1x32xf32> to vector<16x32xf32>
    %328 = arith.addf %324, %327 : vector<16x32xf32>
    %329 = arith.addf %328, %228 : vector<16x32xf32>
    %c1_131 = arith.constant 1 : index
    %c0_132 = arith.constant 0 : index
    %c0_133 = arith.constant 0 : index
    %330 = vector.load %arg9[%c1_131, %c0_132, %c0_133] : memref<2x1x32xf32, #tpu.memory_space<vmem>>, vector<1x1x32xf32>
    %331 = vector.shape_cast %330 : vector<1x1x32xf32> to vector<1x32xf32>
    %c1_134 = arith.constant 1 : index
    %c0_135 = arith.constant 0 : index
    %c0_136 = arith.constant 0 : index
    %332 = vector.load %arg10[%c1_134, %c0_135, %c0_136] : memref<2x1x32xf32, #tpu.memory_space<vmem>>, vector<1x1x32xf32>
    %333 = vector.shape_cast %332 : vector<1x1x32xf32> to vector<1x32xf32>
    %cst_137 = arith.constant dense<0.000000e+00> : vector<16xf32>
    %334 = vector.multi_reduction <add>, %329, %cst_137 [1] : vector<16x32xf32> to vector<16xf32>
    %335 = vector.shape_cast %334 : vector<16xf32> to vector<16x1xf32>
    %cst_138 = arith.constant 3.200000e+01 : f32
    %336 = vector.broadcast %cst_138 : f32 to vector<16x1xf32>
    %337 = arith.divf %335, %336 : vector<16x1xf32>
    %338 = vector.broadcast %337 : vector<16x1xf32> to vector<16x32xf32>
    %339 = arith.subf %329, %338 : vector<16x32xf32>
    %340 = arith.mulf %339, %339 : vector<16x32xf32>
    %cst_139 = arith.constant dense<0.000000e+00> : vector<16xf32>
    %341 = vector.multi_reduction <add>, %340, %cst_139 [1] : vector<16x32xf32> to vector<16xf32>
    %342 = vector.shape_cast %341 : vector<16xf32> to vector<16x1xf32>
    %cst_140 = arith.constant 3.200000e+01 : f32
    %343 = vector.broadcast %cst_140 : f32 to vector<16x1xf32>
    %344 = arith.divf %342, %343 : vector<16x1xf32>
    %cst_141 = arith.constant 9.99999996E-13 : f32
    %345 = vector.broadcast %cst_141 : f32 to vector<16x1xf32>
    %346 = arith.addf %344, %345 : vector<16x1xf32>
    %347 = math.rsqrt %346 : vector<16x1xf32>
    %348 = vector.broadcast %347 : vector<16x1xf32> to vector<16x32xf32>
    %349 = arith.mulf %339, %348 : vector<16x32xf32>
    %350 = vector.broadcast %331 : vector<1x32xf32> to vector<16x32xf32>
    %351 = arith.mulf %349, %350 : vector<16x32xf32>
    %352 = vector.broadcast %333 : vector<1x32xf32> to vector<16x32xf32>
    %353 = arith.addf %351, %352 : vector<16x32xf32>
    %c1_142 = arith.constant 1 : index
    %c0_143 = arith.constant 0 : index
    %c0_144 = arith.constant 0 : index
    %354 = vector.load %arg11[%c1_142, %c0_143, %c0_144] : memref<2x32x512xf32, #tpu.memory_space<vmem>>, vector<1x32x512xf32>
    %355 = vector.shape_cast %354 : vector<1x32x512xf32> to vector<32x512xf32>
    %cst_145 = arith.constant dense<0.000000e+00> : vector<16x512xf32>
    %356 = tpu.matmul %353, %355, %cst_145 {dimension_numbers = #tpu.dot_dimension_numbers<[1], [0], [0], [1], [0, 0, 1, 1], [], []>} : vector<16x32xf32>, vector<32x512xf32>, vector<16x512xf32> -> vector<16x512xf32>
    %c1_146 = arith.constant 1 : index
    %c0_147 = arith.constant 0 : index
    %c0_148 = arith.constant 0 : index
    %357 = vector.load %arg12[%c1_146, %c0_147, %c0_148] : memref<2x1x512xf32, #tpu.memory_space<vmem>>, vector<1x1x512xf32>
    %358 = vector.shape_cast %357 : vector<1x1x512xf32> to vector<1x512xf32>
    %359 = vector.broadcast %358 : vector<1x512xf32> to vector<16x512xf32>
    %360 = arith.addf %356, %359 : vector<16x512xf32>
    %cst_149 = arith.constant 5.000000e-01 : f32
    %361 = vector.broadcast %cst_149 : f32 to vector<16x512xf32>
    %362 = arith.mulf %360, %361 : vector<16x512xf32>
    %cst_150 = arith.constant 0.707106769 : f32
    %363 = vector.broadcast %cst_150 : f32 to vector<16x512xf32>
    %364 = arith.mulf %360, %363 : vector<16x512xf32>
    %cst_151 = arith.constant 0.000000e+00 : f32
    %365 = vector.broadcast %cst_151 : f32 to vector<16x512xf32>
    %366 = arith.cmpf oge, %364, %365 : vector<16x512xf32>
    %cst_152 = arith.constant 1.000000e+00 : f32
    %cst_153 = arith.constant -1.000000e+00 : f32
    %367 = vector.broadcast %cst_152 : f32 to vector<16x512xf32>
    %368 = vector.broadcast %cst_153 : f32 to vector<16x512xf32>
    %369 = arith.select %366, %367, %368 : vector<16x512xi1>, vector<16x512xf32>
    %370 = math.absf %364 : vector<16x512xf32>
    %cst_154 = arith.constant 0.327591091 : f32
    %371 = vector.broadcast %cst_154 : f32 to vector<16x512xf32>
    %372 = arith.mulf %371, %370 : vector<16x512xf32>
    %cst_155 = arith.constant 1.000000e+00 : f32
    %373 = vector.broadcast %cst_155 : f32 to vector<16x512xf32>
    %374 = arith.addf %373, %372 : vector<16x512xf32>
    %cst_156 = arith.constant 1.000000e+00 : f32
    %375 = vector.broadcast %cst_156 : f32 to vector<16x512xf32>
    %376 = arith.divf %375, %374 : vector<16x512xf32>
    %cst_157 = arith.constant 1.06140542 : f32
    %377 = vector.broadcast %cst_157 : f32 to vector<16x512xf32>
    %378 = arith.mulf %377, %376 : vector<16x512xf32>
    %cst_158 = arith.constant -1.45315206 : f32
    %379 = vector.broadcast %cst_158 : f32 to vector<16x512xf32>
    %380 = arith.addf %378, %379 : vector<16x512xf32>
    %381 = arith.mulf %380, %376 : vector<16x512xf32>
    %cst_159 = arith.constant 1.42141378 : f32
    %382 = vector.broadcast %cst_159 : f32 to vector<16x512xf32>
    %383 = arith.addf %381, %382 : vector<16x512xf32>
    %384 = arith.mulf %383, %376 : vector<16x512xf32>
    %cst_160 = arith.constant -0.284496725 : f32
    %385 = vector.broadcast %cst_160 : f32 to vector<16x512xf32>
    %386 = arith.addf %384, %385 : vector<16x512xf32>
    %387 = arith.mulf %386, %376 : vector<16x512xf32>
    %cst_161 = arith.constant 0.254829586 : f32
    %388 = vector.broadcast %cst_161 : f32 to vector<16x512xf32>
    %389 = arith.addf %387, %388 : vector<16x512xf32>
    %390 = arith.mulf %389, %376 : vector<16x512xf32>
    %cst_162 = arith.constant 0.000000e+00 : f32
    %391 = vector.broadcast %cst_162 : f32 to vector<16x512xf32>
    %392 = arith.subf %391, %370 : vector<16x512xf32>
    %393 = arith.mulf %392, %370 : vector<16x512xf32>
    %394 = math.exp %393 : vector<16x512xf32>
    %395 = arith.mulf %390, %394 : vector<16x512xf32>
    %cst_163 = arith.constant 1.000000e+00 : f32
    %396 = vector.broadcast %cst_163 : f32 to vector<16x512xf32>
    %397 = arith.subf %396, %395 : vector<16x512xf32>
    %398 = arith.mulf %369, %397 : vector<16x512xf32>
    %cst_164 = arith.constant 1.000000e+00 : f32
    %399 = vector.broadcast %cst_164 : f32 to vector<16x512xf32>
    %400 = arith.addf %399, %398 : vector<16x512xf32>
    %401 = arith.mulf %362, %400 : vector<16x512xf32>
    %c1_165 = arith.constant 1 : index
    %c0_166 = arith.constant 0 : index
    %c0_167 = arith.constant 0 : index
    %402 = vector.load %arg13[%c1_165, %c0_166, %c0_167] : memref<2x512x32xf32, #tpu.memory_space<vmem>>, vector<1x512x32xf32>
    %403 = vector.shape_cast %402 : vector<1x512x32xf32> to vector<512x32xf32>
    %cst_168 = arith.constant dense<0.000000e+00> : vector<16x32xf32>
    %404 = tpu.matmul %401, %403, %cst_168 {dimension_numbers = #tpu.dot_dimension_numbers<[1], [0], [0], [1], [0, 0, 1, 1], [], []>} : vector<16x512xf32>, vector<512x32xf32>, vector<16x32xf32> -> vector<16x32xf32>
    %c1_169 = arith.constant 1 : index
    %c0_170 = arith.constant 0 : index
    %c0_171 = arith.constant 0 : index
    %405 = vector.load %arg14[%c1_169, %c0_170, %c0_171] : memref<2x1x32xf32, #tpu.memory_space<vmem>>, vector<1x1x32xf32>
    %406 = vector.shape_cast %405 : vector<1x1x32xf32> to vector<1x32xf32>
    %407 = vector.broadcast %406 : vector<1x32xf32> to vector<16x32xf32>
    %408 = arith.addf %404, %407 : vector<16x32xf32>
    %409 = arith.addf %408, %353 : vector<16x32xf32>
    %c1_172 = arith.constant 1 : index
    %c0_173 = arith.constant 0 : index
    %c0_174 = arith.constant 0 : index
    %410 = vector.load %arg15[%c1_172, %c0_173, %c0_174] : memref<2x1x32xf32, #tpu.memory_space<vmem>>, vector<1x1x32xf32>
    %411 = vector.shape_cast %410 : vector<1x1x32xf32> to vector<1x32xf32>
    %c1_175 = arith.constant 1 : index
    %c0_176 = arith.constant 0 : index
    %c0_177 = arith.constant 0 : index
    %412 = vector.load %arg16[%c1_175, %c0_176, %c0_177] : memref<2x1x32xf32, #tpu.memory_space<vmem>>, vector<1x1x32xf32>
    %413 = vector.shape_cast %412 : vector<1x1x32xf32> to vector<1x32xf32>
    %cst_178 = arith.constant dense<0.000000e+00> : vector<16xf32>
    %414 = vector.multi_reduction <add>, %409, %cst_178 [1] : vector<16x32xf32> to vector<16xf32>
    %415 = vector.shape_cast %414 : vector<16xf32> to vector<16x1xf32>
    %cst_179 = arith.constant 3.200000e+01 : f32
    %416 = vector.broadcast %cst_179 : f32 to vector<16x1xf32>
    %417 = arith.divf %415, %416 : vector<16x1xf32>
    %418 = vector.broadcast %417 : vector<16x1xf32> to vector<16x32xf32>
    %419 = arith.subf %409, %418 : vector<16x32xf32>
    %420 = arith.mulf %419, %419 : vector<16x32xf32>
    %cst_180 = arith.constant dense<0.000000e+00> : vector<16xf32>
    %421 = vector.multi_reduction <add>, %420, %cst_180 [1] : vector<16x32xf32> to vector<16xf32>
    %422 = vector.shape_cast %421 : vector<16xf32> to vector<16x1xf32>
    %cst_181 = arith.constant 3.200000e+01 : f32
    %423 = vector.broadcast %cst_181 : f32 to vector<16x1xf32>
    %424 = arith.divf %422, %423 : vector<16x1xf32>
    %cst_182 = arith.constant 9.99999996E-13 : f32
    %425 = vector.broadcast %cst_182 : f32 to vector<16x1xf32>
    %426 = arith.addf %424, %425 : vector<16x1xf32>
    %427 = math.rsqrt %426 : vector<16x1xf32>
    %428 = vector.broadcast %427 : vector<16x1xf32> to vector<16x32xf32>
    %429 = arith.mulf %419, %428 : vector<16x32xf32>
    %430 = vector.broadcast %411 : vector<1x32xf32> to vector<16x32xf32>
    %431 = arith.mulf %429, %430 : vector<16x32xf32>
    %432 = vector.broadcast %413 : vector<1x32xf32> to vector<16x32xf32>
    %433 = arith.addf %431, %432 : vector<16x32xf32>
    %434 = vector.extract_strided_slice %433 {offsets = [0, 0], sizes = [1, 32], strides = [1, 1]} : vector<16x32xf32> to vector<1x32xf32>
    %435 = vector.extract_strided_slice %433 {offsets = [8, 0], sizes = [1, 32], strides = [1, 1]} : vector<16x32xf32> to vector<1x32xf32>
    %436 = tpu.concatenate %434, %435 in 0 : vector<1x32xf32>, vector<1x32xf32> -> vector<2x32xf32>
    %c0_183 = arith.constant 0 : index
    %c0_184 = arith.constant 0 : index
    %437 = vector.load %arg17[%c0_183, %c0_184] : memref<32x32xf32, #tpu.memory_space<vmem>>, vector<32x32xf32>
    %cst_185 = arith.constant dense<0.000000e+00> : vector<2x32xf32>
    %438 = tpu.matmul %436, %437, %cst_185 {dimension_numbers = #tpu.dot_dimension_numbers<[1], [0], [0], [1], [0, 0, 1, 1], [], []>} : vector<2x32xf32>, vector<32x32xf32>, vector<2x32xf32> -> vector<2x32xf32>
    %c0_186 = arith.constant 0 : index
    %c0_187 = arith.constant 0 : index
    %439 = vector.load %arg18[%c0_186, %c0_187] : memref<1x32xf32, #tpu.memory_space<vmem>>, vector<1x32xf32>
    %440 = vector.broadcast %439 : vector<1x32xf32> to vector<2x32xf32>
    %441 = arith.addf %438, %440 : vector<2x32xf32>
    %442 = math.tanh %441 : vector<2x32xf32>
    %c0_188 = arith.constant 0 : index
    %c0_189 = arith.constant 0 : index
    %443 = vector.load %arg19[%c0_188, %c0_189] : memref<32x4xf32, #tpu.memory_space<vmem>>, vector<32x4xf32>
    %cst_190 = arith.constant dense<0.000000e+00> : vector<2x4xf32>
    %444 = tpu.matmul %442, %443, %cst_190 {dimension_numbers = #tpu.dot_dimension_numbers<[1], [0], [0], [1], [0, 0, 1, 1], [], []>} : vector<2x32xf32>, vector<32x4xf32>, vector<2x4xf32> -> vector<2x4xf32>
    %c0_191 = arith.constant 0 : index
    %c0_192 = arith.constant 0 : index
    %445 = vector.load %arg20[%c0_191, %c0_192] : memref<1x4xf32, #tpu.memory_space<vmem>>, vector<1x4xf32>
    %446 = vector.broadcast %445 : vector<1x4xf32> to vector<2x4xf32>
    %447 = arith.addf %444, %446 : vector<2x4xf32>
    %c0_193 = arith.constant 0 : index
    %c0_194 = arith.constant 0 : index
    %448 = vector.load %arg21[%c0_193, %c0_194] : memref<2x4xf32, #tpu.memory_space<vmem>>, vector<2x4xf32>
    tpu.vector_store %arg21[%c0_193, %c0_194], %447 {strides = array<i32>} : memref<2x4xf32, #tpu.memory_space<vmem>>, vector<2x4xf32>,
    return
  }
  func.func @transform_0(%arg0: i32) -> (i32, i32) {
    %c0_i32 = arith.constant 0 : i32
    %c0_i32_0 = arith.constant 0 : i32
    %c0_i32_1 = arith.constant 0 : i32
    return %c0_i32, %c0_i32_0 : i32, i32
  }
  func.func @transform_1(%arg0: i32) -> (i32, i32, i32) {
    %c0_i32 = arith.constant 0 : i32
    %c0_i32_0 = arith.constant 0 : i32
    %c0_i32_1 = arith.constant 0 : i32
    %c0_i32_2 = arith.constant 0 : i32
    return %c0_i32, %c0_i32_0, %c0_i32_1 : i32, i32, i32
  }
  func.func @transform_2(%arg0: i32) -> (i32, i32) {
    %c0_i32 = arith.constant 0 : i32
    %c0_i32_0 = arith.constant 0 : i32
    %c0_i32_1 = arith.constant 0 : i32
    return %c0_i32, %c0_i32_0 : i32, i32
  }
  func.func @transform_3(%arg0: i32) -> (i32, i32) {
    %c0_i32 = arith.constant 0 : i32
    %c0_i32_0 = arith.constant 0 : i32
    %c0_i32_1 = arith.constant 0 : i32
    return %c0_i32, %c0_i32_0 : i32, i32
  }
  func.func @transform_4(%arg0: i32) -> (i32, i32, i32) {
    %c0_i32 = arith.constant 0 : i32
    %c0_i32_0 = arith.constant 0 : i32
    %c0_i32_1 = arith.constant 0 : i32
    %c0_i32_2 = arith.constant 0 : i32
    return %c0_i32, %c0_i32_0, %c0_i32_1 : i32, i32, i32
  }
  func.func @transform_5(%arg0: i32) -> (i32, i32, i32) {
    %c0_i32 = arith.constant 0 : i32
    %c0_i32_0 = arith.constant 0 : i32
    %c0_i32_1 = arith.constant 0 : i32
    %c0_i32_2 = arith.constant 0 : i32
    return %c0_i32, %c0_i32_0, %c0_i32_1 : i32, i32, i32
  }
  func.func @transform_6(%arg0: i32) -> (i32, i32, i32) {
    %c0_i32 = arith.constant 0 : i32
    %c0_i32_0 = arith.constant 0 : i32
    %c0_i32_1 = arith.constant 0 : i32
    %c0_i32_2 = arith.constant 0 : i32
    return %c0_i32, %c0_i32_0, %c0_i32_1 : i32, i32, i32
  }
  func.func @transform_7(%arg0: i32) -> (i32, i32, i32) {
    %c0_i32 = arith.constant 0 : i32
    %c0_i32_0 = arith.constant 0 : i32
    %c0_i32_1 = arith.constant 0 : i32
    %c0_i32_2 = arith.constant 0 : i32
    return %c0_i32, %c0_i32_0, %c0_i32_1 : i32, i32, i32
  }
  func.func @transform_8(%arg0: i32) -> (i32, i32, i32) {
    %c0_i32 = arith.constant 0 : i32
    %c0_i32_0 = arith.constant 0 : i32
    %c0_i32_1 = arith.constant 0 : i32
    %c0_i32_2 = arith.constant 0 : i32
    return %c0_i32, %c0_i32_0, %c0_i32_1 : i32, i32, i32
  }
  func.func @transform_9(%arg0: i32) -> (i32, i32, i32) {
    %c0_i32 = arith.constant 0 : i32
    %c0_i32_0 = arith.constant 0 : i32
    %c0_i32_1 = arith.constant 0 : i32
    %c0_i32_2 = arith.constant 0 : i32
    return %c0_i32, %c0_i32_0, %c0_i32_1 : i32, i32, i32
  }
  func.func @transform_10(%arg0: i32) -> (i32, i32, i32) {
    %c0_i32 = arith.constant 0 : i32
    %c0_i32_0 = arith.constant 0 : i32
    %c0_i32_1 = arith.constant 0 : i32
    %c0_i32_2 = arith.constant 0 : i32
    return %c0_i32, %c0_i32_0, %c0_i32_1 : i32, i32, i32
  }
  func.func @transform_11(%arg0: i32) -> (i32, i32, i32) {
    %c0_i32 = arith.constant 0 : i32
    %c0_i32_0 = arith.constant 0 : i32
    %c0_i32_1 = arith.constant 0 : i32
    %c0_i32_2 = arith.constant 0 : i32
    return %c0_i32, %c0_i32_0, %c0_i32_1 : i32, i32, i32
  }
  func.func @transform_12(%arg0: i32) -> (i32, i32, i32) {
    %c0_i32 = arith.constant 0 : i32
    %c0_i32_0 = arith.constant 0 : i32
    %c0_i32_1 = arith.constant 0 : i32
    %c0_i32_2 = arith.constant 0 : i32
    return %c0_i32, %c0_i32_0, %c0_i32_1 : i32, i32, i32
  }
  func.func @transform_13(%arg0: i32) -> (i32, i32, i32) {
    %c0_i32 = arith.constant 0 : i32
    %c0_i32_0 = arith.constant 0 : i32
    %c0_i32_1 = arith.constant 0 : i32
    %c0_i32_2 = arith.constant 0 : i32
    return %c0_i32, %c0_i32_0, %c0_i32_1 : i32, i32, i32
  }
  func.func @transform_14(%arg0: i32) -> (i32, i32, i32) {
    %c0_i32 = arith.constant 0 : i32
    %c0_i32_0 = arith.constant 0 : i32
    %c0_i32_1 = arith.constant 0 : i32
    %c0_i32_2 = arith.constant 0 : i32
    return %c0_i32, %c0_i32_0, %c0_i32_1 : i32, i32, i32
  }
  func.func @transform_15(%arg0: i32) -> (i32, i32, i32) {
    %c0_i32 = arith.constant 0 : i32
    %c0_i32_0 = arith.constant 0 : i32
    %c0_i32_1 = arith.constant 0 : i32
    %c0_i32_2 = arith.constant 0 : i32
    return %c0_i32, %c0_i32_0, %c0_i32_1 : i32, i32, i32
  }
  func.func @transform_16(%arg0: i32) -> (i32, i32) {
    %c0_i32 = arith.constant 0 : i32
    %c0_i32_0 = arith.constant 0 : i32
    %c0_i32_1 = arith.constant 0 : i32
    return %c0_i32, %c0_i32_0 : i32, i32
  }
  func.func @transform_17(%arg0: i32) -> (i32, i32) {
    %c0_i32 = arith.constant 0 : i32
    %c0_i32_0 = arith.constant 0 : i32
    %c0_i32_1 = arith.constant 0 : i32
    return %c0_i32, %c0_i32_0 : i32, i32
  }
  func.func @transform_18(%arg0: i32) -> (i32, i32) {
    %c0_i32 = arith.constant 0 : i32
    %c0_i32_0 = arith.constant 0 : i32
    %c0_i32_1 = arith.constant 0 : i32
    return %c0_i32, %c0_i32_0 : i32, i32
  }
  func.func @transform_19(%arg0: i32) -> (i32, i32) {
    %c0_i32 = arith.constant 0 : i32
    %c0_i32_0 = arith.constant 0 : i32
    %c0_i32_1 = arith.constant 0 : i32
    return %c0_i32, %c0_i32_0 : i32, i32
  }
  func.func @transform_20(%arg0: i32) -> (i32, i32) {
    %c0_i32 = arith.constant 0 : i32
    %c0_i32_0 = arith.constant 0 : i32
    %c0_i32_1 = arith.constant 0 : i32
    return %c0_i32, %c0_i32_0 : i32, i32
  }
}

</mosaic_0001>

<llo_original>
// kernel: my_bert_forward.1
$region0: #{my_bert_forward.1}
  #allocation0 [shape = 'u32[]', space=smem, size = 0x4, offset = 0x4, fixed_abs, tag = 'smem constant byte address 0x4 - core index']
  #allocation1 [shape = 'u32[144,128]{1,0:T(1,128)}', space=vmem, size = 0x12000, scoped, tag = 'internal scratch']
  %s0 = inlined_call_operand.vmem [shape: f32[16,32], index: 0, kind: input, shape index: {}]
  %s1 = inlined_call_operand.vmem [shape: f32[2,1,8], index: 1, kind: input, shape index: {}]
  %s2 = inlined_call_operand.vmem [shape: f32[1,32], index: 2, kind: input, shape index: {}]
  %s3 = inlined_call_operand.vmem [shape: f32[1,32], index: 3, kind: input, shape index: {}]
  %s4 = inlined_call_operand.vmem [shape: f32[2,32,96], index: 4, kind: input, shape index: {}]
  %s5 = inlined_call_operand.vmem [shape: f32[2,1,96], index: 5, kind: input, shape index: {}]
  %s6 = inlined_call_operand.vmem [shape: f32[2,32,32], index: 6, kind: input, shape index: {}]
  %s7 = inlined_call_operand.vmem [shape: f32[2,1,32], index: 7, kind: input, shape index: {}]
  %s8 = inlined_call_operand.vmem [shape: f32[2,1,32], index: 8, kind: input, shape index: {}]
  %s9 = inlined_call_operand.vmem [shape: f32[2,1,32], index: 9, kind: input, shape index: {}]
  %s10 = inlined_call_operand.vmem [shape: f32[2,32,512], index: 10, kind: input, shape index: {}]
  %s11 = inlined_call_operand.vmem [shape: f32[2,1,512], index: 11, kind: input, shape index: {}]
  %s12 = inlined_call_operand.vmem [shape: f32[2,512,32], index: 12, kind: input, shape index: {}]
  %s13 = inlined_call_operand.vmem [shape: f32[2,1,32], index: 13, kind: input, shape index: {}]
  %s14 = inlined_call_operand.vmem [shape: f32[2,1,32], index: 14, kind: input, shape index: {}]
  %s15 = inlined_call_operand.vmem [shape: f32[2,1,32], index: 15, kind: input, shape index: {}]
  %s16 = inlined_call_operand.vmem [shape: f32[32,32], index: 16, kind: input, shape index: {}]
  %s17 = inlined_call_operand.vmem [shape: f32[1,32], index: 17, kind: input, shape index: {}]
  %s18 = inlined_call_operand.vmem [shape: f32[32,4], index: 18, kind: input, shape index: {}]
  %s19 = inlined_call_operand.vmem [shape: f32[1,4], index: 19, kind: input, shape index: {}]
  %s20 = inlined_call_operand.hbm [shape: f32[2,4], index: 20, kind: output, shape index: {}]
  %s21 = sld [smem:[#allocation0]]
  $region90: #{my_bert_forward.1} parent=0
    _
  %s23 = ssub.s32 1, %s21
  %s24 = scalar_select 0, %s23, %s21
  $region1: #{my_bert_forward.1} parent=0
    #allocation2 [shape = 'u8[1024]{0}', space=vmem, size = 0x400, scoped, tag = 'output window, operand 0, single buffered']
    #allocation3 [shape = 's32[1]{0}', space=sflag, size = 0x4, scoped, tag = 'scoped memory for my_bert_forward.1']
    %25 = vsyncpa [#allocation3], 0
    // Predicated region
    $region2: #{my_bert_forward.1} parent=1 // pred_check
      _
    $region3: #{my_bert_forward.1} parent=1 // pred_check_branch
      %27 = sbr.rel (0) target = $region5
    $region4: #{my_bert_forward.1} parent=1 // pred_region
      _
    $region5: #{my_bert_forward.1} parent=1 // pred_fallthru
      _
    // Predicated region
    $region6: #{my_bert_forward.1} parent=1 // pred_check
      _
    $region7: #{my_bert_forward.1} parent=1 // pred_check_branch
      %29 = sbr.rel (0) target = $region9
    $region8: #{my_bert_forward.1} parent=1 // pred_region
      _
    $region9: #{my_bert_forward.1} parent=1 // pred_fallthru
      _
    // Predicated region
    $region10: #{my_bert_forward.1} parent=1 // pred_check
      _
    $region11: #{my_bert_forward.1} parent=1 // pred_check_branch
      %31 = sbr.rel (0) target = $region13
    $region12: #{my_bert_forward.1} parent=1 // pred_region
      _
    $region13: #{my_bert_forward.1} parent=1 // pred_fallthru
      _
    // Predicated region
    $region14: #{my_bert_forward.1} parent=1 // pred_check
      _
    $region15: #{my_bert_forward.1} parent=1 // pred_check_branch
      %33 = sbr.rel (0) target = $region17
    $region16: #{my_bert_forward.1} parent=1 // pred_region
      _
    $region17: #{my_bert_forward.1} parent=1 // pred_fallthru
      _
    // Predicated region
    $region18: #{my_bert_forward.1} parent=1 // pred_check
      _
    $region19: #{my_bert_forward.1} parent=1 // pred_check_branch
      %35 = sbr.rel (0) target = $region21
    $region20: #{my_bert_forward.1} parent=1 // pred_region
      _
    $region21: #{my_bert_forward.1} parent=1 // pred_fallthru
      _
    // Predicated region
    $region22: #{my_bert_forward.1} parent=1 // pred_check
      _
    $region23: #{my_bert_forward.1} parent=1 // pred_check_branch
      %37 = sbr.rel (0) target = $region25
    $region24: #{my_bert_forward.1} parent=1 // pred_region
      _
    $region25: #{my_bert_forward.1} parent=1 // pred_fallthru
      _
    // Predicated region
    $region26: #{my_bert_forward.1} parent=1 // pred_check
      _
    $region27: #{my_bert_forward.1} parent=1 // pred_check_branch
      %39 = sbr.rel (0) target = $region29
    $region28: #{my_bert_forward.1} parent=1 // pred_region
      _
    $region29: #{my_bert_forward.1} parent=1 // pred_fallthru
      _
    // Predicated region
    $region30: #{my_bert_forward.1} parent=1 // pred_check
      _
    $region31: #{my_bert_forward.1} parent=1 // pred_check_branch
      %41 = sbr.rel (0) target = $region33
    $region32: #{my_bert_forward.1} parent=1 // pred_region
      _
    $region33: #{my_bert_forward.1} parent=1 // pred_fallthru
      _
    // Predicated region
    $region34: #{my_bert_forward.1} parent=1 // pred_check
      _
    $region35: #{my_bert_forward.1} parent=1 // pred_check_branch
      %43 = sbr.rel (0) target = $region37
    $region36: #{my_bert_forward.1} parent=1 // pred_region
      _
    $region37: #{my_bert_forward.1} parent=1 // pred_fallthru
      _
    // Predicated region
    $region38: #{my_bert_forward.1} parent=1 // pred_check
      _
    $region39: #{my_bert_forward.1} parent=1 // pred_check_branch
      %45 = sbr.rel (0) target = $region41
    $region40: #{my_bert_forward.1} parent=1 // pred_region
      _
    $region41: #{my_bert_forward.1} parent=1 // pred_fallthru
      _
    // Predicated region
    $region42: #{my_bert_forward.1} parent=1 // pred_check
      _
    $region43: #{my_bert_forward.1} parent=1 // pred_check_branch
      %47 = sbr.rel (0) target = $region45
    $region44: #{my_bert_forward.1} parent=1 // pred_region
      _
    $region45: #{my_bert_forward.1} parent=1 // pred_fallthru
      _
    // Predicated region
    $region46: #{my_bert_forward.1} parent=1 // pred_check
      _
    $region47: #{my_bert_forward.1} parent=1 // pred_check_branch
      %49 = sbr.rel (0) target = $region49
    $region48: #{my_bert_forward.1} parent=1 // pred_region
      _
    $region49: #{my_bert_forward.1} parent=1 // pred_fallthru
      _
    // Predicated region
    $region50: #{my_bert_forward.1} parent=1 // pred_check
      _
    $region51: #{my_bert_forward.1} parent=1 // pred_check_branch
      %51 = sbr.rel (0) target = $region53
    $region52: #{my_bert_forward.1} parent=1 // pred_region
      _
    $region53: #{my_bert_forward.1} parent=1 // pred_fallthru
      _
    // Predicated region
    $region54: #{my_bert_forward.1} parent=1 // pred_check
      _
    $region55: #{my_bert_forward.1} parent=1 // pred_check_branch
      %53 = sbr.rel (0) target = $region57
    $region56: #{my_bert_forward.1} parent=1 // pred_region
      _
    $region57: #{my_bert_forward.1} parent=1 // pred_fallthru
      _
    // Predicated region
    $region58: #{my_bert_forward.1} parent=1 // pred_check
      _
    $region59: #{my_bert_forward.1} parent=1 // pred_check_branch
      %55 = sbr.rel (0) target = $region61
    $region60: #{my_bert_forward.1} parent=1 // pred_region
      _
    $region61: #{my_bert_forward.1} parent=1 // pred_fallthru
      _
    // Predicated region
    $region62: #{my_bert_forward.1} parent=1 // pred_check
      _
    $region63: #{my_bert_forward.1} parent=1 // pred_check_branch
      %57 = sbr.rel (0) target = $region65
    $region64: #{my_bert_forward.1} parent=1 // pred_region
      _
    $region65: #{my_bert_forward.1} parent=1 // pred_fallthru
      _
    // Predicated region
    $region66: #{my_bert_forward.1} parent=1 // pred_check
      _
    $region67: #{my_bert_forward.1} parent=1 // pred_check_branch
      %59 = sbr.rel (0) target = $region69
    $region68: #{my_bert_forward.1} parent=1 // pred_region
      _
    $region69: #{my_bert_forward.1} parent=1 // pred_fallthru
      _
    // Predicated region
    $region70: #{my_bert_forward.1} parent=1 // pred_check
      _
    $region71: #{my_bert_forward.1} parent=1 // pred_check_branch
      %61 = sbr.rel (0) target = $region73
    $region72: #{my_bert_forward.1} parent=1 // pred_region
      _
    $region73: #{my_bert_forward.1} parent=1 // pred_fallthru
      _
    // Predicated region
    $region74: #{my_bert_forward.1} parent=1 // pred_check
      _
    $region75: #{my_bert_forward.1} parent=1 // pred_check_branch
      %63 = sbr.rel (0) target = $region77
    $region76: #{my_bert_forward.1} parent=1 // pred_region
      _
    $region77: #{my_bert_forward.1} parent=1 // pred_fallthru
      _
    // Predicated region
    $region78: #{my_bert_forward.1} parent=1 // pred_check
      _
    $region79: #{my_bert_forward.1} parent=1 // pred_check_branch
      %65 = sbr.rel (0) target = $region81
    $region80: #{my_bert_forward.1} parent=1 // pred_region
      _
    $region81: #{my_bert_forward.1} parent=1 // pred_fallthru
      _
    %v66 = vld [vmem:[%s0] sm:$0xff]
    %v67 = vld [vmem:[%s0 + $0x8] sm:$0xff]
    %v68 = vld [vmem:[%s2] sm:$0x1]
    %v69 = vld [vmem:[%s3] sm:$0x1]
    %vm70 = vcmask 261120
    %v71 = vsel %vm70, %v66, 0.0
    %72 = vadd.xlane.f32.xlu0 %v71
    %v73 = vpop.xlane.xlu0 %72
    %v74 = vsel %vm70, %v67, 0.0
    %75 = vadd.xlane.f32.xlu0 %v74
    %v76 = vpop.xlane.xlu0 %75
    %v77 = vrcp.pop 32.0
    %v78 = vmul.f32 %v73, %v77
    %v79 = vmul.f32 %v76, %v77
    %v80 = vsub.f32 %v66, %v78
    %v81 = vsub.f32 %v67, %v79
    %v82 = vmul.f32 %v80, %v80
    %v83 = vmul.f32 %v81, %v81
    %v84 = vsel %vm70, %v82, 0.0
    %85 = vadd.xlane.f32.xlu0 %v84
    %v86 = vpop.xlane.xlu0 %85
    %v87 = vsel %vm70, %v83, 0.0
    %88 = vadd.xlane.f32.xlu0 %v87
    %v89 = vpop.xlane.xlu0 %88
    %v90 = vmul.f32 %v86, %v77
    %v91 = vmul.f32 %v89, %v77
    %v92 = vadd.f32 %v90, 1e-12
    %v93 = vadd.f32 %v91, 1e-12
    %v94 = vrsqrt.pop %v92
    %v95 = vrsqrt.pop %v93
    %v96 = vmul.f32 %v80, %v94
    %v97 = vmul.f32 %v81, %v95
    %v99 = vlaneseq
    %v100 = vshrl.u32 %v99, 7
    %v101 = vsub.s32 0, %v100
    %v102 = vrot.slane %v68, %v101
    %v104 = vmul.f32 %v96, %v102
    %v105 = vmul.f32 %v97, %v102
    %v107 = vlaneseq
    %v108 = vshrl.u32 %v107, 7
    %v109 = vsub.s32 0, %v108
    %v110 = vrot.slane %v69, %v109
    %v112 = vadd.f32 %v104, %v110
    %v113 = vadd.f32 %v105, %v110
    %v114 = vld [vmem:[%s1] sm:$0x1]
    %v115 = vld [vmem:[%s1 + $0x1] sm:$0x1]
    %v116 = vld [vmem:[%s4] sm:$0xff]
    %v117 = vld [vmem:[%s4 + $0x8] sm:$0xff]
    %v118 = vld [vmem:[%s4 + $0x10] sm:$0xff]
    %v119 = vld [vmem:[%s4 + $0x18] sm:$0xff]
    %v120 = vld [vmem:[%s5] sm:$0x1]
    %v122 = vlaneseq
    %v123 = vshrl.u32 %v122, 7
    %v124 = vsub.s32 0, %v123
    %v125 = vrot.slane %v120, %v124
    %v128 = vsel %vm70, %v112, 0
    %v131 = vsel %vm70, %v113, 0
    %133 = vmatprep.subr.mxu0 0.0
    %134 = vmatpush1.msra.mxu0 %v116
    %135 = vmatprep.subr.mxu0 0.0
    %136 = vmatpush1.msra.mxu0 %v117
    %137 = vmatprep.subr.mxu0 0.0
    %138 = vmatpush1.msra.mxu0 %v118
    %139 = vmatprep.subr.mxu0 0.0
    %140 = vmatpush1.msra.mxu0 %v119
    %141 = vmatprep.subr.mxu0 0.0
    %142 = vmatpush1.msra.mxu0 0.0
    %143 = vmatprep.subr.mxu0 0.0
    %144 = vmatpush1.msra.mxu0 0.0
    %145 = vmatprep.subr.mxu0 0.0
    %146 = vmatpush1.msra.mxu0 0.0
    %147 = vmatprep.subr.mxu0 0.0
    %148 = vmatpush1.msra.mxu0 0.0
    %149 = vmatprep.subr.mxu0 0.0
    %150 = vmatpush1.msra.mxu0 0.0
    %151 = vmatprep.subr.mxu0 0.0
    %152 = vmatpush1.msra.mxu0 0.0
    %153 = vmatprep.subr.mxu0 0.0
    %154 = vmatpush1.msra.mxu0 0.0
    %155 = vmatprep.subr.mxu0 0.0
    %156 = vmatpush1.msra.mxu0 0.0
    %157 = vmatprep.subr.mxu0 0.0
    %158 = vmatpush1.msra.mxu0 0.0
    %159 = vmatprep.subr.mxu0 0.0
    %160 = vmatpush1.msra.mxu0 0.0
    %161 = vmatprep.subr.mxu0 0.0
    %162 = vmatpush1.msra.mxu0 0.0
    %163 = vmatprep.subr.mxu0 0.0
    %164 = vmatpush1.msra.mxu0 0.0
    %165 = vmatprep.subr.mxu0 0.0
    %166 = vmatpush1.msra.mxu0 0.0
    %167 = vmatprep.subr.mxu0 0.0
    %168 = vmatpush1.msra.mxu0 0.0
    %169 = vmatprep.subr.mxu0 0.0
    %170 = vmatpush1.msra.mxu0 0.0
    %171 = vmatprep.subr.mxu0 0.0
    %172 = vmatpush1.msra.mxu0 0.0
    %173 = vmatprep.subr.mxu0 0.0
    %174 = vmatpush1.msra.mxu0 0.0
    %175 = vmatprep.subr.mxu0 0.0
    %176 = vmatpush1.msra.mxu0 0.0
    %177 = vmatprep.subr.mxu0 0.0
    %178 = vmatpush1.msra.mxu0 0.0
    %179 = vmatprep.subr.mxu0 0.0
    %180 = vmatpush1.msra.mxu0 0.0
    %181 = vmatprep.subr.mxu0 0.0
    %182 = vmatpush1.msra.mxu0 0.0
    %183 = vmatprep.subr.mxu0 0.0
    %184 = vmatpush1.msra.mxu0 0.0
    %185 = vmatprep.subr.mxu0 0.0
    %186 = vmatpush1.msra.mxu0 0.0
    %187 = vmatprep.subr.mxu0 0.0
    %188 = vmatpush1.msra.mxu0 0.0
    %189 = vmatprep.subr.mxu0 0.0
    %190 = vmatpush1.msra.mxu0 0.0
    %191 = vmatprep.subr.mxu0 0.0
    %192 = vmatpush1.msra.mxu0 0.0
    %193 = vmatprep.subr.mxu0 0.0
    %194 = vmatpush1.msra.mxu0 0.0
    %195 = vmatprep.subr.mxu0 0.0
    %196 = vmatpush1.msra.mxu0 0.0
    %197 = vmatprep.mubr.f32.mxu0 0.0
    %198 = vmatmul.mubr.f32.gmra.mrb[0].mxu0 %v128
    %v199 = vpop.f32.mrb[0].mxu0
    %v200 = vadd.f32 %v125, %v199
    %v201 = vpop.f32.mrb[0].mxu0
    %202 = vmatprep.mubr.f32.mxu0 0.0
    %203 = vmatmul.mubr.f32.gmra.mrb[0].mxu0 %v131
    %v204 = vpop.f32.mrb[0].mxu0
    %v205 = vadd.f32 %v125, %v204
    %v206 = vpop.f32.mrb[0].mxu0
    %207 = vdwg.mxu0
    %209 = vrot.lane.b32.xlu0 %v200, 96
    %v210 = vpop.permute.xlu0 %209
    %vm211 = vcmask 130048
    %v212 = vsel %vm211, %v200, 0
    %v214 = vsel %vm211, %v210, 0
    %216 = vmatprep.subr.mxu0 0.0
    %217 = vmatpush1.xpose.msra.mxu0 %v214
    %218 = vmatprep.subr.mxu0 0.0
    %219 = vmatpush1.xpose.msra.mxu0 0.0
    %220 = vmatprep.subr.mxu0 0.0
    %221 = vmatpush1.xpose.msra.mxu0 0.0
    %222 = vmatprep.subr.mxu0 0.0
    %223 = vmatpush1.xpose.msra.mxu0 0.0
    %224 = vmatprep.subr.mxu0 0.0
    %225 = vmatpush1.xpose.msra.mxu0 0.0
    %226 = vmatprep.subr.mxu0 0.0
    %227 = vmatpush1.xpose.msra.mxu0 0.0
    %228 = vmatprep.subr.mxu0 0.0
    %229 = vmatpush1.xpose.msra.mxu0 0.0
    %230 = vmatprep.subr.mxu0 0.0
    %231 = vmatpush1.xpose.msra.mxu0 0.0
    %232 = vmatprep.subr.mxu0 0.0
    %233 = vmatpush1.xpose.msra.mxu0 0.0
    %234 = vmatprep.subr.mxu0 0.0
    %235 = vmatpush1.xpose.msra.mxu0 0.0
    %236 = vmatprep.subr.mxu0 0.0
    %237 = vmatpush1.xpose.msra.mxu0 0.0
    %238 = vmatprep.subr.mxu0 0.0
    %239 = vmatpush1.xpose.msra.mxu0 0.0
    %240 = vmatprep.subr.mxu0 0.0
    %241 = vmatpush1.xpose.msra.mxu0 0.0
    %242 = vmatprep.subr.mxu0 0.0
    %243 = vmatpush1.xpose.msra.mxu0 0.0
    %244 = vmatprep.subr.mxu0 0.0
    %245 = vmatpush1.xpose.msra.mxu0 0.0
    %246 = vmatprep.subr.mxu0 0.0
    %247 = vmatpush1.xpose.msra.mxu0 0.0
    %248 = vmatprep.subr.mxu0 0.0
    %249 = vmatpush1.xpose.msra.mxu0 0.0
    %250 = vmatprep.subr.mxu0 0.0
    %251 = vmatpush1.xpose.msra.mxu0 0.0
    %252 = vmatprep.subr.mxu0 0.0
    %253 = vmatpush1.xpose.msra.mxu0 0.0
    %254 = vmatprep.subr.mxu0 0.0
    %255 = vmatpush1.xpose.msra.mxu0 0.0
    %256 = vmatprep.subr.mxu0 0.0
    %257 = vmatpush1.xpose.msra.mxu0 0.0
    %258 = vmatprep.subr.mxu0 0.0
    %259 = vmatpush1.xpose.msra.mxu0 0.0
    %260 = vmatprep.subr.mxu0 0.0
    %261 = vmatpush1.xpose.msra.mxu0 0.0
    %262 = vmatprep.subr.mxu0 0.0
    %263 = vmatpush1.xpose.msra.mxu0 0.0
    %264 = vmatprep.subr.mxu0 0.0
    %265 = vmatpush1.xpose.msra.mxu0 0.0
    %266 = vmatprep.subr.mxu0 0.0
    %267 = vmatpush1.xpose.msra.mxu0 0.0
    %268 = vmatprep.subr.mxu0 0.0
    %269 = vmatpush1.xpose.msra.mxu0 0.0
    %270 = vmatprep.subr.mxu0 0.0
    %271 = vmatpush1.xpose.msra.mxu0 0.0
    %272 = vmatprep.subr.mxu0 0.0
    %273 = vmatpush1.xpose.msra.mxu0 0.0
    %274 = vmatprep.subr.mxu0 0.0
    %275 = vmatpush1.xpose.msra.mxu0 0.0
    %276 = vmatprep.subr.mxu0 0.0
    %277 = vmatpush1.xpose.msra.mxu0 0.0
    %278 = vmatprep.subr.mxu0 0.0
    %279 = vmatpush1.xpose.msra.mxu0 0.0
    %280 = vmatprep.mubr.f32.mxu0 0.0
    %281 = vmatmul.mubr.f32.gmra.mrb[0].mxu0 %v212
    %v282 = vpop.f32.mrb[0].mxu0
    %v283 = vadd.f32 0.0, %v282
    %v284 = vpop.f32.mrb[0].mxu0
    %285 = vdwg.mxu0
    %v286 = vmul.f32 %v283, 0.25
    %v288 = vlaneseq
    %v289 = vshrl.u32 %v288, 7
    %v290 = vsub.s32 0, %v289
    %v291 = vrot.slane %v114, %v290
    %v293 = vadd.f32 %v286, %v291
    %vm294 = vcmask 64512
    %v295 = vsel %vm294, %v293, -inf
    %296 = vmax.xlane.f32.xlu0 %v295
    %v297 = vpop.xlane.xlu0 %296
    %v298 = vsub.f32 %v293, %v297
    %v299 = vmul.f32 %v298, 1.442695
    %v300 = vpow.pop %v299
    %v301 = vsel %vm294, %v300, 0.0
    %302 = vadd.xlane.f32.xlu0 %v301
    %v303 = vpop.xlane.xlu0 %302
    %v304 = vrcp.pop %v303
    %v305 = vmul.f32 %v300, %v304
    %306 = vrot.lane.b32.xlu0 %v200, 64
    %v307 = vpop.permute.xlu0 %306
    %v310 = vsel %vm294, %v305, 0
    %312 = vmatprep.subr.mxu0 0.0
    %313 = vmatpush1.msra.mxu0 %v307
    %314 = vmatprep.subr.mxu0 0.0
    %315 = vmatpush1.msra.mxu0 0.0
    %316 = vmatprep.subr.mxu0 0.0
    %317 = vmatpush1.msra.mxu0 0.0
    %318 = vmatprep.subr.mxu0 0.0
    %319 = vmatpush1.msra.mxu0 0.0
    %320 = vmatprep.subr.mxu0 0.0
    %321 = vmatpush1.msra.mxu0 0.0
    %322 = vmatprep.subr.mxu0 0.0
    %323 = vmatpush1.msra.mxu0 0.0
    %324 = vmatprep.subr.mxu0 0.0
    %325 = vmatpush1.msra.mxu0 0.0
    %326 = vmatprep.subr.mxu0 0.0
    %327 = vmatpush1.msra.mxu0 0.0
    %328 = vmatprep.subr.mxu0 0.0
    %329 = vmatpush1.msra.mxu0 0.0
    %330 = vmatprep.subr.mxu0 0.0
    %331 = vmatpush1.msra.mxu0 0.0
    %332 = vmatprep.subr.mxu0 0.0
    %333 = vmatpush1.msra.mxu0 0.0
    %334 = vmatprep.subr.mxu0 0.0
    %335 = vmatpush1.msra.mxu0 0.0
    %336 = vmatprep.subr.mxu0 0.0
    %337 = vmatpush1.msra.mxu0 0.0
    %338 = vmatprep.subr.mxu0 0.0
    %339 = vmatpush1.msra.mxu0 0.0
    %340 = vmatprep.subr.mxu0 0.0
    %341 = vmatpush1.msra.mxu0 0.0
    %342 = vmatprep.subr.mxu0 0.0
    %343 = vmatpush1.msra.mxu0 0.0
    %344 = vmatprep.subr.mxu0 0.0
    %345 = vmatpush1.msra.mxu0 0.0
    %346 = vmatprep.subr.mxu0 0.0
    %347 = vmatpush1.msra.mxu0 0.0
    %348 = vmatprep.subr.mxu0 0.0
    %349 = vmatpush1.msra.mxu0 0.0
    %350 = vmatprep.subr.mxu0 0.0
    %351 = vmatpush1.msra.mxu0 0.0
    %352 = vmatprep.subr.mxu0 0.0
    %353 = vmatpush1.msra.mxu0 0.0
    %354 = vmatprep.subr.mxu0 0.0
    %355 = vmatpush1.msra.mxu0 0.0
    %356 = vmatprep.subr.mxu0 0.0
    %357 = vmatpush1.msra.mxu0 0.0
    %358 = vmatprep.subr.mxu0 0.0
    %359 = vmatpush1.msra.mxu0 0.0
    %360 = vmatprep.subr.mxu0 0.0
    %361 = vmatpush1.msra.mxu0 0.0
    %362 = vmatprep.subr.mxu0 0.0
    %363 = vmatpush1.msra.mxu0 0.0
    %364 = vmatprep.subr.mxu0 0.0
    %365 = vmatpush1.msra.mxu0 0.0
    %366 = vmatprep.subr.mxu0 0.0
    %367 = vmatpush1.msra.mxu0 0.0
    %368 = vmatprep.subr.mxu0 0.0
    %369 = vmatpush1.msra.mxu0 0.0
    %370 = vmatprep.subr.mxu0 0.0
    %371 = vmatpush1.msra.mxu0 0.0
    %372 = vmatprep.subr.mxu0 0.0
    %373 = vmatpush1.msra.mxu0 0.0
    %374 = vmatprep.subr.mxu0 0.0
    %375 = vmatpush1.msra.mxu0 0.0
    %376 = vmatprep.mubr.f32.mxu0 0.0
    %377 = vmatmul.mubr.f32.gmra.mrb[0].mxu0 %v310
    %v378 = vpop.f32.mrb[0].mxu0
    %v379 = vadd.f32 0.0, %v378
    %v380 = vpop.f32.mrb[0].mxu0
    %381 = vdwg.mxu0
    %382 = vrot.lane.b32.xlu0 %v200, 112
    %v383 = vpop.permute.xlu0 %382
    %384 = vrot.lane.b32.xlu0 %v200, 80
    %v385 = vpop.permute.xlu0 %384
    %v386 = vsel %vm211, %v383, 0
    %v388 = vsel %vm211, %v385, 0
    %390 = vmatprep.subr.mxu0 0.0
    %391 = vmatpush1.xpose.msra.mxu0 %v388
    %392 = vmatprep.subr.mxu0 0.0
    %393 = vmatpush1.xpose.msra.mxu0 0.0
    %394 = vmatprep.subr.mxu0 0.0
    %395 = vmatpush1.xpose.msra.mxu0 0.0
    %396 = vmatprep.subr.mxu0 0.0
    %397 = vmatpush1.xpose.msra.mxu0 0.0
    %398 = vmatprep.subr.mxu0 0.0
    %399 = vmatpush1.xpose.msra.mxu0 0.0
    %400 = vmatprep.subr.mxu0 0.0
    %401 = vmatpush1.xpose.msra.mxu0 0.0
    %402 = vmatprep.subr.mxu0 0.0
    %403 = vmatpush1.xpose.msra.mxu0 0.0
    %404 = vmatprep.subr.mxu0 0.0
    %405 = vmatpush1.xpose.msra.mxu0 0.0
    %406 = vmatprep.subr.mxu0 0.0
    %407 = vmatpush1.xpose.msra.mxu0 0.0
    %408 = vmatprep.subr.mxu0 0.0
    %409 = vmatpush1.xpose.msra.mxu0 0.0
    %410 = vmatprep.subr.mxu0 0.0
    %411 = vmatpush1.xpose.msra.mxu0 0.0
    %412 = vmatprep.subr.mxu0 0.0
    %413 = vmatpush1.xpose.msra.mxu0 0.0
    %414 = vmatprep.subr.mxu0 0.0
    %415 = vmatpush1.xpose.msra.mxu0 0.0
    %416 = vmatprep.subr.mxu0 0.0
    %417 = vmatpush1.xpose.msra.mxu0 0.0
    %418 = vmatprep.subr.mxu0 0.0
    %419 = vmatpush1.xpose.msra.mxu0 0.0
    %420 = vmatprep.subr.mxu0 0.0
    %421 = vmatpush1.xpose.msra.mxu0 0.0
    %422 = vmatprep.subr.mxu0 0.0
    %423 = vmatpush1.xpose.msra.mxu0 0.0
    %424 = vmatprep.subr.mxu0 0.0
    %425 = vmatpush1.xpose.msra.mxu0 0.0
    %426 = vmatprep.subr.mxu0 0.0
    %427 = vmatpush1.xpose.msra.mxu0 0.0
    %428 = vmatprep.subr.mxu0 0.0
    %429 = vmatpush1.xpose.msra.mxu0 0.0
    %430 = vmatprep.subr.mxu0 0.0
    %431 = vmatpush1.xpose.msra.mxu0 0.0
    %432 = vmatprep.subr.mxu0 0.0
    %433 = vmatpush1.xpose.msra.mxu0 0.0
    %434 = vmatprep.subr.mxu0 0.0
    %435 = vmatpush1.xpose.msra.mxu0 0.0
    %436 = vmatprep.subr.mxu0 0.0
    %437 = vmatpush1.xpose.msra.mxu0 0.0
    %438 = vmatprep.subr.mxu0 0.0
    %439 = vmatpush1.xpose.msra.mxu0 0.0
    %440 = vmatprep.subr.mxu0 0.0
    %441 = vmatpush1.xpose.msra.mxu0 0.0
    %442 = vmatprep.subr.mxu0 0.0
    %443 = vmatpush1.xpose.msra.mxu0 0.0
    %444 = vmatprep.subr.mxu0 0.0
    %445 = vmatpush1.xpose.msra.mxu0 0.0
    %446 = vmatprep.subr.mxu0 0.0
    %447 = vmatpush1.xpose.msra.mxu0 0.0
    %448 = vmatprep.subr.mxu0 0.0
    %449 = vmatpush1.xpose.msra.mxu0 0.0
    %450 = vmatprep.subr.mxu0 0.0
    %451 = vmatpush1.xpose.msra.mxu0 0.0
    %452 = vmatprep.subr.mxu0 0.0
    %453 = vmatpush1.xpose.msra.mxu0 0.0
    %454 = vmatprep.mubr.f32.mxu0 0.0
    %455 = vmatmul.mubr.f32.gmra.mrb[0].mxu0 %v386
    %v456 = vpop.f32.mrb[0].mxu0
    %v457 = vadd.f32 0.0, %v456
    %v458 = vpop.f32.mrb[0].mxu0
    %459 = vdwg.mxu0
    %v460 = vmul.f32 %v457, 0.25
    %v461 = vadd.f32 %v460, %v291
    %v462 = vsel %vm294, %v461, -inf
    %463 = vmax.xlane.f32.xlu0 %v462
    %v464 = vpop.xlane.xlu0 %463
    %v465 = vsub.f32 %v461, %v464
    %v466 = vmul.f32 %v465, 1.442695
    %v467 = vpow.pop %v466
    %v468 = vsel %vm294, %v467, 0.0
    %469 = vadd.xlane.f32.xlu0 %v468
    %v470 = vpop.xlane.xlu0 %469
    %v471 = vrcp.pop %v470
    %v472 = vmul.f32 %v467, %v471
    %473 = vrot.lane.b32.xlu0 %v200, 48
    %v474 = vpop.permute.xlu0 %473
    %v477 = vsel %vm294, %v472, 0
    %479 = vmatprep.subr.mxu0 0.0
    %480 = vmatpush1.msra.mxu0 %v474
    %481 = vmatprep.subr.mxu0 0.0
    %482 = vmatpush1.msra.mxu0 0.0
    %483 = vmatprep.subr.mxu0 0.0
    %484 = vmatpush1.msra.mxu0 0.0
    %485 = vmatprep.subr.mxu0 0.0
    %486 = vmatpush1.msra.mxu0 0.0
    %487 = vmatprep.subr.mxu0 0.0
    %488 = vmatpush1.msra.mxu0 0.0
    %489 = vmatprep.subr.mxu0 0.0
    %490 = vmatpush1.msra.mxu0 0.0
    %491 = vmatprep.subr.mxu0 0.0
    %492 = vmatpush1.msra.mxu0 0.0
    %493 = vmatprep.subr.mxu0 0.0
    %494 = vmatpush1.msra.mxu0 0.0
    %495 = vmatprep.subr.mxu0 0.0
    %496 = vmatpush1.msra.mxu0 0.0
    %497 = vmatprep.subr.mxu0 0.0
    %498 = vmatpush1.msra.mxu0 0.0
    %499 = vmatprep.subr.mxu0 0.0
    %500 = vmatpush1.msra.mxu0 0.0
    %501 = vmatprep.subr.mxu0 0.0
    %502 = vmatpush1.msra.mxu0 0.0
    %503 = vmatprep.subr.mxu0 0.0
    %504 = vmatpush1.msra.mxu0 0.0
    %505 = vmatprep.subr.mxu0 0.0
    %506 = vmatpush1.msra.mxu0 0.0
    %507 = vmatprep.subr.mxu0 0.0
    %508 = vmatpush1.msra.mxu0 0.0
    %509 = vmatprep.subr.mxu0 0.0
    %510 = vmatpush1.msra.mxu0 0.0
    %511 = vmatprep.subr.mxu0 0.0
    %512 = vmatpush1.msra.mxu0 0.0
    %513 = vmatprep.subr.mxu0 0.0
    %514 = vmatpush1.msra.mxu0 0.0
    %515 = vmatprep.subr.mxu0 0.0
    %516 = vmatpush1.msra.mxu0 0.0
    %517 = vmatprep.subr.mxu0 0.0
    %518 = vmatpush1.msra.mxu0 0.0
    %519 = vmatprep.subr.mxu0 0.0
    %520 = vmatpush1.msra.mxu0 0.0
    %521 = vmatprep.subr.mxu0 0.0
    %522 = vmatpush1.msra.mxu0 0.0
    %523 = vmatprep.subr.mxu0 0.0
    %524 = vmatpush1.msra.mxu0 0.0
    %525 = vmatprep.subr.mxu0 0.0
    %526 = vmatpush1.msra.mxu0 0.0
    %527 = vmatprep.subr.mxu0 0.0
    %528 = vmatpush1.msra.mxu0 0.0
    %529 = vmatprep.subr.mxu0 0.0
    %530 = vmatpush1.msra.mxu0 0.0
    %531 = vmatprep.subr.mxu0 0.0
    %532 = vmatpush1.msra.mxu0 0.0
    %533 = vmatprep.subr.mxu0 0.0
    %534 = vmatpush1.msra.mxu0 0.0
    %535 = vmatprep.subr.mxu0 0.0
    %536 = vmatpush1.msra.mxu0 0.0
    %537 = vmatprep.subr.mxu0 0.0
    %538 = vmatpush1.msra.mxu0 0.0
    %539 = vmatprep.subr.mxu0 0.0
    %540 = vmatpush1.msra.mxu0 0.0
    %541 = vmatprep.subr.mxu0 0.0
    %542 = vmatpush1.msra.mxu0 0.0
    %543 = vmatprep.mubr.f32.mxu0 0.0
    %544 = vmatmul.mubr.f32.gmra.mrb[0].mxu0 %v477
    %v545 = vpop.f32.mrb[0].mxu0
    %v546 = vadd.f32 0.0, %v545
    %v547 = vpop.f32.mrb[0].mxu0
    %548 = vdwg.mxu0
    %550 = vrot.lane.b32.xlu0 %v546, 16
    %v551 = vpop.permute.xlu0 %550
    %v553 = vsel %vm211, %v379, %v551
    %555 = vrot.lane.b32.xlu0 %v205, 96
    %v556 = vpop.permute.xlu0 %555
    %v557 = vsel %vm211, %v205, 0
    %v559 = vsel %vm211, %v556, 0
    %561 = vmatprep.subr.mxu0 0.0
    %562 = vmatpush1.xpose.msra.mxu0 %v559
    %563 = vmatprep.subr.mxu0 0.0
    %564 = vmatpush1.xpose.msra.mxu0 0.0
    %565 = vmatprep.subr.mxu0 0.0
    %566 = vmatpush1.xpose.msra.mxu0 0.0
    %567 = vmatprep.subr.mxu0 0.0
    %568 = vmatpush1.xpose.msra.mxu0 0.0
    %569 = vmatprep.subr.mxu0 0.0
    %570 = vmatpush1.xpose.msra.mxu0 0.0
    %571 = vmatprep.subr.mxu0 0.0
    %572 = vmatpush1.xpose.msra.mxu0 0.0
    %573 = vmatprep.subr.mxu0 0.0
    %574 = vmatpush1.xpose.msra.mxu0 0.0
    %575 = vmatprep.subr.mxu0 0.0
    %576 = vmatpush1.xpose.msra.mxu0 0.0
    %577 = vmatprep.subr.mxu0 0.0
    %578 = vmatpush1.xpose.msra.mxu0 0.0
    %579 = vmatprep.subr.mxu0 0.0
    %580 = vmatpush1.xpose.msra.mxu0 0.0
    %581 = vmatprep.subr.mxu0 0.0
    %582 = vmatpush1.xpose.msra.mxu0 0.0
    %583 = vmatprep.subr.mxu0 0.0
    %584 = vmatpush1.xpose.msra.mxu0 0.0
    %585 = vmatprep.subr.mxu0 0.0
    %586 = vmatpush1.xpose.msra.mxu0 0.0
    %587 = vmatprep.subr.mxu0 0.0
    %588 = vmatpush1.xpose.msra.mxu0 0.0
    %589 = vmatprep.subr.mxu0 0.0
    %590 = vmatpush1.xpose.msra.mxu0 0.0
    %591 = vmatprep.subr.mxu0 0.0
    %592 = vmatpush1.xpose.msra.mxu0 0.0
    %593 = vmatprep.subr.mxu0 0.0
    %594 = vmatpush1.xpose.msra.mxu0 0.0
    %595 = vmatprep.subr.mxu0 0.0
    %596 = vmatpush1.xpose.msra.mxu0 0.0
    %597 = vmatprep.subr.mxu0 0.0
    %598 = vmatpush1.xpose.msra.mxu0 0.0
    %599 = vmatprep.subr.mxu0 0.0
    %600 = vmatpush1.xpose.msra.mxu0 0.0
    %601 = vmatprep.subr.mxu0 0.0
    %602 = vmatpush1.xpose.msra.mxu0 0.0
    %603 = vmatprep.subr.mxu0 0.0
    %604 = vmatpush1.xpose.msra.mxu0 0.0
    %605 = vmatprep.subr.mxu0 0.0
    %606 = vmatpush1.xpose.msra.mxu0 0.0
    %607 = vmatprep.subr.mxu0 0.0
    %608 = vmatpush1.xpose.msra.mxu0 0.0
    %609 = vmatprep.subr.mxu0 0.0
    %610 = vmatpush1.xpose.msra.mxu0 0.0
    %611 = vmatprep.subr.mxu0 0.0
    %612 = vmatpush1.xpose.msra.mxu0 0.0
    %613 = vmatprep.subr.mxu0 0.0
    %614 = vmatpush1.xpose.msra.mxu0 0.0
    %615 = vmatprep.subr.mxu0 0.0
    %616 = vmatpush1.xpose.msra.mxu0 0.0
    %617 = vmatprep.subr.mxu0 0.0
    %618 = vmatpush1.xpose.msra.mxu0 0.0
    %619 = vmatprep.subr.mxu0 0.0
    %620 = vmatpush1.xpose.msra.mxu0 0.0
    %621 = vmatprep.subr.mxu0 0.0
    %622 = vmatpush1.xpose.msra.mxu0 0.0
    %623 = vmatprep.subr.mxu0 0.0
    %624 = vmatpush1.xpose.msra.mxu0 0.0
    %625 = vmatprep.mubr.f32.mxu0 0.0
    %626 = vmatmul.mubr.f32.gmra.mrb[0].mxu0 %v557
    %v627 = vpop.f32.mrb[0].mxu0
    %v628 = vadd.f32 0.0, %v627
    %v629 = vpop.f32.mrb[0].mxu0
    %630 = vdwg.mxu0
    %v631 = vmul.f32 %v628, 0.25
    %v633 = vlaneseq
    %v634 = vshrl.u32 %v633, 7
    %v635 = vsub.s32 0, %v634
    %v636 = vrot.slane %v115, %v635
    %v638 = vadd.f32 %v631, %v636
    %v639 = vsel %vm294, %v638, -inf
    %640 = vmax.xlane.f32.xlu0 %v639
    %v641 = vpop.xlane.xlu0 %640
    %v642 = vsub.f32 %v638, %v641
    %v643 = vmul.f32 %v642, 1.442695
    %v644 = vpow.pop %v643
    %v645 = vsel %vm294, %v644, 0.0
    %646 = vadd.xlane.f32.xlu0 %v645
    %v647 = vpop.xlane.xlu0 %646
    %v648 = vrcp.pop %v647
    %v649 = vmul.f32 %v644, %v648
    %650 = vrot.lane.b32.xlu0 %v205, 64
    %v651 = vpop.permute.xlu0 %650
    %v654 = vsel %vm294, %v649, 0
    %656 = vmatprep.subr.mxu0 0.0
    %657 = vmatpush1.msra.mxu0 %v651
    %658 = vmatprep.subr.mxu0 0.0
    %659 = vmatpush1.msra.mxu0 0.0
    %660 = vmatprep.subr.mxu0 0.0
    %661 = vmatpush1.msra.mxu0 0.0
    %662 = vmatprep.subr.mxu0 0.0
    %663 = vmatpush1.msra.mxu0 0.0
    %664 = vmatprep.subr.mxu0 0.0
    %665 = vmatpush1.msra.mxu0 0.0
    %666 = vmatprep.subr.mxu0 0.0
    %667 = vmatpush1.msra.mxu0 0.0
    %668 = vmatprep.subr.mxu0 0.0
    %669 = vmatpush1.msra.mxu0 0.0
    %670 = vmatprep.subr.mxu0 0.0
    %671 = vmatpush1.msra.mxu0 0.0
    %672 = vmatprep.subr.mxu0 0.0
    %673 = vmatpush1.msra.mxu0 0.0
    %674 = vmatprep.subr.mxu0 0.0
    %675 = vmatpush1.msra.mxu0 0.0
    %676 = vmatprep.subr.mxu0 0.0
    %677 = vmatpush1.msra.mxu0 0.0
    %678 = vmatprep.subr.mxu0 0.0
    %679 = vmatpush1.msra.mxu0 0.0
    %680 = vmatprep.subr.mxu0 0.0
    %681 = vmatpush1.msra.mxu0 0.0
    %682 = vmatprep.subr.mxu0 0.0
    %683 = vmatpush1.msra.mxu0 0.0
    %684 = vmatprep.subr.mxu0 0.0
    %685 = vmatpush1.msra.mxu0 0.0
    %686 = vmatprep.subr.mxu0 0.0
    %687 = vmatpush1.msra.mxu0 0.0
    %688 = vmatprep.subr.mxu0 0.0
    %689 = vmatpush1.msra.mxu0 0.0
    %690 = vmatprep.subr.mxu0 0.0
    %691 = vmatpush1.msra.mxu0 0.0
    %692 = vmatprep.subr.mxu0 0.0
    %693 = vmatpush1.msra.mxu0 0.0
    %694 = vmatprep.subr.mxu0 0.0
    %695 = vmatpush1.msra.mxu0 0.0
    %696 = vmatprep.subr.mxu0 0.0
    %697 = vmatpush1.msra.mxu0 0.0
    %698 = vmatprep.subr.mxu0 0.0
    %699 = vmatpush1.msra.mxu0 0.0
    %700 = vmatprep.subr.mxu0 0.0
    %701 = vmatpush1.msra.mxu0 0.0
    %702 = vmatprep.subr.mxu0 0.0
    %703 = vmatpush1.msra.mxu0 0.0
    %704 = vmatprep.subr.mxu0 0.0
    %705 = vmatpush1.msra.mxu0 0.0
    %706 = vmatprep.subr.mxu0 0.0
    %707 = vmatpush1.msra.mxu0 0.0
    %708 = vmatprep.subr.mxu0 0.0
    %709 = vmatpush1.msra.mxu0 0.0
    %710 = vmatprep.subr.mxu0 0.0
    %711 = vmatpush1.msra.mxu0 0.0
    %712 = vmatprep.subr.mxu0 0.0
    %713 = vmatpush1.msra.mxu0 0.0
    %714 = vmatprep.subr.mxu0 0.0
    %715 = vmatpush1.msra.mxu0 0.0
    %716 = vmatprep.subr.mxu0 0.0
    %717 = vmatpush1.msra.mxu0 0.0
    %718 = vmatprep.subr.mxu0 0.0
    %719 = vmatpush1.msra.mxu0 0.0
    %720 = vmatprep.mubr.f32.mxu0 0.0
    %721 = vmatmul.mubr.f32.gmra.mrb[0].mxu0 %v654
    %v722 = vpop.f32.mrb[0].mxu0
    %v723 = vadd.f32 0.0, %v722
    %v724 = vpop.f32.mrb[0].mxu0
    %725 = vdwg.mxu0
    %726 = vrot.lane.b32.xlu0 %v205, 112
    %v727 = vpop.permute.xlu0 %726
    %728 = vrot.lane.b32.xlu0 %v205, 80
    %v729 = vpop.permute.xlu0 %728
    %v730 = vsel %vm211, %v727, 0
    %v732 = vsel %vm211, %v729, 0
    %734 = vmatprep.subr.mxu0 0.0
    %735 = vmatpush1.xpose.msra.mxu0 %v732
    %736 = vmatprep.subr.mxu0 0.0
    %737 = vmatpush1.xpose.msra.mxu0 0.0
    %738 = vmatprep.subr.mxu0 0.0
    %739 = vmatpush1.xpose.msra.mxu0 0.0
    %740 = vmatprep.subr.mxu0 0.0
    %741 = vmatpush1.xpose.msra.mxu0 0.0
    %742 = vmatprep.subr.mxu0 0.0
    %743 = vmatpush1.xpose.msra.mxu0 0.0
    %744 = vmatprep.subr.mxu0 0.0
    %745 = vmatpush1.xpose.msra.mxu0 0.0
    %746 = vmatprep.subr.mxu0 0.0
    %747 = vmatpush1.xpose.msra.mxu0 0.0
    %748 = vmatprep.subr.mxu0 0.0
    %749 = vmatpush1.xpose.msra.mxu0 0.0
    %750 = vmatprep.subr.mxu0 0.0
    %751 = vmatpush1.xpose.msra.mxu0 0.0
    %752 = vmatprep.subr.mxu0 0.0
    %753 = vmatpush1.xpose.msra.mxu0 0.0
    %754 = vmatprep.subr.mxu0 0.0
    %755 = vmatpush1.xpose.msra.mxu0 0.0
    %756 = vmatprep.subr.mxu0 0.0
    %757 = vmatpush1.xpose.msra.mxu0 0.0
    %758 = vmatprep.subr.mxu0 0.0
    %759 = vmatpush1.xpose.msra.mxu0 0.0
    %760 = vmatprep.subr.mxu0 0.0
    %761 = vmatpush1.xpose.msra.mxu0 0.0
    %762 = vmatprep.subr.mxu0 0.0
    %763 = vmatpush1.xpose.msra.mxu0 0.0
    %764 = vmatprep.subr.mxu0 0.0
    %765 = vmatpush1.xpose.msra.mxu0 0.0
    %766 = vmatprep.subr.mxu0 0.0
    %767 = vmatpush1.xpose.msra.mxu0 0.0
    %768 = vmatprep.subr.mxu0 0.0
    %769 = vmatpush1.xpose.msra.mxu0 0.0
    %770 = vmatprep.subr.mxu0 0.0
    %771 = vmatpush1.xpose.msra.mxu0 0.0
    %772 = vmatprep.subr.mxu0 0.0
    %773 = vmatpush1.xpose.msra.mxu0 0.0
    %774 = vmatprep.subr.mxu0 0.0
    %775 = vmatpush1.xpose.msra.mxu0 0.0
    %776 = vmatprep.subr.mxu0 0.0
    %777 = vmatpush1.xpose.msra.mxu0 0.0
    %778 = vmatprep.subr.mxu0 0.0
    %779 = vmatpush1.xpose.msra.mxu0 0.0
    %780 = vmatprep.subr.mxu0 0.0
    %781 = vmatpush1.xpose.msra.mxu0 0.0
    %782 = vmatprep.subr.mxu0 0.0
    %783 = vmatpush1.xpose.msra.mxu0 0.0
    %784 = vmatprep.subr.mxu0 0.0
    %785 = vmatpush1.xpose.msra.mxu0 0.0
    %786 = vmatprep.subr.mxu0 0.0
    %787 = vmatpush1.xpose.msra.mxu0 0.0
    %788 = vmatprep.subr.mxu0 0.0
    %789 = vmatpush1.xpose.msra.mxu0 0.0
    %790 = vmatprep.subr.mxu0 0.0
    %791 = vmatpush1.xpose.msra.mxu0 0.0
    %792 = vmatprep.subr.mxu0 0.0
    %793 = vmatpush1.xpose.msra.mxu0 0.0
    %794 = vmatprep.subr.mxu0 0.0
    %795 = vmatpush1.xpose.msra.mxu0 0.0
    %796 = vmatprep.subr.mxu0 0.0
    %797 = vmatpush1.xpose.msra.mxu0 0.0
    %798 = vmatprep.mubr.f32.mxu0 0.0
    %799 = vmatmul.mubr.f32.gmra.mrb[0].mxu0 %v730
    %v800 = vpop.f32.mrb[0].mxu0
    %v801 = vadd.f32 0.0, %v800
    %v802 = vpop.f32.mrb[0].mxu0
    %803 = vdwg.mxu0
    %v804 = vmul.f32 %v801, 0.25
    %v805 = vadd.f32 %v804, %v636
    %v806 = vsel %vm294, %v805, -inf
    %807 = vmax.xlane.f32.xlu0 %v806
    %v808 = vpop.xlane.xlu0 %807
    %v809 = vsub.f32 %v805, %v808
    %v810 = vmul.f32 %v809, 1.442695
    %v811 = vpow.pop %v810
    %v812 = vsel %vm294, %v811, 0.0
    %813 = vadd.xlane.f32.xlu0 %v812
    %v814 = vpop.xlane.xlu0 %813
    %v815 = vrcp.pop %v814
    %v816 = vmul.f32 %v811, %v815
    %817 = vrot.lane.b32.xlu0 %v205, 48
    %v818 = vpop.permute.xlu0 %817
    %v821 = vsel %vm294, %v816, 0
    %823 = vmatprep.subr.mxu0 0.0
    %824 = vmatpush1.msra.mxu0 %v818
    %825 = vmatprep.subr.mxu0 0.0
    %826 = vmatpush1.msra.mxu0 0.0
    %827 = vmatprep.subr.mxu0 0.0
    %828 = vmatpush1.msra.mxu0 0.0
    %829 = vmatprep.subr.mxu0 0.0
    %830 = vmatpush1.msra.mxu0 0.0
    %831 = vmatprep.subr.mxu0 0.0
    %832 = vmatpush1.msra.mxu0 0.0
    %833 = vmatprep.subr.mxu0 0.0
    %834 = vmatpush1.msra.mxu0 0.0
    %835 = vmatprep.subr.mxu0 0.0
    %836 = vmatpush1.msra.mxu0 0.0
    %837 = vmatprep.subr.mxu0 0.0
    %838 = vmatpush1.msra.mxu0 0.0
    %839 = vmatprep.subr.mxu0 0.0
    %840 = vmatpush1.msra.mxu0 0.0
    %841 = vmatprep.subr.mxu0 0.0
    %842 = vmatpush1.msra.mxu0 0.0
    %843 = vmatprep.subr.mxu0 0.0
    %844 = vmatpush1.msra.mxu0 0.0
    %845 = vmatprep.subr.mxu0 0.0
    %846 = vmatpush1.msra.mxu0 0.0
    %847 = vmatprep.subr.mxu0 0.0
    %848 = vmatpush1.msra.mxu0 0.0
    %849 = vmatprep.subr.mxu0 0.0
    %850 = vmatpush1.msra.mxu0 0.0
    %851 = vmatprep.subr.mxu0 0.0
    %852 = vmatpush1.msra.mxu0 0.0
    %853 = vmatprep.subr.mxu0 0.0
    %854 = vmatpush1.msra.mxu0 0.0
    %855 = vmatprep.subr.mxu0 0.0
    %856 = vmatpush1.msra.mxu0 0.0
    %857 = vmatprep.subr.mxu0 0.0
    %858 = vmatpush1.msra.mxu0 0.0
    %859 = vmatprep.subr.mxu0 0.0
    %860 = vmatpush1.msra.mxu0 0.0
    %861 = vmatprep.subr.mxu0 0.0
    %862 = vmatpush1.msra.mxu0 0.0
    %863 = vmatprep.subr.mxu0 0.0
    %864 = vmatpush1.msra.mxu0 0.0
    %865 = vmatprep.subr.mxu0 0.0
    %866 = vmatpush1.msra.mxu0 0.0
    %867 = vmatprep.subr.mxu0 0.0
    %868 = vmatpush1.msra.mxu0 0.0
    %869 = vmatprep.subr.mxu0 0.0
    %870 = vmatpush1.msra.mxu0 0.0
    %871 = vmatprep.subr.mxu0 0.0
    %872 = vmatpush1.msra.mxu0 0.0
    %873 = vmatprep.subr.mxu0 0.0
    %874 = vmatpush1.msra.mxu0 0.0
    %875 = vmatprep.subr.mxu0 0.0
    %876 = vmatpush1.msra.mxu0 0.0
    %877 = vmatprep.subr.mxu0 0.0
    %878 = vmatpush1.msra.mxu0 0.0
    %879 = vmatprep.subr.mxu0 0.0
    %880 = vmatpush1.msra.mxu0 0.0
    %881 = vmatprep.subr.mxu0 0.0
    %882 = vmatpush1.msra.mxu0 0.0
    %883 = vmatprep.subr.mxu0 0.0
    %884 = vmatpush1.msra.mxu0 0.0
    %885 = vmatprep.subr.mxu0 0.0
    %886 = vmatpush1.msra.mxu0 0.0
    %887 = vmatprep.mubr.f32.mxu0 0.0
    %888 = vmatmul.mubr.f32.gmra.mrb[0].mxu0 %v821
    %v889 = vpop.f32.mrb[0].mxu0
    %v890 = vadd.f32 0.0, %v889
    %v891 = vpop.f32.mrb[0].mxu0
    %892 = vdwg.mxu0
    %894 = vrot.lane.b32.xlu0 %v890, 16
    %v895 = vpop.permute.xlu0 %894
    %v897 = vsel %vm211, %v723, %v895
    %v898 = vld [vmem:[%s6] sm:$0xff]
    %v899 = vld [vmem:[%s6 + $0x8] sm:$0xff]
    %v900 = vld [vmem:[%s6 + $0x10] sm:$0xff]
    %v901 = vld [vmem:[%s6 + $0x18] sm:$0xff]
    %v902 = vld [vmem:[%s7] sm:$0x1]
    %v904 = vlaneseq
    %v905 = vshrl.u32 %v904, 7
    %v906 = vsub.s32 0, %v905
    %v907 = vrot.slane %v902, %v906
    %v910 = vsel %vm70, %v553, 0
    %v913 = vsel %vm70, %v897, 0
    %915 = vmatprep.subr.mxu0 0.0
    %916 = vmatpush1.msra.mxu0 %v898
    %917 = vmatprep.subr.mxu0 0.0
    %918 = vmatpush1.msra.mxu0 %v899
    %919 = vmatprep.subr.mxu0 0.0
    %920 = vmatpush1.msra.mxu0 %v900
    %921 = vmatprep.subr.mxu0 0.0
    %922 = vmatpush1.msra.mxu0 %v901
    %923 = vmatprep.subr.mxu0 0.0
    %924 = vmatpush1.msra.mxu0 0.0
    %925 = vmatprep.subr.mxu0 0.0
    %926 = vmatpush1.msra.mxu0 0.0
    %927 = vmatprep.subr.mxu0 0.0
    %928 = vmatpush1.msra.mxu0 0.0
    %929 = vmatprep.subr.mxu0 0.0
    %930 = vmatpush1.msra.mxu0 0.0
    %931 = vmatprep.subr.mxu0 0.0
    %932 = vmatpush1.msra.mxu0 0.0
    %933 = vmatprep.subr.mxu0 0.0
    %934 = vmatpush1.msra.mxu0 0.0
    %935 = vmatprep.subr.mxu0 0.0
    %936 = vmatpush1.msra.mxu0 0.0
    %937 = vmatprep.subr.mxu0 0.0
    %938 = vmatpush1.msra.mxu0 0.0
    %939 = vmatprep.subr.mxu0 0.0
    %940 = vmatpush1.msra.mxu0 0.0
    %941 = vmatprep.subr.mxu0 0.0
    %942 = vmatpush1.msra.mxu0 0.0
    %943 = vmatprep.subr.mxu0 0.0
    %944 = vmatpush1.msra.mxu0 0.0
    %945 = vmatprep.subr.mxu0 0.0
    %946 = vmatpush1.msra.mxu0 0.0
    %947 = vmatprep.subr.mxu0 0.0
    %948 = vmatpush1.msra.mxu0 0.0
    %949 = vmatprep.subr.mxu0 0.0
    %950 = vmatpush1.msra.mxu0 0.0
    %951 = vmatprep.subr.mxu0 0.0
    %952 = vmatpush1.msra.mxu0 0.0
    %953 = vmatprep.subr.mxu0 0.0
    %954 = vmatpush1.msra.mxu0 0.0
    %955 = vmatprep.subr.mxu0 0.0
    %956 = vmatpush1.msra.mxu0 0.0
    %957 = vmatprep.subr.mxu0 0.0
    %958 = vmatpush1.msra.mxu0 0.0
    %959 = vmatprep.subr.mxu0 0.0
    %960 = vmatpush1.msra.mxu0 0.0
    %961 = vmatprep.subr.mxu0 0.0
    %962 = vmatpush1.msra.mxu0 0.0
    %963 = vmatprep.subr.mxu0 0.0
    %964 = vmatpush1.msra.mxu0 0.0
    %965 = vmatprep.subr.mxu0 0.0
    %966 = vmatpush1.msra.mxu0 0.0
    %967 = vmatprep.subr.mxu0 0.0
    %968 = vmatpush1.msra.mxu0 0.0
    %969 = vmatprep.subr.mxu0 0.0
    %970 = vmatpush1.msra.mxu0 0.0
    %971 = vmatprep.subr.mxu0 0.0
    %972 = vmatpush1.msra.mxu0 0.0
    %973 = vmatprep.subr.mxu0 0.0
    %974 = vmatpush1.msra.mxu0 0.0
    %975 = vmatprep.subr.mxu0 0.0
    %976 = vmatpush1.msra.mxu0 0.0
    %977 = vmatprep.subr.mxu0 0.0
    %978 = vmatpush1.msra.mxu0 0.0
    %979 = vmatprep.mubr.f32.mxu0 0.0
    %980 = vmatmul.mubr.f32.gmra.mrb[0].mxu0 %v910
    %v981 = vpop.f32.mrb[0].mxu0
    %v982 = vadd.f32 %v907, %v981
    %v983 = vpop.f32.mrb[0].mxu0
    %984 = vmatprep.mubr.f32.mxu0 0.0
    %985 = vmatmul.mubr.f32.gmra.mrb[0].mxu0 %v913
    %v986 = vpop.f32.mrb[0].mxu0
    %v987 = vadd.f32 %v907, %v986
    %v988 = vpop.f32.mrb[0].mxu0
    %989 = vdwg.mxu0
    %v990 = vadd.f32 %v982, %v112
    %v991 = vadd.f32 %v987, %v113
    %v992 = vld [vmem:[%s8] sm:$0x1]
    %v993 = vld [vmem:[%s9] sm:$0x1]
    %v994 = vsel %vm70, %v990, 0.0
    %995 = vadd.xlane.f32.xlu0 %v994
    %v996 = vpop.xlane.xlu0 %995
    %v997 = vsel %vm70, %v991, 0.0
    %998 = vadd.xlane.f32.xlu0 %v997
    %v999 = vpop.xlane.xlu0 %998
    %v1000 = vmul.f32 %v996, %v77
    %v1001 = vmul.f32 %v999, %v77
    %v1002 = vsub.f32 %v990, %v1000
    %v1003 = vsub.f32 %v991, %v1001
    %v1004 = vmul.f32 %v1002, %v1002
    %v1005 = vmul.f32 %v1003, %v1003
    %v1006 = vsel %vm70, %v1004, 0.0
    %1007 = vadd.xlane.f32.xlu0 %v1006
    %v1008 = vpop.xlane.xlu0 %1007
    %v1009 = vsel %vm70, %v1005, 0.0
    %1010 = vadd.xlane.f32.xlu0 %v1009
    %v1011 = vpop.xlane.xlu0 %1010
    %v1012 = vmul.f32 %v1008, %v77
    %v1013 = vmul.f32 %v1011, %v77
    %v1014 = vadd.f32 %v1012, 1e-12
    %v1015 = vadd.f32 %v1013, 1e-12
    %v1016 = vrsqrt.pop %v1014
    %v1017 = vrsqrt.pop %v1015
    %v1018 = vmul.f32 %v1002, %v1016
    %v1019 = vmul.f32 %v1003, %v1017
    %v1021 = vlaneseq
    %v1022 = vshrl.u32 %v1021, 7
    %v1023 = vsub.s32 0, %v1022
    %v1024 = vrot.slane %v992, %v1023
    %v1026 = vmul.f32 %v1018, %v1024
    %v1027 = vmul.f32 %v1019, %v1024
    %v1029 = vlaneseq
    %v1030 = vshrl.u32 %v1029, 7
    %v1031 = vsub.s32 0, %v1030
    %v1032 = vrot.slane %v993, %v1031
    %v1034 = vadd.f32 %v1026, %v1032
    %v1035 = vadd.f32 %v1027, %v1032
    %v1036 = vld [vmem:[%s10] sm:$0xff]
    %v1037 = vld [vmem:[%s10 + $0x8] sm:$0xff]
    %v1038 = vld [vmem:[%s10 + $0x10] sm:$0xff]
    %v1039 = vld [vmem:[%s10 + $0x18] sm:$0xff]
    %v1040 = vld [vmem:[%s10 + $0x20] sm:$0xff]
    %v1041 = vld [vmem:[%s10 + $0x28] sm:$0xff]
    %v1042 = vld [vmem:[%s10 + $0x30] sm:$0xff]
    %v1043 = vld [vmem:[%s10 + $0x38] sm:$0xff]
    %v1044 = vld [vmem:[%s10 + $0x40] sm:$0xff]
    %v1045 = vld [vmem:[%s10 + $0x48] sm:$0xff]
    %v1046 = vld [vmem:[%s10 + $0x50] sm:$0xff]
    %v1047 = vld [vmem:[%s10 + $0x58] sm:$0xff]
    %v1048 = vld [vmem:[%s10 + $0x60] sm:$0xff]
    %v1049 = vld [vmem:[%s10 + $0x68] sm:$0xff]
    %v1050 = vld [vmem:[%s10 + $0x70] sm:$0xff]
    %v1051 = vld [vmem:[%s10 + $0x78] sm:$0xff]
    %v1052 = vld [vmem:[%s11] sm:$0xf]
    %v1054 = vlaneseq
    %v1055 = vshrl.u32 %v1054, 7
    %v1056 = vsub.s32 0, %v1055
    %v1057 = vrot.slane %v1052, %v1056
    %v1058 = vlaneseq
    %v1059 = vshrl.u32 %v1058, 7
    %v1060 = vsub.s32 1, %v1059
    %v1061 = vrot.slane %v1052, %v1060
    %v1062 = vlaneseq
    %v1063 = vshrl.u32 %v1062, 7
    %v1064 = vsub.s32 2, %v1063
    %v1065 = vrot.slane %v1052, %v1064
    %v1066 = vlaneseq
    %v1067 = vshrl.u32 %v1066, 7
    %v1068 = vsub.s32 3, %v1067
    %v1069 = vrot.slane %v1052, %v1068
    %v1075 = vsel %vm70, %v1034, 0
    %v1078 = vsel %vm70, %v1035, 0
    %1080 = vmatprep.subr.mxu0 %v1037
    %1081 = vmatpush1.msra.mxu0 %v1036
    %1082 = vmatprep.subr.mxu0 %v1041
    %1083 = vmatpush1.msra.mxu0 %v1040
    %1084 = vmatprep.subr.mxu0 %v1045
    %1085 = vmatpush1.msra.mxu0 %v1044
    %1086 = vmatprep.subr.mxu0 %v1049
    %1087 = vmatpush1.msra.mxu0 %v1048
    %1088 = vmatprep.subr.mxu0 0.0
    %1089 = vmatpush1.msra.mxu0 0.0
    %1090 = vmatprep.subr.mxu0 0.0
    %1091 = vmatpush1.msra.mxu0 0.0
    %1092 = vmatprep.subr.mxu0 0.0
    %1093 = vmatpush1.msra.mxu0 0.0
    %1094 = vmatprep.subr.mxu0 0.0
    %1095 = vmatpush1.msra.mxu0 0.0
    %1096 = vmatprep.subr.mxu0 0.0
    %1097 = vmatpush1.msra.mxu0 0.0
    %1098 = vmatprep.subr.mxu0 0.0
    %1099 = vmatpush1.msra.mxu0 0.0
    %1100 = vmatprep.subr.mxu0 0.0
    %1101 = vmatpush1.msra.mxu0 0.0
    %1102 = vmatprep.subr.mxu0 0.0
    %1103 = vmatpush1.msra.mxu0 0.0
    %1104 = vmatprep.subr.mxu0 0.0
    %1105 = vmatpush1.msra.mxu0 0.0
    %1106 = vmatprep.subr.mxu0 0.0
    %1107 = vmatpush1.msra.mxu0 0.0
    %1108 = vmatprep.subr.mxu0 0.0
    %1109 = vmatpush1.msra.mxu0 0.0
    %1110 = vmatprep.subr.mxu0 0.0
    %1111 = vmatpush1.msra.mxu0 0.0
    %1112 = vmatprep.subr.mxu0 0.0
    %1113 = vmatpush1.msra.mxu0 0.0
    %1114 = vmatprep.subr.mxu0 0.0
    %1115 = vmatpush1.msra.mxu0 0.0
    %1116 = vmatprep.subr.mxu0 0.0
    %1117 = vmatpush1.msra.mxu0 0.0
    %1118 = vmatprep.subr.mxu0 0.0
    %1119 = vmatpush1.msra.mxu0 0.0
    %1120 = vmatprep.subr.mxu0 0.0
    %1121 = vmatpush1.msra.mxu0 0.0
    %1122 = vmatprep.subr.mxu0 0.0
    %1123 = vmatpush1.msra.mxu0 0.0
    %1124 = vmatprep.subr.mxu0 0.0
    %1125 = vmatpush1.msra.mxu0 0.0
    %1126 = vmatprep.subr.mxu0 0.0
    %1127 = vmatpush1.msra.mxu0 0.0
    %1128 = vmatprep.subr.mxu0 0.0
    %1129 = vmatpush1.msra.mxu0 0.0
    %1130 = vmatprep.subr.mxu0 0.0
    %1131 = vmatpush1.msra.mxu0 0.0
    %1132 = vmatprep.subr.mxu0 0.0
    %1133 = vmatpush1.msra.mxu0 0.0
    %1134 = vmatprep.subr.mxu0 0.0
    %1135 = vmatpush1.msra.mxu0 0.0
    %1136 = vmatprep.subr.mxu0 0.0
    %1137 = vmatpush1.msra.mxu0 0.0
    %1138 = vmatprep.subr.mxu0 0.0
    %1139 = vmatpush1.msra.mxu0 0.0
    %1140 = vmatprep.subr.mxu0 0.0
    %1141 = vmatpush1.msra.mxu0 0.0
    %1142 = vmatprep.subr.mxu0 0.0
    %1143 = vmatpush1.msra.mxu0 0.0
    %1144 = vmatprep.mubr.f32.mxu0 0.0
    %1145 = vmatmul.mubr.f32.gmra.mrb[0].mxu0 %v1075
    %v1146 = vpop.f32.mrb[0].mxu0
    %v1147 = vadd.f32 %v1057, %v1146
    %v1148 = vpop.f32.mrb[0].mxu0
    %v1149 = vadd.f32 %v1061, %v1148
    %1150 = vmatprep.mubr.f32.mxu0 0.0
    %1151 = vmatmul.mubr.f32.gmra.mrb[0].mxu0 %v1078
    %v1152 = vpop.f32.mrb[0].mxu0
    %v1153 = vadd.f32 %v1057, %v1152
    %v1154 = vpop.f32.mrb[0].mxu0
    %v1155 = vadd.f32 %v1061, %v1154
    %1156 = vdwg.mxu0
    %1157 = vmatprep.subr.mxu0 %v1039
    %1158 = vmatpush1.msra.mxu0 %v1038
    %1159 = vmatprep.subr.mxu0 %v1043
    %1160 = vmatpush1.msra.mxu0 %v1042
    %1161 = vmatprep.subr.mxu0 %v1047
    %1162 = vmatpush1.msra.mxu0 %v1046
    %1163 = vmatprep.subr.mxu0 %v1051
    %1164 = vmatpush1.msra.mxu0 %v1050
    %1165 = vmatprep.subr.mxu0 0.0
    %1166 = vmatpush1.msra.mxu0 0.0
    %1167 = vmatprep.subr.mxu0 0.0
    %1168 = vmatpush1.msra.mxu0 0.0
    %1169 = vmatprep.subr.mxu0 0.0
    %1170 = vmatpush1.msra.mxu0 0.0
    %1171 = vmatprep.subr.mxu0 0.0
    %1172 = vmatpush1.msra.mxu0 0.0
    %1173 = vmatprep.subr.mxu0 0.0
    %1174 = vmatpush1.msra.mxu0 0.0
    %1175 = vmatprep.subr.mxu0 0.0
    %1176 = vmatpush1.msra.mxu0 0.0
    %1177 = vmatprep.subr.mxu0 0.0
    %1178 = vmatpush1.msra.mxu0 0.0
    %1179 = vmatprep.subr.mxu0 0.0
    %1180 = vmatpush1.msra.mxu0 0.0
    %1181 = vmatprep.subr.mxu0 0.0
    %1182 = vmatpush1.msra.mxu0 0.0
    %1183 = vmatprep.subr.mxu0 0.0
    %1184 = vmatpush1.msra.mxu0 0.0
    %1185 = vmatprep.subr.mxu0 0.0
    %1186 = vmatpush1.msra.mxu0 0.0
    %1187 = vmatprep.subr.mxu0 0.0
    %1188 = vmatpush1.msra.mxu0 0.0
    %1189 = vmatprep.subr.mxu0 0.0
    %1190 = vmatpush1.msra.mxu0 0.0
    %1191 = vmatprep.subr.mxu0 0.0
    %1192 = vmatpush1.msra.mxu0 0.0
    %1193 = vmatprep.subr.mxu0 0.0
    %1194 = vmatpush1.msra.mxu0 0.0
    %1195 = vmatprep.subr.mxu0 0.0
    %1196 = vmatpush1.msra.mxu0 0.0
    %1197 = vmatprep.subr.mxu0 0.0
    %1198 = vmatpush1.msra.mxu0 0.0
    %1199 = vmatprep.subr.mxu0 0.0
    %1200 = vmatpush1.msra.mxu0 0.0
    %1201 = vmatprep.subr.mxu0 0.0
    %1202 = vmatpush1.msra.mxu0 0.0
    %1203 = vmatprep.subr.mxu0 0.0
    %1204 = vmatpush1.msra.mxu0 0.0
    %1205 = vmatprep.subr.mxu0 0.0
    %1206 = vmatpush1.msra.mxu0 0.0
    %1207 = vmatprep.subr.mxu0 0.0
    %1208 = vmatpush1.msra.mxu0 0.0
    %1209 = vmatprep.subr.mxu0 0.0
    %1210 = vmatpush1.msra.mxu0 0.0
    %1211 = vmatprep.subr.mxu0 0.0
    %1212 = vmatpush1.msra.mxu0 0.0
    %1213 = vmatprep.subr.mxu0 0.0
    %1214 = vmatpush1.msra.mxu0 0.0
    %1215 = vmatprep.subr.mxu0 0.0
    %1216 = vmatpush1.msra.mxu0 0.0
    %1217 = vmatprep.subr.mxu0 0.0
    %1218 = vmatpush1.msra.mxu0 0.0
    %1219 = vmatprep.subr.mxu0 0.0
    %1220 = vmatpush1.msra.mxu0 0.0
    %1221 = vmatprep.mubr.f32.mxu0 0.0
    %1222 = vmatmul.mubr.f32.gmra.mrb[0].mxu0 %v1075
    %v1223 = vpop.f32.mrb[0].mxu0
    %v1224 = vadd.f32 %v1065, %v1223
    %v1225 = vpop.f32.mrb[0].mxu0
    %v1226 = vadd.f32 %v1069, %v1225
    %1227 = vmatprep.mubr.f32.mxu0 0.0
    %1228 = vmatmul.mubr.f32.gmra.mrb[0].mxu0 %v1078
    %v1229 = vpop.f32.mrb[0].mxu0
    %v1230 = vadd.f32 %v1065, %v1229
    %v1231 = vpop.f32.mrb[0].mxu0
    %v1232 = vadd.f32 %v1069, %v1231
    %1233 = vdwg.mxu0
    %v1234 = vmul.f32 %v1147, 0.5
    %v1235 = vmul.f32 %v1149, 0.5
    %v1236 = vmul.f32 %v1224, 0.5
    %v1237 = vmul.f32 %v1226, 0.5
    %v1238 = vmul.f32 %v1153, 0.5
    %v1239 = vmul.f32 %v1155, 0.5
    %v1240 = vmul.f32 %v1230, 0.5
    %v1241 = vmul.f32 %v1232, 0.5
    %v1242 = vmul.f32 %v1147, 0.70710677
    %v1243 = vmul.f32 %v1149, 0.70710677
    %v1244 = vmul.f32 %v1224, 0.70710677
    %v1245 = vmul.f32 %v1226, 0.70710677
    %v1246 = vmul.f32 %v1153, 0.70710677
    %v1247 = vmul.f32 %v1155, 0.70710677
    %v1248 = vmul.f32 %v1230, 0.70710677
    %v1249 = vmul.f32 %v1232, 0.70710677
    %vm1250 = vcmp.ge.f32.partialorder %v1242, 0.0
    %vm1251 = vcmp.ge.f32.partialorder %v1243, 0.0
    %vm1252 = vcmp.ge.f32.partialorder %v1244, 0.0
    %vm1253 = vcmp.ge.f32.partialorder %v1245, 0.0
    %vm1254 = vcmp.ge.f32.partialorder %v1246, 0.0
    %vm1255 = vcmp.ge.f32.partialorder %v1247, 0.0
    %vm1256 = vcmp.ge.f32.partialorder %v1248, 0.0
    %vm1257 = vcmp.ge.f32.partialorder %v1249, 0.0
    %v1258 = vsel %vm1250, 1.0, -1.0
    %v1259 = vsel %vm1251, 1.0, -1.0
    %v1260 = vsel %vm1252, 1.0, -1.0
    %v1261 = vsel %vm1253, 1.0, -1.0
    %v1262 = vsel %vm1254, 1.0, -1.0
    %v1263 = vsel %vm1255, 1.0, -1.0
    %v1264 = vsel %vm1256, 1.0, -1.0
    %v1265 = vsel %vm1257, 1.0, -1.0
    %v1266 = vand.u32 2147483647, %v1242
    %v1267 = vand.u32 2147483647, %v1243
    %v1268 = vand.u32 2147483647, %v1244
    %v1269 = vand.u32 2147483647, %v1245
    %v1270 = vand.u32 2147483647, %v1246
    %v1271 = vand.u32 2147483647, %v1247
    %v1272 = vand.u32 2147483647, %v1248
    %v1273 = vand.u32 2147483647, %v1249
    %v1274 = vmul.f32 %v1266, 0.3275911
    %v1275 = vmul.f32 %v1267, 0.3275911
    %v1276 = vmul.f32 %v1268, 0.3275911
    %v1277 = vmul.f32 %v1269, 0.3275911
    %v1278 = vmul.f32 %v1270, 0.3275911
    %v1279 = vmul.f32 %v1271, 0.3275911
    %v1280 = vmul.f32 %v1272, 0.3275911
    %v1281 = vmul.f32 %v1273, 0.3275911
    %v1282 = vadd.f32 %v1274, 1.0
    %v1283 = vadd.f32 %v1275, 1.0
    %v1284 = vadd.f32 %v1276, 1.0
    %v1285 = vadd.f32 %v1277, 1.0
    %v1286 = vadd.f32 %v1278, 1.0
    %v1287 = vadd.f32 %v1279, 1.0
    %v1288 = vadd.f32 %v1280, 1.0
    %v1289 = vadd.f32 %v1281, 1.0
    %v1290 = vrcp.pop %v1282
    %v1291 = vmul.f32 1.0, %v1290
    %v1292 = vrcp.pop %v1283
    %v1293 = vmul.f32 1.0, %v1292
    %v1294 = vrcp.pop %v1284
    %v1295 = vmul.f32 1.0, %v1294
    %v1296 = vrcp.pop %v1285
    %v1297 = vmul.f32 1.0, %v1296
    %v1298 = vrcp.pop %v1286
    %v1299 = vmul.f32 1.0, %v1298
    %v1300 = vrcp.pop %v1287
    %v1301 = vmul.f32 1.0, %v1300
    %v1302 = vrcp.pop %v1288
    %v1303 = vmul.f32 1.0, %v1302
    %v1304 = vrcp.pop %v1289
    %v1305 = vmul.f32 1.0, %v1304
    %v1306 = vmul.f32 %v1291, 1.0614054
    %v1307 = vmul.f32 %v1293, 1.0614054
    %v1308 = vmul.f32 %v1295, 1.0614054
    %v1309 = vmul.f32 %v1297, 1.0614054
    %v1310 = vmul.f32 %v1299, 1.0614054
    %v1311 = vmul.f32 %v1301, 1.0614054
    %v1312 = vmul.f32 %v1303, 1.0614054
    %v1313 = vmul.f32 %v1305, 1.0614054
    %v1314 = vadd.f32 %v1306, -1.4531521
    %v1315 = vadd.f32 %v1307, -1.4531521
    %v1316 = vadd.f32 %v1308, -1.4531521
    %v1317 = vadd.f32 %v1309, -1.4531521
    %v1318 = vadd.f32 %v1310, -1.4531521
    %v1319 = vadd.f32 %v1311, -1.4531521
    %v1320 = vadd.f32 %v1312, -1.4531521
    %v1321 = vadd.f32 %v1313, -1.4531521
    %v1322 = vmul.f32 %v1314, %v1291
    %v1323 = vmul.f32 %v1315, %v1293
    %v1324 = vmul.f32 %v1316, %v1295
    %v1325 = vmul.f32 %v1317, %v1297
    %v1326 = vmul.f32 %v1318, %v1299
    %v1327 = vmul.f32 %v1319, %v1301
    %v1328 = vmul.f32 %v1320, %v1303
    %v1329 = vmul.f32 %v1321, %v1305
    %v1330 = vadd.f32 %v1322, 1.4214138
    %v1331 = vadd.f32 %v1323, 1.4214138
    %v1332 = vadd.f32 %v1324, 1.4214138
    %v1333 = vadd.f32 %v1325, 1.4214138
    %v1334 = vadd.f32 %v1326, 1.4214138
    %v1335 = vadd.f32 %v1327, 1.4214138
    %v1336 = vadd.f32 %v1328, 1.4214138
    %v1337 = vadd.f32 %v1329, 1.4214138
    %v1338 = vmul.f32 %v1330, %v1291
    %v1339 = vmul.f32 %v1331, %v1293
    %v1340 = vmul.f32 %v1332, %v1295
    %v1341 = vmul.f32 %v1333, %v1297
    %v1342 = vmul.f32 %v1334, %v1299
    %v1343 = vmul.f32 %v1335, %v1301
    %v1344 = vmul.f32 %v1336, %v1303
    %v1345 = vmul.f32 %v1337, %v1305
    %v1346 = vadd.f32 %v1338, -0.28449672
    %v1347 = vadd.f32 %v1339, -0.28449672
    %v1348 = vadd.f32 %v1340, -0.28449672
    %v1349 = vadd.f32 %v1341, -0.28449672
    %v1350 = vadd.f32 %v1342, -0.28449672
    %v1351 = vadd.f32 %v1343, -0.28449672
    %v1352 = vadd.f32 %v1344, -0.28449672
    %v1353 = vadd.f32 %v1345, -0.28449672
    %v1354 = vmul.f32 %v1346, %v1291
    %v1355 = vmul.f32 %v1347, %v1293
    %v1356 = vmul.f32 %v1348, %v1295
    %v1357 = vmul.f32 %v1349, %v1297
    %v1358 = vmul.f32 %v1350, %v1299
    %v1359 = vmul.f32 %v1351, %v1301
    %v1360 = vmul.f32 %v1352, %v1303
    %v1361 = vmul.f32 %v1353, %v1305
    %v1362 = vadd.f32 %v1354, 0.2548296
    %v1363 = vadd.f32 %v1355, 0.2548296
    %v1364 = vadd.f32 %v1356, 0.2548296
    %v1365 = vadd.f32 %v1357, 0.2548296
    %v1366 = vadd.f32 %v1358, 0.2548296
    %v1367 = vadd.f32 %v1359, 0.2548296
    %v1368 = vadd.f32 %v1360, 0.2548296
    %v1369 = vadd.f32 %v1361, 0.2548296
    %v1370 = vmul.f32 %v1362, %v1291
    %v1371 = vmul.f32 %v1363, %v1293
    %v1372 = vmul.f32 %v1364, %v1295
    %v1373 = vmul.f32 %v1365, %v1297
    %v1374 = vmul.f32 %v1366, %v1299
    %v1375 = vmul.f32 %v1367, %v1301
    %v1376 = vmul.f32 %v1368, %v1303
    %v1377 = vmul.f32 %v1369, %v1305
    %v1378 = vsub.f32 0.0, %v1266
    %v1379 = vsub.f32 0.0, %v1267
    %v1380 = vsub.f32 0.0, %v1268
    %v1381 = vsub.f32 0.0, %v1269
    %v1382 = vsub.f32 0.0, %v1270
    %v1383 = vsub.f32 0.0, %v1271
    %v1384 = vsub.f32 0.0, %v1272
    %v1385 = vsub.f32 0.0, %v1273
    %v1386 = vmul.f32 %v1378, %v1266
    %v1387 = vmul.f32 %v1379, %v1267
    %v1388 = vmul.f32 %v1380, %v1268
    %v1389 = vmul.f32 %v1381, %v1269
    %v1390 = vmul.f32 %v1382, %v1270
    %v1391 = vmul.f32 %v1383, %v1271
    %v1392 = vmul.f32 %v1384, %v1272
    %v1393 = vmul.f32 %v1385, %v1273
    %v1394 = vmul.f32 %v1386, 1.442695
    %v1395 = vpow.pop %v1394
    %v1396 = vmul.f32 %v1387, 1.442695
    %v1397 = vpow.pop %v1396
    %v1398 = vmul.f32 %v1388, 1.442695
    %v1399 = vpow.pop %v1398
    %v1400 = vmul.f32 %v1389, 1.442695
    %v1401 = vpow.pop %v1400
    %v1402 = vmul.f32 %v1390, 1.442695
    %v1403 = vpow.pop %v1402
    %v1404 = vmul.f32 %v1391, 1.442695
    %v1405 = vpow.pop %v1404
    %v1406 = vmul.f32 %v1392, 1.442695
    %v1407 = vpow.pop %v1406
    %v1408 = vmul.f32 %v1393, 1.442695
    %v1409 = vpow.pop %v1408
    %v1410 = vmul.f32 %v1370, %v1395
    %v1411 = vmul.f32 %v1371, %v1397
    %v1412 = vmul.f32 %v1372, %v1399
    %v1413 = vmul.f32 %v1373, %v1401
    %v1414 = vmul.f32 %v1374, %v1403
    %v1415 = vmul.f32 %v1375, %v1405
    %v1416 = vmul.f32 %v1376, %v1407
    %v1417 = vmul.f32 %v1377, %v1409
    %v1418 = vsub.f32 1.0, %v1410
    %v1419 = vsub.f32 1.0, %v1411
    %v1420 = vsub.f32 1.0, %v1412
    %v1421 = vsub.f32 1.0, %v1413
    %v1422 = vsub.f32 1.0, %v1414
    %v1423 = vsub.f32 1.0, %v1415
    %v1424 = vsub.f32 1.0, %v1416
    %v1425 = vsub.f32 1.0, %v1417
    %v1426 = vmul.f32 %v1258, %v1418
    %v1427 = vmul.f32 %v1259, %v1419
    %v1428 = vmul.f32 %v1260, %v1420
    %v1429 = vmul.f32 %v1261, %v1421
    %v1430 = vmul.f32 %v1262, %v1422
    %v1431 = vmul.f32 %v1263, %v1423
    %v1432 = vmul.f32 %v1264, %v1424
    %v1433 = vmul.f32 %v1265, %v1425
    %v1434 = vadd.f32 %v1426, 1.0
    %v1435 = vadd.f32 %v1427, 1.0
    %v1436 = vadd.f32 %v1428, 1.0
    %v1437 = vadd.f32 %v1429, 1.0
    %v1438 = vadd.f32 %v1430, 1.0
    %v1439 = vadd.f32 %v1431, 1.0
    %v1440 = vadd.f32 %v1432, 1.0
    %v1441 = vadd.f32 %v1433, 1.0
    %v1442 = vmul.f32 %v1234, %v1434
    %v1443 = vmul.f32 %v1235, %v1435
    %v1444 = vmul.f32 %v1236, %v1436
    %v1445 = vmul.f32 %v1237, %v1437
    %v1446 = vmul.f32 %v1238, %v1438
    %v1447 = vmul.f32 %v1239, %v1439
    %v1448 = vmul.f32 %v1240, %v1440
    %v1449 = vmul.f32 %v1241, %v1441
    %v1450 = vld [vmem:[%s12] sm:$0xff]
    %v1451 = vld [vmem:[%s12 + $0x8] sm:$0xff]
    %v1452 = vld [vmem:[%s12 + $0x10] sm:$0xff]
    %v1453 = vld [vmem:[%s12 + $0x18] sm:$0xff]
    %v1454 = vld [vmem:[%s12 + $0x20] sm:$0xff]
    %v1455 = vld [vmem:[%s12 + $0x28] sm:$0xff]
    %v1456 = vld [vmem:[%s12 + $0x30] sm:$0xff]
    %v1457 = vld [vmem:[%s12 + $0x38] sm:$0xff]
    %v1458 = vld [vmem:[%s12 + $0x40] sm:$0xff]
    %v1459 = vld [vmem:[%s12 + $0x48] sm:$0xff]
    %v1460 = vld [vmem:[%s12 + $0x50] sm:$0xff]
    %v1461 = vld [vmem:[%s12 + $0x58] sm:$0xff]
    %v1462 = vld [vmem:[%s12 + $0x60] sm:$0xff]
    %v1463 = vld [vmem:[%s12 + $0x68] sm:$0xff]
    %v1464 = vld [vmem:[%s12 + $0x70] sm:$0xff]
    %v1465 = vld [vmem:[%s12 + $0x78] sm:$0xff]
    %v1466 = vld [vmem:[%s12 + $0x80] sm:$0xff]
    %v1467 = vld [vmem:[%s12 + $0x88] sm:$0xff]
    %v1468 = vld [vmem:[%s12 + $0x90] sm:$0xff]
    %v1469 = vld [vmem:[%s12 + $0x98] sm:$0xff]
    %v1470 = vld [vmem:[%s12 + $0xa0] sm:$0xff]
    %v1471 = vld [vmem:[%s12 + $0xa8] sm:$0xff]
    %v1472 = vld [vmem:[%s12 + $0xb0] sm:$0xff]
    %v1473 = vld [vmem:[%s12 + $0xb8] sm:$0xff]
    %v1474 = vld [vmem:[%s12 + $0xc0] sm:$0xff]
    %v1475 = vld [vmem:[%s12 + $0xc8] sm:$0xff]
    %v1476 = vld [vmem:[%s12 + $0xd0] sm:$0xff]
    %v1477 = vld [vmem:[%s12 + $0xd8] sm:$0xff]
    %v1478 = vld [vmem:[%s12 + $0xe0] sm:$0xff]
    %v1479 = vld [vmem:[%s12 + $0xe8] sm:$0xff]
    %v1480 = vld [vmem:[%s12 + $0xf0] sm:$0xff]
    %v1481 = vld [vmem:[%s12 + $0xf8] sm:$0xff]
    %v1482 = vld [vmem:[%s12 + $0x100] sm:$0xff]
    %v1483 = vld [vmem:[%s12 + $0x108] sm:$0xff]
    %v1484 = vld [vmem:[%s12 + $0x110] sm:$0xff]
    %v1485 = vld [vmem:[%s12 + $0x118] sm:$0xff]
    %v1486 = vld [vmem:[%s12 + $0x120] sm:$0xff]
    %v1487 = vld [vmem:[%s12 + $0x128] sm:$0xff]
    %v1488 = vld [vmem:[%s12 + $0x130] sm:$0xff]
    %v1489 = vld [vmem:[%s12 + $0x138] sm:$0xff]
    %v1490 = vld [vmem:[%s12 + $0x140] sm:$0xff]
    %v1491 = vld [vmem:[%s12 + $0x148] sm:$0xff]
    %v1492 = vld [vmem:[%s12 + $0x150] sm:$0xff]
    %v1493 = vld [vmem:[%s12 + $0x158] sm:$0xff]
    %v1494 = vld [vmem:[%s12 + $0x160] sm:$0xff]
    %v1495 = vld [vmem:[%s12 + $0x168] sm:$0xff]
    %v1496 = vld [vmem:[%s12 + $0x170] sm:$0xff]
    %v1497 = vld [vmem:[%s12 + $0x178] sm:$0xff]
    %v1498 = vld [vmem:[%s12 + $0x180] sm:$0xff]
    %v1499 = vld [vmem:[%s12 + $0x188] sm:$0xff]
    %v1500 = vld [vmem:[%s12 + $0x190] sm:$0xff]
    %v1501 = vld [vmem:[%s12 + $0x198] sm:$0xff]
    %v1502 = vld [vmem:[%s12 + $0x1a0] sm:$0xff]
    %v1503 = vld [vmem:[%s12 + $0x1a8] sm:$0xff]
    %v1504 = vld [vmem:[%s12 + $0x1b0] sm:$0xff]
    %v1505 = vld [vmem:[%s12 + $0x1b8] sm:$0xff]
    %v1506 = vld [vmem:[%s12 + $0x1c0] sm:$0xff]
    %v1507 = vld [vmem:[%s12 + $0x1c8] sm:$0xff]
    %v1508 = vld [vmem:[%s12 + $0x1d0] sm:$0xff]
    %v1509 = vld [vmem:[%s12 + $0x1d8] sm:$0xff]
    %v1510 = vld [vmem:[%s12 + $0x1e0] sm:$0xff]
    %v1511 = vld [vmem:[%s12 + $0x1e8] sm:$0xff]
    %v1512 = vld [vmem:[%s12 + $0x1f0] sm:$0xff]
    %v1513 = vld [vmem:[%s12 + $0x1f8] sm:$0xff]
    %v1514 = vld [vmem:[%s13] sm:$0x1]
    %v1516 = vlaneseq
    %v1517 = vshrl.u32 %v1516, 7
    %v1518 = vsub.s32 0, %v1517
    %v1519 = vrot.slane %v1514, %v1518
    %1521 = vmatprep.subr.mxu0 0.0
    %1522 = vmatpush1.msra.mxu0 %v1450
    %1523 = vmatprep.subr.mxu0 0.0
    %1524 = vmatpush1.msra.mxu0 %v1451
    %1525 = vmatprep.subr.mxu0 0.0
    %1526 = vmatpush1.msra.mxu0 %v1452
    %1527 = vmatprep.subr.mxu0 0.0
    %1528 = vmatpush1.msra.mxu0 %v1453
    %1529 = vmatprep.subr.mxu0 0.0
    %1530 = vmatpush1.msra.mxu0 %v1454
    %1531 = vmatprep.subr.mxu0 0.0
    %1532 = vmatpush1.msra.mxu0 %v1455
    %1533 = vmatprep.subr.mxu0 0.0
    %1534 = vmatpush1.msra.mxu0 %v1456
    %1535 = vmatprep.subr.mxu0 0.0
    %1536 = vmatpush1.msra.mxu0 %v1457
    %1537 = vmatprep.subr.mxu0 0.0
    %1538 = vmatpush1.msra.mxu0 %v1458
    %1539 = vmatprep.subr.mxu0 0.0
    %1540 = vmatpush1.msra.mxu0 %v1459
    %1541 = vmatprep.subr.mxu0 0.0
    %1542 = vmatpush1.msra.mxu0 %v1460
    %1543 = vmatprep.subr.mxu0 0.0
    %1544 = vmatpush1.msra.mxu0 %v1461
    %1545 = vmatprep.subr.mxu0 0.0
    %1546 = vmatpush1.msra.mxu0 %v1462
    %1547 = vmatprep.subr.mxu0 0.0
    %1548 = vmatpush1.msra.mxu0 %v1463
    %1549 = vmatprep.subr.mxu0 0.0
    %1550 = vmatpush1.msra.mxu0 %v1464
    %1551 = vmatprep.subr.mxu0 0.0
    %1552 = vmatpush1.msra.mxu0 %v1465
    %1553 = vmatprep.subr.mxu0 0.0
    %1554 = vmatpush1.msra.mxu0 %v1466
    %1555 = vmatprep.subr.mxu0 0.0
    %1556 = vmatpush1.msra.mxu0 %v1467
    %1557 = vmatprep.subr.mxu0 0.0
    %1558 = vmatpush1.msra.mxu0 %v1468
    %1559 = vmatprep.subr.mxu0 0.0
    %1560 = vmatpush1.msra.mxu0 %v1469
    %1561 = vmatprep.subr.mxu0 0.0
    %1562 = vmatpush1.msra.mxu0 %v1470
    %1563 = vmatprep.subr.mxu0 0.0
    %1564 = vmatpush1.msra.mxu0 %v1471
    %1565 = vmatprep.subr.mxu0 0.0
    %1566 = vmatpush1.msra.mxu0 %v1472
    %1567 = vmatprep.subr.mxu0 0.0
    %1568 = vmatpush1.msra.mxu0 %v1473
    %1569 = vmatprep.subr.mxu0 0.0
    %1570 = vmatpush1.msra.mxu0 %v1474
    %1571 = vmatprep.subr.mxu0 0.0
    %1572 = vmatpush1.msra.mxu0 %v1475
    %1573 = vmatprep.subr.mxu0 0.0
    %1574 = vmatpush1.msra.mxu0 %v1476
    %1575 = vmatprep.subr.mxu0 0.0
    %1576 = vmatpush1.msra.mxu0 %v1477
    %1577 = vmatprep.subr.mxu0 0.0
    %1578 = vmatpush1.msra.mxu0 %v1478
    %1579 = vmatprep.subr.mxu0 0.0
    %1580 = vmatpush1.msra.mxu0 %v1479
    %1581 = vmatprep.subr.mxu0 0.0
    %1582 = vmatpush1.msra.mxu0 %v1480
    %1583 = vmatprep.subr.mxu0 0.0
    %1584 = vmatpush1.msra.mxu0 %v1481
    %1585 = vmatprep.mubr.f32.mxu0 %v1443
    %1586 = vmatmul.mubr.f32.gmra.mrb[0].mxu0 %v1442
    %v1587 = vpop.f32.mrb[0].mxu0
    %v1588 = vadd.f32 %v1519, %v1587
    %v1589 = vpop.f32.mrb[0].mxu0
    %1590 = vmatprep.mubr.f32.mxu0 %v1447
    %1591 = vmatmul.mubr.f32.gmra.mrb[0].mxu0 %v1446
    %v1592 = vpop.f32.mrb[0].mxu0
    %v1593 = vadd.f32 %v1519, %v1592
    %v1594 = vpop.f32.mrb[0].mxu0
    %1595 = vdwg.mxu0
    %1596 = vmatprep.subr.mxu0 0.0
    %1597 = vmatpush1.msra.mxu0 %v1482
    %1598 = vmatprep.subr.mxu0 0.0
    %1599 = vmatpush1.msra.mxu0 %v1483
    %1600 = vmatprep.subr.mxu0 0.0
    %1601 = vmatpush1.msra.mxu0 %v1484
    %1602 = vmatprep.subr.mxu0 0.0
    %1603 = vmatpush1.msra.mxu0 %v1485
    %1604 = vmatprep.subr.mxu0 0.0
    %1605 = vmatpush1.msra.mxu0 %v1486
    %1606 = vmatprep.subr.mxu0 0.0
    %1607 = vmatpush1.msra.mxu0 %v1487
    %1608 = vmatprep.subr.mxu0 0.0
    %1609 = vmatpush1.msra.mxu0 %v1488
    %1610 = vmatprep.subr.mxu0 0.0
    %1611 = vmatpush1.msra.mxu0 %v1489
    %1612 = vmatprep.subr.mxu0 0.0
    %1613 = vmatpush1.msra.mxu0 %v1490
    %1614 = vmatprep.subr.mxu0 0.0
    %1615 = vmatpush1.msra.mxu0 %v1491
    %1616 = vmatprep.subr.mxu0 0.0
    %1617 = vmatpush1.msra.mxu0 %v1492
    %1618 = vmatprep.subr.mxu0 0.0
    %1619 = vmatpush1.msra.mxu0 %v1493
    %1620 = vmatprep.subr.mxu0 0.0
    %1621 = vmatpush1.msra.mxu0 %v1494
    %1622 = vmatprep.subr.mxu0 0.0
    %1623 = vmatpush1.msra.mxu0 %v1495
    %1624 = vmatprep.subr.mxu0 0.0
    %1625 = vmatpush1.msra.mxu0 %v1496
    %1626 = vmatprep.subr.mxu0 0.0
    %1627 = vmatpush1.msra.mxu0 %v1497
    %1628 = vmatprep.subr.mxu0 0.0
    %1629 = vmatpush1.msra.mxu0 %v1498
    %1630 = vmatprep.subr.mxu0 0.0
    %1631 = vmatpush1.msra.mxu0 %v1499
    %1632 = vmatprep.subr.mxu0 0.0
    %1633 = vmatpush1.msra.mxu0 %v1500
    %1634 = vmatprep.subr.mxu0 0.0
    %1635 = vmatpush1.msra.mxu0 %v1501
    %1636 = vmatprep.subr.mxu0 0.0
    %1637 = vmatpush1.msra.mxu0 %v1502
    %1638 = vmatprep.subr.mxu0 0.0
    %1639 = vmatpush1.msra.mxu0 %v1503
    %1640 = vmatprep.subr.mxu0 0.0
    %1641 = vmatpush1.msra.mxu0 %v1504
    %1642 = vmatprep.subr.mxu0 0.0
    %1643 = vmatpush1.msra.mxu0 %v1505
    %1644 = vmatprep.subr.mxu0 0.0
    %1645 = vmatpush1.msra.mxu0 %v1506
    %1646 = vmatprep.subr.mxu0 0.0
    %1647 = vmatpush1.msra.mxu0 %v1507
    %1648 = vmatprep.subr.mxu0 0.0
    %1649 = vmatpush1.msra.mxu0 %v1508
    %1650 = vmatprep.subr.mxu0 0.0
    %1651 = vmatpush1.msra.mxu0 %v1509
    %1652 = vmatprep.subr.mxu0 0.0
    %1653 = vmatpush1.msra.mxu0 %v1510
    %1654 = vmatprep.subr.mxu0 0.0
    %1655 = vmatpush1.msra.mxu0 %v1511
    %1656 = vmatprep.subr.mxu0 0.0
    %1657 = vmatpush1.msra.mxu0 %v1512
    %1658 = vmatprep.subr.mxu0 0.0
    %1659 = vmatpush1.msra.mxu0 %v1513
    %1660 = vmatprep.mubr.f32.mxu0 %v1445
    %1661 = vmatmul.mubr.f32.gmra.mrb[0].mxu0 %v1444
    %v1662 = vpop.f32.mrb[0].mxu0
    %v1663 = vadd.f32 %v1588, %v1662
    %v1664 = vpop.f32.mrb[0].mxu0
    %1665 = vmatprep.mubr.f32.mxu0 %v1449
    %1666 = vmatmul.mubr.f32.gmra.mrb[0].mxu0 %v1448
    %v1667 = vpop.f32.mrb[0].mxu0
    %v1668 = vadd.f32 %v1593, %v1667
    %v1669 = vpop.f32.mrb[0].mxu0
    %1670 = vdwg.mxu0
    %v1671 = vadd.f32 %v1663, %v1034
    %v1672 = vadd.f32 %v1668, %v1035
    %v1673 = vld [vmem:[%s14] sm:$0x1]
    %v1674 = vld [vmem:[%s15] sm:$0x1]
    %v1675 = vsel %vm70, %v1671, 0.0
    %1676 = vadd.xlane.f32.xlu0 %v1675
    %v1677 = vpop.xlane.xlu0 %1676
    %v1678 = vsel %vm70, %v1672, 0.0
    %1679 = vadd.xlane.f32.xlu0 %v1678
    %v1680 = vpop.xlane.xlu0 %1679
    %v1681 = vmul.f32 %v1677, %v77
    %v1682 = vmul.f32 %v1680, %v77
    %v1683 = vsub.f32 %v1671, %v1681
    %v1684 = vsub.f32 %v1672, %v1682
    %v1685 = vmul.f32 %v1683, %v1683
    %v1686 = vmul.f32 %v1684, %v1684
    %v1687 = vsel %vm70, %v1685, 0.0
    %1688 = vadd.xlane.f32.xlu0 %v1687
    %v1689 = vpop.xlane.xlu0 %1688
    %v1690 = vsel %vm70, %v1686, 0.0
    %1691 = vadd.xlane.f32.xlu0 %v1690
    %v1692 = vpop.xlane.xlu0 %1691
    %v1693 = vmul.f32 %v1689, %v77
    %v1694 = vmul.f32 %v1692, %v77
    %v1695 = vadd.f32 %v1693, 1e-12
    %v1696 = vadd.f32 %v1694, 1e-12
    %v1697 = vrsqrt.pop %v1695
    %v1698 = vrsqrt.pop %v1696
    %v1699 = vmul.f32 %v1683, %v1697
    %v1700 = vmul.f32 %v1684, %v1698
    %v1702 = vlaneseq
    %v1703 = vshrl.u32 %v1702, 7
    %v1704 = vsub.s32 0, %v1703
    %v1705 = vrot.slane %v1673, %v1704
    %v1707 = vmul.f32 %v1699, %v1705
    %v1708 = vmul.f32 %v1700, %v1705
    %v1710 = vlaneseq
    %v1711 = vshrl.u32 %v1710, 7
    %v1712 = vsub.s32 0, %v1711
    %v1713 = vrot.slane %v1674, %v1712
    %v1715 = vadd.f32 %v1707, %v1713
    %v1716 = vadd.f32 %v1708, %v1713
    %s1717 = scalar_lea.vmem %s4, 32
    %v1718 = vld [vmem:[%s1717] sm:$0xff]
    %v1719 = vld [vmem:[%s1717 + $0x8] sm:$0xff]
    %v1720 = vld [vmem:[%s1717 + $0x10] sm:$0xff]
    %v1721 = vld [vmem:[%s1717 + $0x18] sm:$0xff]
    %s1722 = scalar_lea.vmem %s5, 1
    %v1723 = vld [vmem:[%s1722] sm:$0x1]
    %v1725 = vlaneseq
    %v1726 = vshrl.u32 %v1725, 7
    %v1727 = vsub.s32 0, %v1726
    %v1728 = vrot.slane %v1723, %v1727
    %v1731 = vsel %vm70, %v1715, 0
    %v1734 = vsel %vm70, %v1716, 0
    %1736 = vmatprep.subr.mxu0 0.0
    %1737 = vmatpush1.msra.mxu0 %v1718
    %1738 = vmatprep.subr.mxu0 0.0
    %1739 = vmatpush1.msra.mxu0 %v1719
    %1740 = vmatprep.subr.mxu0 0.0
    %1741 = vmatpush1.msra.mxu0 %v1720
    %1742 = vmatprep.subr.mxu0 0.0
    %1743 = vmatpush1.msra.mxu0 %v1721
    %1744 = vmatprep.subr.mxu0 0.0
    %1745 = vmatpush1.msra.mxu0 0.0
    %1746 = vmatprep.subr.mxu0 0.0
    %1747 = vmatpush1.msra.mxu0 0.0
    %1748 = vmatprep.subr.mxu0 0.0
    %1749 = vmatpush1.msra.mxu0 0.0
    %1750 = vmatprep.subr.mxu0 0.0
    %1751 = vmatpush1.msra.mxu0 0.0
    %1752 = vmatprep.subr.mxu0 0.0
    %1753 = vmatpush1.msra.mxu0 0.0
    %1754 = vmatprep.subr.mxu0 0.0
    %1755 = vmatpush1.msra.mxu0 0.0
    %1756 = vmatprep.subr.mxu0 0.0
    %1757 = vmatpush1.msra.mxu0 0.0
    %1758 = vmatprep.subr.mxu0 0.0
    %1759 = vmatpush1.msra.mxu0 0.0
    %1760 = vmatprep.subr.mxu0 0.0
    %1761 = vmatpush1.msra.mxu0 0.0
    %1762 = vmatprep.subr.mxu0 0.0
    %1763 = vmatpush1.msra.mxu0 0.0
    %1764 = vmatprep.subr.mxu0 0.0
    %1765 = vmatpush1.msra.mxu0 0.0
    %1766 = vmatprep.subr.mxu0 0.0
    %1767 = vmatpush1.msra.mxu0 0.0
    %1768 = vmatprep.subr.mxu0 0.0
    %1769 = vmatpush1.msra.mxu0 0.0
    %1770 = vmatprep.subr.mxu0 0.0
    %1771 = vmatpush1.msra.mxu0 0.0
    %1772 = vmatprep.subr.mxu0 0.0
    %1773 = vmatpush1.msra.mxu0 0.0
    %1774 = vmatprep.subr.mxu0 0.0
    %1775 = vmatpush1.msra.mxu0 0.0
    %1776 = vmatprep.subr.mxu0 0.0
    %1777 = vmatpush1.msra.mxu0 0.0
    %1778 = vmatprep.subr.mxu0 0.0
    %1779 = vmatpush1.msra.mxu0 0.0
    %1780 = vmatprep.subr.mxu0 0.0
    %1781 = vmatpush1.msra.mxu0 0.0
    %1782 = vmatprep.subr.mxu0 0.0
    %1783 = vmatpush1.msra.mxu0 0.0
    %1784 = vmatprep.subr.mxu0 0.0
    %1785 = vmatpush1.msra.mxu0 0.0
    %1786 = vmatprep.subr.mxu0 0.0
    %1787 = vmatpush1.msra.mxu0 0.0
    %1788 = vmatprep.subr.mxu0 0.0
    %1789 = vmatpush1.msra.mxu0 0.0
    %1790 = vmatprep.subr.mxu0 0.0
    %1791 = vmatpush1.msra.mxu0 0.0
    %1792 = vmatprep.subr.mxu0 0.0
    %1793 = vmatpush1.msra.mxu0 0.0
    %1794 = vmatprep.subr.mxu0 0.0
    %1795 = vmatpush1.msra.mxu0 0.0
    %1796 = vmatprep.subr.mxu0 0.0
    %1797 = vmatpush1.msra.mxu0 0.0
    %1798 = vmatprep.subr.mxu0 0.0
    %1799 = vmatpush1.msra.mxu0 0.0
    %1800 = vmatprep.mubr.f32.mxu0 0.0
    %1801 = vmatmul.mubr.f32.gmra.mrb[0].mxu0 %v1731
    %v1802 = vpop.f32.mrb[0].mxu0
    %v1803 = vadd.f32 %v1728, %v1802
    %v1804 = vpop.f32.mrb[0].mxu0
    %1805 = vmatprep.mubr.f32.mxu0 0.0
    %1806 = vmatmul.mubr.f32.gmra.mrb[0].mxu0 %v1734
    %v1807 = vpop.f32.mrb[0].mxu0
    %v1808 = vadd.f32 %v1728, %v1807
    %v1809 = vpop.f32.mrb[0].mxu0
    %1810 = vdwg.mxu0
    %1812 = vrot.lane.b32.xlu0 %v1803, 96
    %v1813 = vpop.permute.xlu0 %1812
    %v1814 = vsel %vm211, %v1803, 0
    %v1816 = vsel %vm211, %v1813, 0
    %1818 = vmatprep.subr.mxu0 0.0
    %1819 = vmatpush1.xpose.msra.mxu0 %v1816
    %1820 = vmatprep.subr.mxu0 0.0
    %1821 = vmatpush1.xpose.msra.mxu0 0.0
    %1822 = vmatprep.subr.mxu0 0.0
    %1823 = vmatpush1.xpose.msra.mxu0 0.0
    %1824 = vmatprep.subr.mxu0 0.0
    %1825 = vmatpush1.xpose.msra.mxu0 0.0
    %1826 = vmatprep.subr.mxu0 0.0
    %1827 = vmatpush1.xpose.msra.mxu0 0.0
    %1828 = vmatprep.subr.mxu0 0.0
    %1829 = vmatpush1.xpose.msra.mxu0 0.0
    %1830 = vmatprep.subr.mxu0 0.0
    %1831 = vmatpush1.xpose.msra.mxu0 0.0
    %1832 = vmatprep.subr.mxu0 0.0
    %1833 = vmatpush1.xpose.msra.mxu0 0.0
    %1834 = vmatprep.subr.mxu0 0.0
    %1835 = vmatpush1.xpose.msra.mxu0 0.0
    %1836 = vmatprep.subr.mxu0 0.0
    %1837 = vmatpush1.xpose.msra.mxu0 0.0
    %1838 = vmatprep.subr.mxu0 0.0
    %1839 = vmatpush1.xpose.msra.mxu0 0.0
    %1840 = vmatprep.subr.mxu0 0.0
    %1841 = vmatpush1.xpose.msra.mxu0 0.0
    %1842 = vmatprep.subr.mxu0 0.0
    %1843 = vmatpush1.xpose.msra.mxu0 0.0
    %1844 = vmatprep.subr.mxu0 0.0
    %1845 = vmatpush1.xpose.msra.mxu0 0.0
    %1846 = vmatprep.subr.mxu0 0.0
    %1847 = vmatpush1.xpose.msra.mxu0 0.0
    %1848 = vmatprep.subr.mxu0 0.0
    %1849 = vmatpush1.xpose.msra.mxu0 0.0
    %1850 = vmatprep.subr.mxu0 0.0
    %1851 = vmatpush1.xpose.msra.mxu0 0.0
    %1852 = vmatprep.subr.mxu0 0.0
    %1853 = vmatpush1.xpose.msra.mxu0 0.0
    %1854 = vmatprep.subr.mxu0 0.0
    %1855 = vmatpush1.xpose.msra.mxu0 0.0
    %1856 = vmatprep.subr.mxu0 0.0
    %1857 = vmatpush1.xpose.msra.mxu0 0.0
    %1858 = vmatprep.subr.mxu0 0.0
    %1859 = vmatpush1.xpose.msra.mxu0 0.0
    %1860 = vmatprep.subr.mxu0 0.0
    %1861 = vmatpush1.xpose.msra.mxu0 0.0
    %1862 = vmatprep.subr.mxu0 0.0
    %1863 = vmatpush1.xpose.msra.mxu0 0.0
    %1864 = vmatprep.subr.mxu0 0.0
    %1865 = vmatpush1.xpose.msra.mxu0 0.0
    %1866 = vmatprep.subr.mxu0 0.0
    %1867 = vmatpush1.xpose.msra.mxu0 0.0
    %1868 = vmatprep.subr.mxu0 0.0
    %1869 = vmatpush1.xpose.msra.mxu0 0.0
    %1870 = vmatprep.subr.mxu0 0.0
    %1871 = vmatpush1.xpose.msra.mxu0 0.0
    %1872 = vmatprep.subr.mxu0 0.0
    %1873 = vmatpush1.xpose.msra.mxu0 0.0
    %1874 = vmatprep.subr.mxu0 0.0
    %1875 = vmatpush1.xpose.msra.mxu0 0.0
    %1876 = vmatprep.subr.mxu0 0.0
    %1877 = vmatpush1.xpose.msra.mxu0 0.0
    %1878 = vmatprep.subr.mxu0 0.0
    %1879 = vmatpush1.xpose.msra.mxu0 0.0
    %1880 = vmatprep.subr.mxu0 0.0
    %1881 = vmatpush1.xpose.msra.mxu0 0.0
    %1882 = vmatprep.mubr.f32.mxu0 0.0
    %1883 = vmatmul.mubr.f32.gmra.mrb[0].mxu0 %v1814
    %v1884 = vpop.f32.mrb[0].mxu0
    %v1885 = vadd.f32 0.0, %v1884
    %v1886 = vpop.f32.mrb[0].mxu0
    %1887 = vdwg.mxu0
    %v1888 = vmul.f32 %v1885, 0.25
    %v1889 = vadd.f32 %v1888, %v291
    %v1890 = vsel %vm294, %v1889, -inf
    %1891 = vmax.xlane.f32.xlu0 %v1890
    %v1892 = vpop.xlane.xlu0 %1891
    %v1893 = vsub.f32 %v1889, %v1892
    %v1894 = vmul.f32 %v1893, 1.442695
    %v1895 = vpow.pop %v1894
    %v1896 = vsel %vm294, %v1895, 0.0
    %1897 = vadd.xlane.f32.xlu0 %v1896
    %v1898 = vpop.xlane.xlu0 %1897
    %v1899 = vrcp.pop %v1898
    %v1900 = vmul.f32 %v1895, %v1899
    %1901 = vrot.lane.b32.xlu0 %v1803, 64
    %v1902 = vpop.permute.xlu0 %1901
    %v1905 = vsel %vm294, %v1900, 0
    %1907 = vmatprep.subr.mxu0 0.0
    %1908 = vmatpush1.msra.mxu0 %v1902
    %1909 = vmatprep.subr.mxu0 0.0
    %1910 = vmatpush1.msra.mxu0 0.0
    %1911 = vmatprep.subr.mxu0 0.0
    %1912 = vmatpush1.msra.mxu0 0.0
    %1913 = vmatprep.subr.mxu0 0.0
    %1914 = vmatpush1.msra.mxu0 0.0
    %1915 = vmatprep.subr.mxu0 0.0
    %1916 = vmatpush1.msra.mxu0 0.0
    %1917 = vmatprep.subr.mxu0 0.0
    %1918 = vmatpush1.msra.mxu0 0.0
    %1919 = vmatprep.subr.mxu0 0.0
    %1920 = vmatpush1.msra.mxu0 0.0
    %1921 = vmatprep.subr.mxu0 0.0
    %1922 = vmatpush1.msra.mxu0 0.0
    %1923 = vmatprep.subr.mxu0 0.0
    %1924 = vmatpush1.msra.mxu0 0.0
    %1925 = vmatprep.subr.mxu0 0.0
    %1926 = vmatpush1.msra.mxu0 0.0
    %1927 = vmatprep.subr.mxu0 0.0
    %1928 = vmatpush1.msra.mxu0 0.0
    %1929 = vmatprep.subr.mxu0 0.0
    %1930 = vmatpush1.msra.mxu0 0.0
    %1931 = vmatprep.subr.mxu0 0.0
    %1932 = vmatpush1.msra.mxu0 0.0
    %1933 = vmatprep.subr.mxu0 0.0
    %1934 = vmatpush1.msra.mxu0 0.0
    %1935 = vmatprep.subr.mxu0 0.0
    %1936 = vmatpush1.msra.mxu0 0.0
    %1937 = vmatprep.subr.mxu0 0.0
    %1938 = vmatpush1.msra.mxu0 0.0
    %1939 = vmatprep.subr.mxu0 0.0
    %1940 = vmatpush1.msra.mxu0 0.0
    %1941 = vmatprep.subr.mxu0 0.0
    %1942 = vmatpush1.msra.mxu0 0.0
    %1943 = vmatprep.subr.mxu0 0.0
    %1944 = vmatpush1.msra.mxu0 0.0
    %1945 = vmatprep.subr.mxu0 0.0
    %1946 = vmatpush1.msra.mxu0 0.0
    %1947 = vmatprep.subr.mxu0 0.0
    %1948 = vmatpush1.msra.mxu0 0.0
    %1949 = vmatprep.subr.mxu0 0.0
    %1950 = vmatpush1.msra.mxu0 0.0
    %1951 = vmatprep.subr.mxu0 0.0
    %1952 = vmatpush1.msra.mxu0 0.0
    %1953 = vmatprep.subr.mxu0 0.0
    %1954 = vmatpush1.msra.mxu0 0.0
    %1955 = vmatprep.subr.mxu0 0.0
    %1956 = vmatpush1.msra.mxu0 0.0
    %1957 = vmatprep.subr.mxu0 0.0
    %1958 = vmatpush1.msra.mxu0 0.0
    %1959 = vmatprep.subr.mxu0 0.0
    %1960 = vmatpush1.msra.mxu0 0.0
    %1961 = vmatprep.subr.mxu0 0.0
    %1962 = vmatpush1.msra.mxu0 0.0
    %1963 = vmatprep.subr.mxu0 0.0
    %1964 = vmatpush1.msra.mxu0 0.0
    %1965 = vmatprep.subr.mxu0 0.0
    %1966 = vmatpush1.msra.mxu0 0.0
    %1967 = vmatprep.subr.mxu0 0.0
    %1968 = vmatpush1.msra.mxu0 0.0
    %1969 = vmatprep.subr.mxu0 0.0
    %1970 = vmatpush1.msra.mxu0 0.0
    %1971 = vmatprep.mubr.f32.mxu0 0.0
    %1972 = vmatmul.mubr.f32.gmra.mrb[0].mxu0 %v1905
    %v1973 = vpop.f32.mrb[0].mxu0
    %v1974 = vadd.f32 0.0, %v1973
    %v1975 = vpop.f32.mrb[0].mxu0
    %1976 = vdwg.mxu0
    %1977 = vrot.lane.b32.xlu0 %v1803, 112
    %v1978 = vpop.permute.xlu0 %1977
    %1979 = vrot.lane.b32.xlu0 %v1803, 80
    %v1980 = vpop.permute.xlu0 %1979
    %v1981 = vsel %vm211, %v1978, 0
    %v1983 = vsel %vm211, %v1980, 0
    %1985 = vmatprep.subr.mxu0 0.0
    %1986 = vmatpush1.xpose.msra.mxu0 %v1983
    %1987 = vmatprep.subr.mxu0 0.0
    %1988 = vmatpush1.xpose.msra.mxu0 0.0
    %1989 = vmatprep.subr.mxu0 0.0
    %1990 = vmatpush1.xpose.msra.mxu0 0.0
    %1991 = vmatprep.subr.mxu0 0.0
    %1992 = vmatpush1.xpose.msra.mxu0 0.0
    %1993 = vmatprep.subr.mxu0 0.0
    %1994 = vmatpush1.xpose.msra.mxu0 0.0
    %1995 = vmatprep.subr.mxu0 0.0
    %1996 = vmatpush1.xpose.msra.mxu0 0.0
    %1997 = vmatprep.subr.mxu0 0.0
    %1998 = vmatpush1.xpose.msra.mxu0 0.0
    %1999 = vmatprep.subr.mxu0 0.0
    %2000 = vmatpush1.xpose.msra.mxu0 0.0
    %2001 = vmatprep.subr.mxu0 0.0
    %2002 = vmatpush1.xpose.msra.mxu0 0.0
    %2003 = vmatprep.subr.mxu0 0.0
    %2004 = vmatpush1.xpose.msra.mxu0 0.0
    %2005 = vmatprep.subr.mxu0 0.0
    %2006 = vmatpush1.xpose.msra.mxu0 0.0
    %2007 = vmatprep.subr.mxu0 0.0
    %2008 = vmatpush1.xpose.msra.mxu0 0.0
    %2009 = vmatprep.subr.mxu0 0.0
    %2010 = vmatpush1.xpose.msra.mxu0 0.0
    %2011 = vmatprep.subr.mxu0 0.0
    %2012 = vmatpush1.xpose.msra.mxu0 0.0
    %2013 = vmatprep.subr.mxu0 0.0
    %2014 = vmatpush1.xpose.msra.mxu0 0.0
    %2015 = vmatprep.subr.mxu0 0.0
    %2016 = vmatpush1.xpose.msra.mxu0 0.0
    %2017 = vmatprep.subr.mxu0 0.0
    %2018 = vmatpush1.xpose.msra.mxu0 0.0
    %2019 = vmatprep.subr.mxu0 0.0
    %2020 = vmatpush1.xpose.msra.mxu0 0.0
    %2021 = vmatprep.subr.mxu0 0.0
    %2022 = vmatpush1.xpose.msra.mxu0 0.0
    %2023 = vmatprep.subr.mxu0 0.0
    %2024 = vmatpush1.xpose.msra.mxu0 0.0
    %2025 = vmatprep.subr.mxu0 0.0
    %2026 = vmatpush1.xpose.msra.mxu0 0.0
    %2027 = vmatprep.subr.mxu0 0.0
    %2028 = vmatpush1.xpose.msra.mxu0 0.0
    %2029 = vmatprep.subr.mxu0 0.0
    %2030 = vmatpush1.xpose.msra.mxu0 0.0
    %2031 = vmatprep.subr.mxu0 0.0
    %2032 = vmatpush1.xpose.msra.mxu0 0.0
    %2033 = vmatprep.subr.mxu0 0.0
    %2034 = vmatpush1.xpose.msra.mxu0 0.0
    %2035 = vmatprep.subr.mxu0 0.0
    %2036 = vmatpush1.xpose.msra.mxu0 0.0
    %2037 = vmatprep.subr.mxu0 0.0
    %2038 = vmatpush1.xpose.msra.mxu0 0.0
    %2039 = vmatprep.subr.mxu0 0.0
    %2040 = vmatpush1.xpose.msra.mxu0 0.0
    %2041 = vmatprep.subr.mxu0 0.0
    %2042 = vmatpush1.xpose.msra.mxu0 0.0
    %2043 = vmatprep.subr.mxu0 0.0
    %2044 = vmatpush1.xpose.msra.mxu0 0.0
    %2045 = vmatprep.subr.mxu0 0.0
    %2046 = vmatpush1.xpose.msra.mxu0 0.0
    %2047 = vmatprep.subr.mxu0 0.0
    %2048 = vmatpush1.xpose.msra.mxu0 0.0
    %2049 = vmatprep.mubr.f32.mxu0 0.0
    %2050 = vmatmul.mubr.f32.gmra.mrb[0].mxu0 %v1981
    %v2051 = vpop.f32.mrb[0].mxu0
    %v2052 = vadd.f32 0.0, %v2051
    %v2053 = vpop.f32.mrb[0].mxu0
    %2054 = vdwg.mxu0
    %v2055 = vmul.f32 %v2052, 0.25
    %v2056 = vadd.f32 %v2055, %v291
    %v2057 = vsel %vm294, %v2056, -inf
    %2058 = vmax.xlane.f32.xlu0 %v2057
    %v2059 = vpop.xlane.xlu0 %2058
    %v2060 = vsub.f32 %v2056, %v2059
    %v2061 = vmul.f32 %v2060, 1.442695
    %v2062 = vpow.pop %v2061
    %v2063 = vsel %vm294, %v2062, 0.0
    %2064 = vadd.xlane.f32.xlu0 %v2063
    %v2065 = vpop.xlane.xlu0 %2064
    %v2066 = vrcp.pop %v2065
    %v2067 = vmul.f32 %v2062, %v2066
    %2068 = vrot.lane.b32.xlu0 %v1803, 48
    %v2069 = vpop.permute.xlu0 %2068
    %v2072 = vsel %vm294, %v2067, 0
    %2074 = vmatprep.subr.mxu0 0.0
    %2075 = vmatpush1.msra.mxu0 %v2069
    %2076 = vmatprep.subr.mxu0 0.0
    %2077 = vmatpush1.msra.mxu0 0.0
    %2078 = vmatprep.subr.mxu0 0.0
    %2079 = vmatpush1.msra.mxu0 0.0
    %2080 = vmatprep.subr.mxu0 0.0
    %2081 = vmatpush1.msra.mxu0 0.0
    %2082 = vmatprep.subr.mxu0 0.0
    %2083 = vmatpush1.msra.mxu0 0.0
    %2084 = vmatprep.subr.mxu0 0.0
    %2085 = vmatpush1.msra.mxu0 0.0
    %2086 = vmatprep.subr.mxu0 0.0
    %2087 = vmatpush1.msra.mxu0 0.0
    %2088 = vmatprep.subr.mxu0 0.0
    %2089 = vmatpush1.msra.mxu0 0.0
    %2090 = vmatprep.subr.mxu0 0.0
    %2091 = vmatpush1.msra.mxu0 0.0
    %2092 = vmatprep.subr.mxu0 0.0
    %2093 = vmatpush1.msra.mxu0 0.0
    %2094 = vmatprep.subr.mxu0 0.0
    %2095 = vmatpush1.msra.mxu0 0.0
    %2096 = vmatprep.subr.mxu0 0.0
    %2097 = vmatpush1.msra.mxu0 0.0
    %2098 = vmatprep.subr.mxu0 0.0
    %2099 = vmatpush1.msra.mxu0 0.0
    %2100 = vmatprep.subr.mxu0 0.0
    %2101 = vmatpush1.msra.mxu0 0.0
    %2102 = vmatprep.subr.mxu0 0.0
    %2103 = vmatpush1.msra.mxu0 0.0
    %2104 = vmatprep.subr.mxu0 0.0
    %2105 = vmatpush1.msra.mxu0 0.0
    %2106 = vmatprep.subr.mxu0 0.0
    %2107 = vmatpush1.msra.mxu0 0.0
    %2108 = vmatprep.subr.mxu0 0.0
    %2109 = vmatpush1.msra.mxu0 0.0
    %2110 = vmatprep.subr.mxu0 0.0
    %2111 = vmatpush1.msra.mxu0 0.0
    %2112 = vmatprep.subr.mxu0 0.0
    %2113 = vmatpush1.msra.mxu0 0.0
    %2114 = vmatprep.subr.mxu0 0.0
    %2115 = vmatpush1.msra.mxu0 0.0
    %2116 = vmatprep.subr.mxu0 0.0
    %2117 = vmatpush1.msra.mxu0 0.0
    %2118 = vmatprep.subr.mxu0 0.0
    %2119 = vmatpush1.msra.mxu0 0.0
    %2120 = vmatprep.subr.mxu0 0.0
    %2121 = vmatpush1.msra.mxu0 0.0
    %2122 = vmatprep.subr.mxu0 0.0
    %2123 = vmatpush1.msra.mxu0 0.0
    %2124 = vmatprep.subr.mxu0 0.0
    %2125 = vmatpush1.msra.mxu0 0.0
    %2126 = vmatprep.subr.mxu0 0.0
    %2127 = vmatpush1.msra.mxu0 0.0
    %2128 = vmatprep.subr.mxu0 0.0
    %2129 = vmatpush1.msra.mxu0 0.0
    %2130 = vmatprep.subr.mxu0 0.0
    %2131 = vmatpush1.msra.mxu0 0.0
    %2132 = vmatprep.subr.mxu0 0.0
    %2133 = vmatpush1.msra.mxu0 0.0
    %2134 = vmatprep.subr.mxu0 0.0
    %2135 = vmatpush1.msra.mxu0 0.0
    %2136 = vmatprep.subr.mxu0 0.0
    %2137 = vmatpush1.msra.mxu0 0.0
    %2138 = vmatprep.mubr.f32.mxu0 0.0
    %2139 = vmatmul.mubr.f32.gmra.mrb[0].mxu0 %v2072
    %v2140 = vpop.f32.mrb[0].mxu0
    %v2141 = vadd.f32 0.0, %v2140
    %v2142 = vpop.f32.mrb[0].mxu0
    %2143 = vdwg.mxu0
    %2145 = vrot.lane.b32.xlu0 %v2141, 16
    %v2146 = vpop.permute.xlu0 %2145
    %v2148 = vsel %vm211, %v1974, %v2146
    %2150 = vrot.lane.b32.xlu0 %v1808, 96
    %v2151 = vpop.permute.xlu0 %2150
    %v2152 = vsel %vm211, %v1808, 0
    %v2154 = vsel %vm211, %v2151, 0
    %2156 = vmatprep.subr.mxu0 0.0
    %2157 = vmatpush1.xpose.msra.mxu0 %v2154
    %2158 = vmatprep.subr.mxu0 0.0
    %2159 = vmatpush1.xpose.msra.mxu0 0.0
    %2160 = vmatprep.subr.mxu0 0.0
    %2161 = vmatpush1.xpose.msra.mxu0 0.0
    %2162 = vmatprep.subr.mxu0 0.0
    %2163 = vmatpush1.xpose.msra.mxu0 0.0
    %2164 = vmatprep.subr.mxu0 0.0
    %2165 = vmatpush1.xpose.msra.mxu0 0.0
    %2166 = vmatprep.subr.mxu0 0.0
    %2167 = vmatpush1.xpose.msra.mxu0 0.0
    %2168 = vmatprep.subr.mxu0 0.0
    %2169 = vmatpush1.xpose.msra.mxu0 0.0
    %2170 = vmatprep.subr.mxu0 0.0
    %2171 = vmatpush1.xpose.msra.mxu0 0.0
    %2172 = vmatprep.subr.mxu0 0.0
    %2173 = vmatpush1.xpose.msra.mxu0 0.0
    %2174 = vmatprep.subr.mxu0 0.0
    %2175 = vmatpush1.xpose.msra.mxu0 0.0
    %2176 = vmatprep.subr.mxu0 0.0
    %2177 = vmatpush1.xpose.msra.mxu0 0.0
    %2178 = vmatprep.subr.mxu0 0.0
    %2179 = vmatpush1.xpose.msra.mxu0 0.0
    %2180 = vmatprep.subr.mxu0 0.0
    %2181 = vmatpush1.xpose.msra.mxu0 0.0
    %2182 = vmatprep.subr.mxu0 0.0
    %2183 = vmatpush1.xpose.msra.mxu0 0.0
    %2184 = vmatprep.subr.mxu0 0.0
    %2185 = vmatpush1.xpose.msra.mxu0 0.0
    %2186 = vmatprep.subr.mxu0 0.0
    %2187 = vmatpush1.xpose.msra.mxu0 0.0
    %2188 = vmatprep.subr.mxu0 0.0
    %2189 = vmatpush1.xpose.msra.mxu0 0.0
    %2190 = vmatprep.subr.mxu0 0.0
    %2191 = vmatpush1.xpose.msra.mxu0 0.0
    %2192 = vmatprep.subr.mxu0 0.0
    %2193 = vmatpush1.xpose.msra.mxu0 0.0
    %2194 = vmatprep.subr.mxu0 0.0
    %2195 = vmatpush1.xpose.msra.mxu0 0.0
    %2196 = vmatprep.subr.mxu0 0.0
    %2197 = vmatpush1.xpose.msra.mxu0 0.0
    %2198 = vmatprep.subr.mxu0 0.0
    %2199 = vmatpush1.xpose.msra.mxu0 0.0
    %2200 = vmatprep.subr.mxu0 0.0
    %2201 = vmatpush1.xpose.msra.mxu0 0.0
    %2202 = vmatprep.subr.mxu0 0.0
    %2203 = vmatpush1.xpose.msra.mxu0 0.0
    %2204 = vmatprep.subr.mxu0 0.0
    %2205 = vmatpush1.xpose.msra.mxu0 0.0
    %2206 = vmatprep.subr.mxu0 0.0
    %2207 = vmatpush1.xpose.msra.mxu0 0.0
    %2208 = vmatprep.subr.mxu0 0.0
    %2209 = vmatpush1.xpose.msra.mxu0 0.0
    %2210 = vmatprep.subr.mxu0 0.0
    %2211 = vmatpush1.xpose.msra.mxu0 0.0
    %2212 = vmatprep.subr.mxu0 0.0
    %2213 = vmatpush1.xpose.msra.mxu0 0.0
    %2214 = vmatprep.subr.mxu0 0.0
    %2215 = vmatpush1.xpose.msra.mxu0 0.0
    %2216 = vmatprep.subr.mxu0 0.0
    %2217 = vmatpush1.xpose.msra.mxu0 0.0
    %2218 = vmatprep.subr.mxu0 0.0
    %2219 = vmatpush1.xpose.msra.mxu0 0.0
    %2220 = vmatprep.mubr.f32.mxu0 0.0
    %2221 = vmatmul.mubr.f32.gmra.mrb[0].mxu0 %v2152
    %v2222 = vpop.f32.mrb[0].mxu0
    %v2223 = vadd.f32 0.0, %v2222
    %v2224 = vpop.f32.mrb[0].mxu0
    %2225 = vdwg.mxu0
    %v2226 = vmul.f32 %v2223, 0.25
    %v2227 = vadd.f32 %v2226, %v636
    %v2228 = vsel %vm294, %v2227, -inf
    %2229 = vmax.xlane.f32.xlu0 %v2228
    %v2230 = vpop.xlane.xlu0 %2229
    %v2231 = vsub.f32 %v2227, %v2230
    %v2232 = vmul.f32 %v2231, 1.442695
    %v2233 = vpow.pop %v2232
    %v2234 = vsel %vm294, %v2233, 0.0
    %2235 = vadd.xlane.f32.xlu0 %v2234
    %v2236 = vpop.xlane.xlu0 %2235
    %v2237 = vrcp.pop %v2236
    %v2238 = vmul.f32 %v2233, %v2237
    %2239 = vrot.lane.b32.xlu0 %v1808, 64
    %v2240 = vpop.permute.xlu0 %2239
    %v2243 = vsel %vm294, %v2238, 0
    %2245 = vmatprep.subr.mxu0 0.0
    %2246 = vmatpush1.msra.mxu0 %v2240
    %2247 = vmatprep.subr.mxu0 0.0
    %2248 = vmatpush1.msra.mxu0 0.0
    %2249 = vmatprep.subr.mxu0 0.0
    %2250 = vmatpush1.msra.mxu0 0.0
    %2251 = vmatprep.subr.mxu0 0.0
    %2252 = vmatpush1.msra.mxu0 0.0
    %2253 = vmatprep.subr.mxu0 0.0
    %2254 = vmatpush1.msra.mxu0 0.0
    %2255 = vmatprep.subr.mxu0 0.0
    %2256 = vmatpush1.msra.mxu0 0.0
    %2257 = vmatprep.subr.mxu0 0.0
    %2258 = vmatpush1.msra.mxu0 0.0
    %2259 = vmatprep.subr.mxu0 0.0
    %2260 = vmatpush1.msra.mxu0 0.0
    %2261 = vmatprep.subr.mxu0 0.0
    %2262 = vmatpush1.msra.mxu0 0.0
    %2263 = vmatprep.subr.mxu0 0.0
    %2264 = vmatpush1.msra.mxu0 0.0
    %2265 = vmatprep.subr.mxu0 0.0
    %2266 = vmatpush1.msra.mxu0 0.0
    %2267 = vmatprep.subr.mxu0 0.0
    %2268 = vmatpush1.msra.mxu0 0.0
    %2269 = vmatprep.subr.mxu0 0.0
    %2270 = vmatpush1.msra.mxu0 0.0
    %2271 = vmatprep.subr.mxu0 0.0
    %2272 = vmatpush1.msra.mxu0 0.0
    %2273 = vmatprep.subr.mxu0 0.0
    %2274 = vmatpush1.msra.mxu0 0.0
    %2275 = vmatprep.subr.mxu0 0.0
    %2276 = vmatpush1.msra.mxu0 0.0
    %2277 = vmatprep.subr.mxu0 0.0
    %2278 = vmatpush1.msra.mxu0 0.0
    %2279 = vmatprep.subr.mxu0 0.0
    %2280 = vmatpush1.msra.mxu0 0.0
    %2281 = vmatprep.subr.mxu0 0.0
    %2282 = vmatpush1.msra.mxu0 0.0
    %2283 = vmatprep.subr.mxu0 0.0
    %2284 = vmatpush1.msra.mxu0 0.0
    %2285 = vmatprep.subr.mxu0 0.0
    %2286 = vmatpush1.msra.mxu0 0.0
    %2287 = vmatprep.subr.mxu0 0.0
    %2288 = vmatpush1.msra.mxu0 0.0
    %2289 = vmatprep.subr.mxu0 0.0
    %2290 = vmatpush1.msra.mxu0 0.0
    %2291 = vmatprep.subr.mxu0 0.0
    %2292 = vmatpush1.msra.mxu0 0.0
    %2293 = vmatprep.subr.mxu0 0.0
    %2294 = vmatpush1.msra.mxu0 0.0
    %2295 = vmatprep.subr.mxu0 0.0
    %2296 = vmatpush1.msra.mxu0 0.0
    %2297 = vmatprep.subr.mxu0 0.0
    %2298 = vmatpush1.msra.mxu0 0.0
    %2299 = vmatprep.subr.mxu0 0.0
    %2300 = vmatpush1.msra.mxu0 0.0
    %2301 = vmatprep.subr.mxu0 0.0
    %2302 = vmatpush1.msra.mxu0 0.0
    %2303 = vmatprep.subr.mxu0 0.0
    %2304 = vmatpush1.msra.mxu0 0.0
    %2305 = vmatprep.subr.mxu0 0.0
    %2306 = vmatpush1.msra.mxu0 0.0
    %2307 = vmatprep.subr.mxu0 0.0
    %2308 = vmatpush1.msra.mxu0 0.0
    %2309 = vmatprep.mubr.f32.mxu0 0.0
    %2310 = vmatmul.mubr.f32.gmra.mrb[0].mxu0 %v2243
    %v2311 = vpop.f32.mrb[0].mxu0
    %v2312 = vadd.f32 0.0, %v2311
    %v2313 = vpop.f32.mrb[0].mxu0
    %2314 = vdwg.mxu0
    %2315 = vrot.lane.b32.xlu0 %v1808, 112
    %v2316 = vpop.permute.xlu0 %2315
    %2317 = vrot.lane.b32.xlu0 %v1808, 80
    %v2318 = vpop.permute.xlu0 %2317
    %v2319 = vsel %vm211, %v2316, 0
    %v2321 = vsel %vm211, %v2318, 0
    %2323 = vmatprep.subr.mxu0 0.0
    %2324 = vmatpush1.xpose.msra.mxu0 %v2321
    %2325 = vmatprep.subr.mxu0 0.0
    %2326 = vmatpush1.xpose.msra.mxu0 0.0
    %2327 = vmatprep.subr.mxu0 0.0
    %2328 = vmatpush1.xpose.msra.mxu0 0.0
    %2329 = vmatprep.subr.mxu0 0.0
    %2330 = vmatpush1.xpose.msra.mxu0 0.0
    %2331 = vmatprep.subr.mxu0 0.0
    %2332 = vmatpush1.xpose.msra.mxu0 0.0
    %2333 = vmatprep.subr.mxu0 0.0
    %2334 = vmatpush1.xpose.msra.mxu0 0.0
    %2335 = vmatprep.subr.mxu0 0.0
    %2336 = vmatpush1.xpose.msra.mxu0 0.0
    %2337 = vmatprep.subr.mxu0 0.0
    %2338 = vmatpush1.xpose.msra.mxu0 0.0
    %2339 = vmatprep.subr.mxu0 0.0
    %2340 = vmatpush1.xpose.msra.mxu0 0.0
    %2341 = vmatprep.subr.mxu0 0.0
    %2342 = vmatpush1.xpose.msra.mxu0 0.0
    %2343 = vmatprep.subr.mxu0 0.0
    %2344 = vmatpush1.xpose.msra.mxu0 0.0
    %2345 = vmatprep.subr.mxu0 0.0
    %2346 = vmatpush1.xpose.msra.mxu0 0.0
    %2347 = vmatprep.subr.mxu0 0.0
    %2348 = vmatpush1.xpose.msra.mxu0 0.0
    %2349 = vmatprep.subr.mxu0 0.0
    %2350 = vmatpush1.xpose.msra.mxu0 0.0
    %2351 = vmatprep.subr.mxu0 0.0
    %2352 = vmatpush1.xpose.msra.mxu0 0.0
    %2353 = vmatprep.subr.mxu0 0.0
    %2354 = vmatpush1.xpose.msra.mxu0 0.0
    %2355 = vmatprep.subr.mxu0 0.0
    %2356 = vmatpush1.xpose.msra.mxu0 0.0
    %2357 = vmatprep.subr.mxu0 0.0
    %2358 = vmatpush1.xpose.msra.mxu0 0.0
    %2359 = vmatprep.subr.mxu0 0.0
    %2360 = vmatpush1.xpose.msra.mxu0 0.0
    %2361 = vmatprep.subr.mxu0 0.0
    %2362 = vmatpush1.xpose.msra.mxu0 0.0
    %2363 = vmatprep.subr.mxu0 0.0
    %2364 = vmatpush1.xpose.msra.mxu0 0.0
    %2365 = vmatprep.subr.mxu0 0.0
    %2366 = vmatpush1.xpose.msra.mxu0 0.0
    %2367 = vmatprep.subr.mxu0 0.0
    %2368 = vmatpush1.xpose.msra.mxu0 0.0
    %2369 = vmatprep.subr.mxu0 0.0
    %2370 = vmatpush1.xpose.msra.mxu0 0.0
    %2371 = vmatprep.subr.mxu0 0.0
    %2372 = vmatpush1.xpose.msra.mxu0 0.0
    %2373 = vmatprep.subr.mxu0 0.0
    %2374 = vmatpush1.xpose.msra.mxu0 0.0
    %2375 = vmatprep.subr.mxu0 0.0
    %2376 = vmatpush1.xpose.msra.mxu0 0.0
    %2377 = vmatprep.subr.mxu0 0.0
    %2378 = vmatpush1.xpose.msra.mxu0 0.0
    %2379 = vmatprep.subr.mxu0 0.0
    %2380 = vmatpush1.xpose.msra.mxu0 0.0
    %2381 = vmatprep.subr.mxu0 0.0
    %2382 = vmatpush1.xpose.msra.mxu0 0.0
    %2383 = vmatprep.subr.mxu0 0.0
    %2384 = vmatpush1.xpose.msra.mxu0 0.0
    %2385 = vmatprep.subr.mxu0 0.0
    %2386 = vmatpush1.xpose.msra.mxu0 0.0
    %2387 = vmatprep.mubr.f32.mxu0 0.0
    %2388 = vmatmul.mubr.f32.gmra.mrb[0].mxu0 %v2319
    %v2389 = vpop.f32.mrb[0].mxu0
    %v2390 = vadd.f32 0.0, %v2389
    %v2391 = vpop.f32.mrb[0].mxu0
    %2392 = vdwg.mxu0
    %v2393 = vmul.f32 %v2390, 0.25
    %v2394 = vadd.f32 %v2393, %v636
    %v2395 = vsel %vm294, %v2394, -inf
    %2396 = vmax.xlane.f32.xlu0 %v2395
    %v2397 = vpop.xlane.xlu0 %2396
    %v2398 = vsub.f32 %v2394, %v2397
    %v2399 = vmul.f32 %v2398, 1.442695
    %v2400 = vpow.pop %v2399
    %v2401 = vsel %vm294, %v2400, 0.0
    %2402 = vadd.xlane.f32.xlu0 %v2401
    %v2403 = vpop.xlane.xlu0 %2402
    %v2404 = vrcp.pop %v2403
    %v2405 = vmul.f32 %v2400, %v2404
    %2406 = vrot.lane.b32.xlu0 %v1808, 48
    %v2407 = vpop.permute.xlu0 %2406
    %v2410 = vsel %vm294, %v2405, 0
    %2412 = vmatprep.subr.mxu0 0.0
    %2413 = vmatpush1.msra.mxu0 %v2407
    %2414 = vmatprep.subr.mxu0 0.0
    %2415 = vmatpush1.msra.mxu0 0.0
    %2416 = vmatprep.subr.mxu0 0.0
    %2417 = vmatpush1.msra.mxu0 0.0
    %2418 = vmatprep.subr.mxu0 0.0
    %2419 = vmatpush1.msra.mxu0 0.0
    %2420 = vmatprep.subr.mxu0 0.0
    %2421 = vmatpush1.msra.mxu0 0.0
    %2422 = vmatprep.subr.mxu0 0.0
    %2423 = vmatpush1.msra.mxu0 0.0
    %2424 = vmatprep.subr.mxu0 0.0
    %2425 = vmatpush1.msra.mxu0 0.0
    %2426 = vmatprep.subr.mxu0 0.0
    %2427 = vmatpush1.msra.mxu0 0.0
    %2428 = vmatprep.subr.mxu0 0.0
    %2429 = vmatpush1.msra.mxu0 0.0
    %2430 = vmatprep.subr.mxu0 0.0
    %2431 = vmatpush1.msra.mxu0 0.0
    %2432 = vmatprep.subr.mxu0 0.0
    %2433 = vmatpush1.msra.mxu0 0.0
    %2434 = vmatprep.subr.mxu0 0.0
    %2435 = vmatpush1.msra.mxu0 0.0
    %2436 = vmatprep.subr.mxu0 0.0
    %2437 = vmatpush1.msra.mxu0 0.0
    %2438 = vmatprep.subr.mxu0 0.0
    %2439 = vmatpush1.msra.mxu0 0.0
    %2440 = vmatprep.subr.mxu0 0.0
    %2441 = vmatpush1.msra.mxu0 0.0
    %2442 = vmatprep.subr.mxu0 0.0
    %2443 = vmatpush1.msra.mxu0 0.0
    %2444 = vmatprep.subr.mxu0 0.0
    %2445 = vmatpush1.msra.mxu0 0.0
    %2446 = vmatprep.subr.mxu0 0.0
    %2447 = vmatpush1.msra.mxu0 0.0
    %2448 = vmatprep.subr.mxu0 0.0
    %2449 = vmatpush1.msra.mxu0 0.0
    %2450 = vmatprep.subr.mxu0 0.0
    %2451 = vmatpush1.msra.mxu0 0.0
    %2452 = vmatprep.subr.mxu0 0.0
    %2453 = vmatpush1.msra.mxu0 0.0
    %2454 = vmatprep.subr.mxu0 0.0
    %2455 = vmatpush1.msra.mxu0 0.0
    %2456 = vmatprep.subr.mxu0 0.0
    %2457 = vmatpush1.msra.mxu0 0.0
    %2458 = vmatprep.subr.mxu0 0.0
    %2459 = vmatpush1.msra.mxu0 0.0
    %2460 = vmatprep.subr.mxu0 0.0
    %2461 = vmatpush1.msra.mxu0 0.0
    %2462 = vmatprep.subr.mxu0 0.0
    %2463 = vmatpush1.msra.mxu0 0.0
    %2464 = vmatprep.subr.mxu0 0.0
    %2465 = vmatpush1.msra.mxu0 0.0
    %2466 = vmatprep.subr.mxu0 0.0
    %2467 = vmatpush1.msra.mxu0 0.0
    %2468 = vmatprep.subr.mxu0 0.0
    %2469 = vmatpush1.msra.mxu0 0.0
    %2470 = vmatprep.subr.mxu0 0.0
    %2471 = vmatpush1.msra.mxu0 0.0
    %2472 = vmatprep.subr.mxu0 0.0
    %2473 = vmatpush1.msra.mxu0 0.0
    %2474 = vmatprep.subr.mxu0 0.0
    %2475 = vmatpush1.msra.mxu0 0.0
    %2476 = vmatprep.mubr.f32.mxu0 0.0
    %2477 = vmatmul.mubr.f32.gmra.mrb[0].mxu0 %v2410
    %v2478 = vpop.f32.mrb[0].mxu0
    %v2479 = vadd.f32 0.0, %v2478
    %v2480 = vpop.f32.mrb[0].mxu0
    %2481 = vdwg.mxu0
    %2483 = vrot.lane.b32.xlu0 %v2479, 16
    %v2484 = vpop.permute.xlu0 %2483
    %v2486 = vsel %vm211, %v2312, %v2484
    %s2487 = scalar_lea.vmem %s6, 32
    %v2488 = vld [vmem:[%s2487] sm:$0xff]
    %v2489 = vld [vmem:[%s2487 + $0x8] sm:$0xff]
    %v2490 = vld [vmem:[%s2487 + $0x10] sm:$0xff]
    %v2491 = vld [vmem:[%s2487 + $0x18] sm:$0xff]
    %s2492 = scalar_lea.vmem %s7, 1
    %v2493 = vld [vmem:[%s2492] sm:$0x1]
    %v2495 = vlaneseq
    %v2496 = vshrl.u32 %v2495, 7
    %v2497 = vsub.s32 0, %v2496
    %v2498 = vrot.slane %v2493, %v2497
    %v2501 = vsel %vm70, %v2148, 0
    %v2504 = vsel %vm70, %v2486, 0
    %2506 = vmatprep.subr.mxu0 0.0
    %2507 = vmatpush1.msra.mxu0 %v2488
    %2508 = vmatprep.subr.mxu0 0.0
    %2509 = vmatpush1.msra.mxu0 %v2489
    %2510 = vmatprep.subr.mxu0 0.0
    %2511 = vmatpush1.msra.mxu0 %v2490
    %2512 = vmatprep.subr.mxu0 0.0
    %2513 = vmatpush1.msra.mxu0 %v2491
    %2514 = vmatprep.subr.mxu0 0.0
    %2515 = vmatpush1.msra.mxu0 0.0
    %2516 = vmatprep.subr.mxu0 0.0
    %2517 = vmatpush1.msra.mxu0 0.0
    %2518 = vmatprep.subr.mxu0 0.0
    %2519 = vmatpush1.msra.mxu0 0.0
    %2520 = vmatprep.subr.mxu0 0.0
    %2521 = vmatpush1.msra.mxu0 0.0
    %2522 = vmatprep.subr.mxu0 0.0
    %2523 = vmatpush1.msra.mxu0 0.0
    %2524 = vmatprep.subr.mxu0 0.0
    %2525 = vmatpush1.msra.mxu0 0.0
    %2526 = vmatprep.subr.mxu0 0.0
    %2527 = vmatpush1.msra.mxu0 0.0
    %2528 = vmatprep.subr.mxu0 0.0
    %2529 = vmatpush1.msra.mxu0 0.0
    %2530 = vmatprep.subr.mxu0 0.0
    %2531 = vmatpush1.msra.mxu0 0.0
    %2532 = vmatprep.subr.mxu0 0.0
    %2533 = vmatpush1.msra.mxu0 0.0
    %2534 = vmatprep.subr.mxu0 0.0
    %2535 = vmatpush1.msra.mxu0 0.0
    %2536 = vmatprep.subr.mxu0 0.0
    %2537 = vmatpush1.msra.mxu0 0.0
    %2538 = vmatprep.subr.mxu0 0.0
    %2539 = vmatpush1.msra.mxu0 0.0
    %2540 = vmatprep.subr.mxu0 0.0
    %2541 = vmatpush1.msra.mxu0 0.0
    %2542 = vmatprep.subr.mxu0 0.0
    %2543 = vmatpush1.msra.mxu0 0.0
    %2544 = vmatprep.subr.mxu0 0.0
    %2545 = vmatpush1.msra.mxu0 0.0
    %2546 = vmatprep.subr.mxu0 0.0
    %2547 = vmatpush1.msra.mxu0 0.0
    %2548 = vmatprep.subr.mxu0 0.0
    %2549 = vmatpush1.msra.mxu0 0.0
    %2550 = vmatprep.subr.mxu0 0.0
    %2551 = vmatpush1.msra.mxu0 0.0
    %2552 = vmatprep.subr.mxu0 0.0
    %2553 = vmatpush1.msra.mxu0 0.0
    %2554 = vmatprep.subr.mxu0 0.0
    %2555 = vmatpush1.msra.mxu0 0.0
    %2556 = vmatprep.subr.mxu0 0.0
    %2557 = vmatpush1.msra.mxu0 0.0
    %2558 = vmatprep.subr.mxu0 0.0
    %2559 = vmatpush1.msra.mxu0 0.0
    %2560 = vmatprep.subr.mxu0 0.0
    %2561 = vmatpush1.msra.mxu0 0.0
    %2562 = vmatprep.subr.mxu0 0.0
    %2563 = vmatpush1.msra.mxu0 0.0
    %2564 = vmatprep.subr.mxu0 0.0
    %2565 = vmatpush1.msra.mxu0 0.0
    %2566 = vmatprep.subr.mxu0 0.0
    %2567 = vmatpush1.msra.mxu0 0.0
    %2568 = vmatprep.subr.mxu0 0.0
    %2569 = vmatpush1.msra.mxu0 0.0
    %2570 = vmatprep.mubr.f32.mxu0 0.0
    %2571 = vmatmul.mubr.f32.gmra.mrb[0].mxu0 %v2501
    %v2572 = vpop.f32.mrb[0].mxu0
    %v2573 = vadd.f32 %v2498, %v2572
    %v2574 = vpop.f32.mrb[0].mxu0
    %2575 = vmatprep.mubr.f32.mxu0 0.0
    %2576 = vmatmul.mubr.f32.gmra.mrb[0].mxu0 %v2504
    %v2577 = vpop.f32.mrb[0].mxu0
    %v2578 = vadd.f32 %v2498, %v2577
    %v2579 = vpop.f32.mrb[0].mxu0
    %2580 = vdwg.mxu0
    %v2581 = vadd.f32 %v2573, %v1715
    %v2582 = vadd.f32 %v2578, %v1716
    %s2583 = scalar_lea.vmem %s8, 1
    %v2584 = vld [vmem:[%s2583] sm:$0x1]
    %s2585 = scalar_lea.vmem %s9, 1
    %v2586 = vld [vmem:[%s2585] sm:$0x1]
    %v2587 = vsel %vm70, %v2581, 0.0
    %2588 = vadd.xlane.f32.xlu0 %v2587
    %v2589 = vpop.xlane.xlu0 %2588
    %v2590 = vsel %vm70, %v2582, 0.0
    %2591 = vadd.xlane.f32.xlu0 %v2590
    %v2592 = vpop.xlane.xlu0 %2591
    %v2593 = vmul.f32 %v2589, %v77
    %v2594 = vmul.f32 %v2592, %v77
    %v2595 = vsub.f32 %v2581, %v2593
    %v2596 = vsub.f32 %v2582, %v2594
    %v2597 = vmul.f32 %v2595, %v2595
    %v2598 = vmul.f32 %v2596, %v2596
    %v2599 = vsel %vm70, %v2597, 0.0
    %2600 = vadd.xlane.f32.xlu0 %v2599
    %v2601 = vpop.xlane.xlu0 %2600
    %v2602 = vsel %vm70, %v2598, 0.0
    %2603 = vadd.xlane.f32.xlu0 %v2602
    %v2604 = vpop.xlane.xlu0 %2603
    %v2605 = vmul.f32 %v2601, %v77
    %v2606 = vmul.f32 %v2604, %v77
    %v2607 = vadd.f32 %v2605, 1e-12
    %v2608 = vadd.f32 %v2606, 1e-12
    %v2609 = vrsqrt.pop %v2607
    %v2610 = vrsqrt.pop %v2608
    %v2611 = vmul.f32 %v2595, %v2609
    %v2612 = vmul.f32 %v2596, %v2610
    %v2614 = vlaneseq
    %v2615 = vshrl.u32 %v2614, 7
    %v2616 = vsub.s32 0, %v2615
    %v2617 = vrot.slane %v2584, %v2616
    %v2619 = vmul.f32 %v2611, %v2617
    %v2620 = vmul.f32 %v2612, %v2617
    %v2622 = vlaneseq
    %v2623 = vshrl.u32 %v2622, 7
    %v2624 = vsub.s32 0, %v2623
    %v2625 = vrot.slane %v2586, %v2624
    %v2627 = vadd.f32 %v2619, %v2625
    %v2628 = vadd.f32 %v2620, %v2625
    %s2629 = scalar_lea.vmem %s10, 128
    %v2630 = vld [vmem:[%s2629] sm:$0xff]
    %v2631 = vld [vmem:[%s2629 + $0x8] sm:$0xff]
    %v2632 = vld [vmem:[%s2629 + $0x10] sm:$0xff]
    %v2633 = vld [vmem:[%s2629 + $0x18] sm:$0xff]
    %v2634 = vld [vmem:[%s2629 + $0x20] sm:$0xff]
    %v2635 = vld [vmem:[%s2629 + $0x28] sm:$0xff]
    %v2636 = vld [vmem:[%s2629 + $0x30] sm:$0xff]
    %v2637 = vld [vmem:[%s2629 + $0x38] sm:$0xff]
    %v2638 = vld [vmem:[%s2629 + $0x40] sm:$0xff]
    %v2639 = vld [vmem:[%s2629 + $0x48] sm:$0xff]
    %v2640 = vld [vmem:[%s2629 + $0x50] sm:$0xff]
    %v2641 = vld [vmem:[%s2629 + $0x58] sm:$0xff]
    %v2642 = vld [vmem:[%s2629 + $0x60] sm:$0xff]
    %v2643 = vld [vmem:[%s2629 + $0x68] sm:$0xff]
    %v2644 = vld [vmem:[%s2629 + $0x70] sm:$0xff]
    %v2645 = vld [vmem:[%s2629 + $0x78] sm:$0xff]
    %s2646 = scalar_lea.vmem %s11, 4
    %v2647 = vld [vmem:[%s2646] sm:$0xf]
    %v2649 = vlaneseq
    %v2650 = vshrl.u32 %v2649, 7
    %v2651 = vsub.s32 0, %v2650
    %v2652 = vrot.slane %v2647, %v2651
    %v2653 = vlaneseq
    %v2654 = vshrl.u32 %v2653, 7
    %v2655 = vsub.s32 1, %v2654
    %v2656 = vrot.slane %v2647, %v2655
    %v2657 = vlaneseq
    %v2658 = vshrl.u32 %v2657, 7
    %v2659 = vsub.s32 2, %v2658
    %v2660 = vrot.slane %v2647, %v2659
    %v2661 = vlaneseq
    %v2662 = vshrl.u32 %v2661, 7
    %v2663 = vsub.s32 3, %v2662
    %v2664 = vrot.slane %v2647, %v2663
    %v2670 = vsel %vm70, %v2627, 0
    %v2673 = vsel %vm70, %v2628, 0
    %2675 = vmatprep.subr.mxu0 %v2631
    %2676 = vmatpush1.msra.mxu0 %v2630
    %2677 = vmatprep.subr.mxu0 %v2635
    %2678 = vmatpush1.msra.mxu0 %v2634
    %2679 = vmatprep.subr.mxu0 %v2639
    %2680 = vmatpush1.msra.mxu0 %v2638
    %2681 = vmatprep.subr.mxu0 %v2643
    %2682 = vmatpush1.msra.mxu0 %v2642
    %2683 = vmatprep.subr.mxu0 0.0
    %2684 = vmatpush1.msra.mxu0 0.0
    %2685 = vmatprep.subr.mxu0 0.0
    %2686 = vmatpush1.msra.mxu0 0.0
    %2687 = vmatprep.subr.mxu0 0.0
    %2688 = vmatpush1.msra.mxu0 0.0
    %2689 = vmatprep.subr.mxu0 0.0
    %2690 = vmatpush1.msra.mxu0 0.0
    %2691 = vmatprep.subr.mxu0 0.0
    %2692 = vmatpush1.msra.mxu0 0.0
    %2693 = vmatprep.subr.mxu0 0.0
    %2694 = vmatpush1.msra.mxu0 0.0
    %2695 = vmatprep.subr.mxu0 0.0
    %2696 = vmatpush1.msra.mxu0 0.0
    %2697 = vmatprep.subr.mxu0 0.0
    %2698 = vmatpush1.msra.mxu0 0.0
    %2699 = vmatprep.subr.mxu0 0.0
    %2700 = vmatpush1.msra.mxu0 0.0
    %2701 = vmatprep.subr.mxu0 0.0
    %2702 = vmatpush1.msra.mxu0 0.0
    %2703 = vmatprep.subr.mxu0 0.0
    %2704 = vmatpush1.msra.mxu0 0.0
    %2705 = vmatprep.subr.mxu0 0.0
    %2706 = vmatpush1.msra.mxu0 0.0
    %2707 = vmatprep.subr.mxu0 0.0
    %2708 = vmatpush1.msra.mxu0 0.0
    %2709 = vmatprep.subr.mxu0 0.0
    %2710 = vmatpush1.msra.mxu0 0.0
    %2711 = vmatprep.subr.mxu0 0.0
    %2712 = vmatpush1.msra.mxu0 0.0
    %2713 = vmatprep.subr.mxu0 0.0
    %2714 = vmatpush1.msra.mxu0 0.0
    %2715 = vmatprep.subr.mxu0 0.0
    %2716 = vmatpush1.msra.mxu0 0.0
    %2717 = vmatprep.subr.mxu0 0.0
    %2718 = vmatpush1.msra.mxu0 0.0
    %2719 = vmatprep.subr.mxu0 0.0
    %2720 = vmatpush1.msra.mxu0 0.0
    %2721 = vmatprep.subr.mxu0 0.0
    %2722 = vmatpush1.msra.mxu0 0.0
    %2723 = vmatprep.subr.mxu0 0.0
    %2724 = vmatpush1.msra.mxu0 0.0
    %2725 = vmatprep.subr.mxu0 0.0
    %2726 = vmatpush1.msra.mxu0 0.0
    %2727 = vmatprep.subr.mxu0 0.0
    %2728 = vmatpush1.msra.mxu0 0.0
    %2729 = vmatprep.subr.mxu0 0.0
    %2730 = vmatpush1.msra.mxu0 0.0
    %2731 = vmatprep.subr.mxu0 0.0
    %2732 = vmatpush1.msra.mxu0 0.0
    %2733 = vmatprep.subr.mxu0 0.0
    %2734 = vmatpush1.msra.mxu0 0.0
    %2735 = vmatprep.subr.mxu0 0.0
    %2736 = vmatpush1.msra.mxu0 0.0
    %2737 = vmatprep.subr.mxu0 0.0
    %2738 = vmatpush1.msra.mxu0 0.0
    %2739 = vmatprep.mubr.f32.mxu0 0.0
    %2740 = vmatmul.mubr.f32.gmra.mrb[0].mxu0 %v2670
    %v2741 = vpop.f32.mrb[0].mxu0
    %v2742 = vadd.f32 %v2652, %v2741
    %v2743 = vpop.f32.mrb[0].mxu0
    %v2744 = vadd.f32 %v2656, %v2743
    %2745 = vmatprep.mubr.f32.mxu0 0.0
    %2746 = vmatmul.mubr.f32.gmra.mrb[0].mxu0 %v2673
    %v2747 = vpop.f32.mrb[0].mxu0
    %v2748 = vadd.f32 %v2652, %v2747
    %v2749 = vpop.f32.mrb[0].mxu0
    %v2750 = vadd.f32 %v2656, %v2749
    %2751 = vdwg.mxu0
    %2752 = vmatprep.subr.mxu0 %v2633
    %2753 = vmatpush1.msra.mxu0 %v2632
    %2754 = vmatprep.subr.mxu0 %v2637
    %2755 = vmatpush1.msra.mxu0 %v2636
    %2756 = vmatprep.subr.mxu0 %v2641
    %2757 = vmatpush1.msra.mxu0 %v2640
    %2758 = vmatprep.subr.mxu0 %v2645
    %2759 = vmatpush1.msra.mxu0 %v2644
    %2760 = vmatprep.subr.mxu0 0.0
    %2761 = vmatpush1.msra.mxu0 0.0
    %2762 = vmatprep.subr.mxu0 0.0
    %2763 = vmatpush1.msra.mxu0 0.0
    %2764 = vmatprep.subr.mxu0 0.0
    %2765 = vmatpush1.msra.mxu0 0.0
    %2766 = vmatprep.subr.mxu0 0.0
    %2767 = vmatpush1.msra.mxu0 0.0
    %2768 = vmatprep.subr.mxu0 0.0
    %2769 = vmatpush1.msra.mxu0 0.0
    %2770 = vmatprep.subr.mxu0 0.0
    %2771 = vmatpush1.msra.mxu0 0.0
    %2772 = vmatprep.subr.mxu0 0.0
    %2773 = vmatpush1.msra.mxu0 0.0
    %2774 = vmatprep.subr.mxu0 0.0
    %2775 = vmatpush1.msra.mxu0 0.0
    %2776 = vmatprep.subr.mxu0 0.0
    %2777 = vmatpush1.msra.mxu0 0.0
    %2778 = vmatprep.subr.mxu0 0.0
    %2779 = vmatpush1.msra.mxu0 0.0
    %2780 = vmatprep.subr.mxu0 0.0
    %2781 = vmatpush1.msra.mxu0 0.0
    %2782 = vmatprep.subr.mxu0 0.0
    %2783 = vmatpush1.msra.mxu0 0.0
    %2784 = vmatprep.subr.mxu0 0.0
    %2785 = vmatpush1.msra.mxu0 0.0
    %2786 = vmatprep.subr.mxu0 0.0
    %2787 = vmatpush1.msra.mxu0 0.0
    %2788 = vmatprep.subr.mxu0 0.0
    %2789 = vmatpush1.msra.mxu0 0.0
    %2790 = vmatprep.subr.mxu0 0.0
    %2791 = vmatpush1.msra.mxu0 0.0
    %2792 = vmatprep.subr.mxu0 0.0
    %2793 = vmatpush1.msra.mxu0 0.0
    %2794 = vmatprep.subr.mxu0 0.0
    %2795 = vmatpush1.msra.mxu0 0.0
    %2796 = vmatprep.subr.mxu0 0.0
    %2797 = vmatpush1.msra.mxu0 0.0
    %2798 = vmatprep.subr.mxu0 0.0
    %2799 = vmatpush1.msra.mxu0 0.0
    %2800 = vmatprep.subr.mxu0 0.0
    %2801 = vmatpush1.msra.mxu0 0.0
    %2802 = vmatprep.subr.mxu0 0.0
    %2803 = vmatpush1.msra.mxu0 0.0
    %2804 = vmatprep.subr.mxu0 0.0
    %2805 = vmatpush1.msra.mxu0 0.0
    %2806 = vmatprep.subr.mxu0 0.0
    %2807 = vmatpush1.msra.mxu0 0.0
    %2808 = vmatprep.subr.mxu0 0.0
    %2809 = vmatpush1.msra.mxu0 0.0
    %2810 = vmatprep.subr.mxu0 0.0
    %2811 = vmatpush1.msra.mxu0 0.0
    %2812 = vmatprep.subr.mxu0 0.0
    %2813 = vmatpush1.msra.mxu0 0.0
    %2814 = vmatprep.subr.mxu0 0.0
    %2815 = vmatpush1.msra.mxu0 0.0
    %2816 = vmatprep.mubr.f32.mxu0 0.0
    %2817 = vmatmul.mubr.f32.gmra.mrb[0].mxu0 %v2670
    %v2818 = vpop.f32.mrb[0].mxu0
    %v2819 = vadd.f32 %v2660, %v2818
    %v2820 = vpop.f32.mrb[0].mxu0
    %v2821 = vadd.f32 %v2664, %v2820
    %2822 = vmatprep.mubr.f32.mxu0 0.0
    %2823 = vmatmul.mubr.f32.gmra.mrb[0].mxu0 %v2673
    %v2824 = vpop.f32.mrb[0].mxu0
    %v2825 = vadd.f32 %v2660, %v2824
    %v2826 = vpop.f32.mrb[0].mxu0
    %v2827 = vadd.f32 %v2664, %v2826
    %2828 = vdwg.mxu0
    %v2829 = vmul.f32 %v2742, 0.5
    %v2830 = vmul.f32 %v2744, 0.5
    %v2831 = vmul.f32 %v2819, 0.5
    %v2832 = vmul.f32 %v2821, 0.5
    %v2833 = vmul.f32 %v2748, 0.5
    %v2834 = vmul.f32 %v2750, 0.5
    %v2835 = vmul.f32 %v2825, 0.5
    %v2836 = vmul.f32 %v2827, 0.5
    %v2837 = vmul.f32 %v2742, 0.70710677
    %v2838 = vmul.f32 %v2744, 0.70710677
    %v2839 = vmul.f32 %v2819, 0.70710677
    %v2840 = vmul.f32 %v2821, 0.70710677
    %v2841 = vmul.f32 %v2748, 0.70710677
    %v2842 = vmul.f32 %v2750, 0.70710677
    %v2843 = vmul.f32 %v2825, 0.70710677
    %v2844 = vmul.f32 %v2827, 0.70710677
    %vm2845 = vcmp.ge.f32.partialorder %v2837, 0.0
    %vm2846 = vcmp.ge.f32.partialorder %v2838, 0.0
    %vm2847 = vcmp.ge.f32.partialorder %v2839, 0.0
    %vm2848 = vcmp.ge.f32.partialorder %v2840, 0.0
    %vm2849 = vcmp.ge.f32.partialorder %v2841, 0.0
    %vm2850 = vcmp.ge.f32.partialorder %v2842, 0.0
    %vm2851 = vcmp.ge.f32.partialorder %v2843, 0.0
    %vm2852 = vcmp.ge.f32.partialorder %v2844, 0.0
    %v2853 = vsel %vm2845, 1.0, -1.0
    %v2854 = vsel %vm2846, 1.0, -1.0
    %v2855 = vsel %vm2847, 1.0, -1.0
    %v2856 = vsel %vm2848, 1.0, -1.0
    %v2857 = vsel %vm2849, 1.0, -1.0
    %v2858 = vsel %vm2850, 1.0, -1.0
    %v2859 = vsel %vm2851, 1.0, -1.0
    %v2860 = vsel %vm2852, 1.0, -1.0
    %v2861 = vand.u32 2147483647, %v2837
    %v2862 = vand.u32 2147483647, %v2838
    %v2863 = vand.u32 2147483647, %v2839
    %v2864 = vand.u32 2147483647, %v2840
    %v2865 = vand.u32 2147483647, %v2841
    %v2866 = vand.u32 2147483647, %v2842
    %v2867 = vand.u32 2147483647, %v2843
    %v2868 = vand.u32 2147483647, %v2844
    %v2869 = vmul.f32 %v2861, 0.3275911
    %v2870 = vmul.f32 %v2862, 0.3275911
    %v2871 = vmul.f32 %v2863, 0.3275911
    %v2872 = vmul.f32 %v2864, 0.3275911
    %v2873 = vmul.f32 %v2865, 0.3275911
    %v2874 = vmul.f32 %v2866, 0.3275911
    %v2875 = vmul.f32 %v2867, 0.3275911
    %v2876 = vmul.f32 %v2868, 0.3275911
    %v2877 = vadd.f32 %v2869, 1.0
    %v2878 = vadd.f32 %v2870, 1.0
    %v2879 = vadd.f32 %v2871, 1.0
    %v2880 = vadd.f32 %v2872, 1.0
    %v2881 = vadd.f32 %v2873, 1.0
    %v2882 = vadd.f32 %v2874, 1.0
    %v2883 = vadd.f32 %v2875, 1.0
    %v2884 = vadd.f32 %v2876, 1.0
    %v2885 = vrcp.pop %v2877
    %v2886 = vmul.f32 1.0, %v2885
    %v2887 = vrcp.pop %v2878
    %v2888 = vmul.f32 1.0, %v2887
    %v2889 = vrcp.pop %v2879
    %v2890 = vmul.f32 1.0, %v2889
    %v2891 = vrcp.pop %v2880
    %v2892 = vmul.f32 1.0, %v2891
    %v2893 = vrcp.pop %v2881
    %v2894 = vmul.f32 1.0, %v2893
    %v2895 = vrcp.pop %v2882
    %v2896 = vmul.f32 1.0, %v2895
    %v2897 = vrcp.pop %v2883
    %v2898 = vmul.f32 1.0, %v2897
    %v2899 = vrcp.pop %v2884
    %v2900 = vmul.f32 1.0, %v2899
    %v2901 = vmul.f32 %v2886, 1.0614054
    %v2902 = vmul.f32 %v2888, 1.0614054
    %v2903 = vmul.f32 %v2890, 1.0614054
    %v2904 = vmul.f32 %v2892, 1.0614054
    %v2905 = vmul.f32 %v2894, 1.0614054
    %v2906 = vmul.f32 %v2896, 1.0614054
    %v2907 = vmul.f32 %v2898, 1.0614054
    %v2908 = vmul.f32 %v2900, 1.0614054
    %v2909 = vadd.f32 %v2901, -1.4531521
    %v2910 = vadd.f32 %v2902, -1.4531521
    %v2911 = vadd.f32 %v2903, -1.4531521
    %v2912 = vadd.f32 %v2904, -1.4531521
    %v2913 = vadd.f32 %v2905, -1.4531521
    %v2914 = vadd.f32 %v2906, -1.4531521
    %v2915 = vadd.f32 %v2907, -1.4531521
    %v2916 = vadd.f32 %v2908, -1.4531521
    %v2917 = vmul.f32 %v2909, %v2886
    %v2918 = vmul.f32 %v2910, %v2888
    %v2919 = vmul.f32 %v2911, %v2890
    %v2920 = vmul.f32 %v2912, %v2892
    %v2921 = vmul.f32 %v2913, %v2894
    %v2922 = vmul.f32 %v2914, %v2896
    %v2923 = vmul.f32 %v2915, %v2898
    %v2924 = vmul.f32 %v2916, %v2900
    %v2925 = vadd.f32 %v2917, 1.4214138
    %v2926 = vadd.f32 %v2918, 1.4214138
    %v2927 = vadd.f32 %v2919, 1.4214138
    %v2928 = vadd.f32 %v2920, 1.4214138
    %v2929 = vadd.f32 %v2921, 1.4214138
    %v2930 = vadd.f32 %v2922, 1.4214138
    %v2931 = vadd.f32 %v2923, 1.4214138
    %v2932 = vadd.f32 %v2924, 1.4214138
    %v2933 = vmul.f32 %v2925, %v2886
    %v2934 = vmul.f32 %v2926, %v2888
    %v2935 = vmul.f32 %v2927, %v2890
    %v2936 = vmul.f32 %v2928, %v2892
    %v2937 = vmul.f32 %v2929, %v2894
    %v2938 = vmul.f32 %v2930, %v2896
    %v2939 = vmul.f32 %v2931, %v2898
    %v2940 = vmul.f32 %v2932, %v2900
    %v2941 = vadd.f32 %v2933, -0.28449672
    %v2942 = vadd.f32 %v2934, -0.28449672
    %v2943 = vadd.f32 %v2935, -0.28449672
    %v2944 = vadd.f32 %v2936, -0.28449672
    %v2945 = vadd.f32 %v2937, -0.28449672
    %v2946 = vadd.f32 %v2938, -0.28449672
    %v2947 = vadd.f32 %v2939, -0.28449672
    %v2948 = vadd.f32 %v2940, -0.28449672
    %v2949 = vmul.f32 %v2941, %v2886
    %v2950 = vmul.f32 %v2942, %v2888
    %v2951 = vmul.f32 %v2943, %v2890
    %v2952 = vmul.f32 %v2944, %v2892
    %v2953 = vmul.f32 %v2945, %v2894
    %v2954 = vmul.f32 %v2946, %v2896
    %v2955 = vmul.f32 %v2947, %v2898
    %v2956 = vmul.f32 %v2948, %v2900
    %v2957 = vadd.f32 %v2949, 0.2548296
    %v2958 = vadd.f32 %v2950, 0.2548296
    %v2959 = vadd.f32 %v2951, 0.2548296
    %v2960 = vadd.f32 %v2952, 0.2548296
    %v2961 = vadd.f32 %v2953, 0.2548296
    %v2962 = vadd.f32 %v2954, 0.2548296
    %v2963 = vadd.f32 %v2955, 0.2548296
    %v2964 = vadd.f32 %v2956, 0.2548296
    %v2965 = vmul.f32 %v2957, %v2886
    %v2966 = vmul.f32 %v2958, %v2888
    %v2967 = vmul.f32 %v2959, %v2890
    %v2968 = vmul.f32 %v2960, %v2892
    %v2969 = vmul.f32 %v2961, %v2894
    %v2970 = vmul.f32 %v2962, %v2896
    %v2971 = vmul.f32 %v2963, %v2898
    %v2972 = vmul.f32 %v2964, %v2900
    %v2973 = vsub.f32 0.0, %v2861
    %v2974 = vsub.f32 0.0, %v2862
    %v2975 = vsub.f32 0.0, %v2863
    %v2976 = vsub.f32 0.0, %v2864
    %v2977 = vsub.f32 0.0, %v2865
    %v2978 = vsub.f32 0.0, %v2866
    %v2979 = vsub.f32 0.0, %v2867
    %v2980 = vsub.f32 0.0, %v2868
    %v2981 = vmul.f32 %v2973, %v2861
    %v2982 = vmul.f32 %v2974, %v2862
    %v2983 = vmul.f32 %v2975, %v2863
    %v2984 = vmul.f32 %v2976, %v2864
    %v2985 = vmul.f32 %v2977, %v2865
    %v2986 = vmul.f32 %v2978, %v2866
    %v2987 = vmul.f32 %v2979, %v2867
    %v2988 = vmul.f32 %v2980, %v2868
    %v2989 = vmul.f32 %v2981, 1.442695
    %v2990 = vpow.pop %v2989
    %v2991 = vmul.f32 %v2982, 1.442695
    %v2992 = vpow.pop %v2991
    %v2993 = vmul.f32 %v2983, 1.442695
    %v2994 = vpow.pop %v2993
    %v2995 = vmul.f32 %v2984, 1.442695
    %v2996 = vpow.pop %v2995
    %v2997 = vmul.f32 %v2985, 1.442695
    %v2998 = vpow.pop %v2997
    %v2999 = vmul.f32 %v2986, 1.442695
    %v3000 = vpow.pop %v2999
    %v3001 = vmul.f32 %v2987, 1.442695
    %v3002 = vpow.pop %v3001
    %v3003 = vmul.f32 %v2988, 1.442695
    %v3004 = vpow.pop %v3003
    %v3005 = vmul.f32 %v2965, %v2990
    %v3006 = vmul.f32 %v2966, %v2992
    %v3007 = vmul.f32 %v2967, %v2994
    %v3008 = vmul.f32 %v2968, %v2996
    %v3009 = vmul.f32 %v2969, %v2998
    %v3010 = vmul.f32 %v2970, %v3000
    %v3011 = vmul.f32 %v2971, %v3002
    %v3012 = vmul.f32 %v2972, %v3004
    %v3013 = vsub.f32 1.0, %v3005
    %v3014 = vsub.f32 1.0, %v3006
    %v3015 = vsub.f32 1.0, %v3007
    %v3016 = vsub.f32 1.0, %v3008
    %v3017 = vsub.f32 1.0, %v3009
    %v3018 = vsub.f32 1.0, %v3010
    %v3019 = vsub.f32 1.0, %v3011
    %v3020 = vsub.f32 1.0, %v3012
    %v3021 = vmul.f32 %v2853, %v3013
    %v3022 = vmul.f32 %v2854, %v3014
    %v3023 = vmul.f32 %v2855, %v3015
    %v3024 = vmul.f32 %v2856, %v3016
    %v3025 = vmul.f32 %v2857, %v3017
    %v3026 = vmul.f32 %v2858, %v3018
    %v3027 = vmul.f32 %v2859, %v3019
    %v3028 = vmul.f32 %v2860, %v3020
    %v3029 = vadd.f32 %v3021, 1.0
    %v3030 = vadd.f32 %v3022, 1.0
    %v3031 = vadd.f32 %v3023, 1.0
    %v3032 = vadd.f32 %v3024, 1.0
    %v3033 = vadd.f32 %v3025, 1.0
    %v3034 = vadd.f32 %v3026, 1.0
    %v3035 = vadd.f32 %v3027, 1.0
    %v3036 = vadd.f32 %v3028, 1.0
    %v3037 = vmul.f32 %v2829, %v3029
    %v3038 = vmul.f32 %v2830, %v3030
    %v3039 = vmul.f32 %v2831, %v3031
    %v3040 = vmul.f32 %v2832, %v3032
    %v3041 = vmul.f32 %v2833, %v3033
    %v3042 = vmul.f32 %v2834, %v3034
    %v3043 = vmul.f32 %v2835, %v3035
    %v3044 = vmul.f32 %v2836, %v3036
    %s3045 = scalar_lea.vmem %s12, 512
    %v3046 = vld [vmem:[%s3045] sm:$0xff]
    %v3047 = vld [vmem:[%s3045 + $0x8] sm:$0xff]
    %v3048 = vld [vmem:[%s3045 + $0x10] sm:$0xff]
    %v3049 = vld [vmem:[%s3045 + $0x18] sm:$0xff]
    %v3050 = vld [vmem:[%s3045 + $0x20] sm:$0xff]
    %v3051 = vld [vmem:[%s3045 + $0x28] sm:$0xff]
    %v3052 = vld [vmem:[%s3045 + $0x30] sm:$0xff]
    %v3053 = vld [vmem:[%s3045 + $0x38] sm:$0xff]
    %v3054 = vld [vmem:[%s3045 + $0x40] sm:$0xff]
    %v3055 = vld [vmem:[%s3045 + $0x48] sm:$0xff]
    %v3056 = vld [vmem:[%s3045 + $0x50] sm:$0xff]
    %v3057 = vld [vmem:[%s3045 + $0x58] sm:$0xff]
    %v3058 = vld [vmem:[%s3045 + $0x60] sm:$0xff]
    %v3059 = vld [vmem:[%s3045 + $0x68] sm:$0xff]
    %v3060 = vld [vmem:[%s3045 + $0x70] sm:$0xff]
    %v3061 = vld [vmem:[%s3045 + $0x78] sm:$0xff]
    %v3062 = vld [vmem:[%s3045 + $0x80] sm:$0xff]
    %v3063 = vld [vmem:[%s3045 + $0x88] sm:$0xff]
    %v3064 = vld [vmem:[%s3045 + $0x90] sm:$0xff]
    %v3065 = vld [vmem:[%s3045 + $0x98] sm:$0xff]
    %v3066 = vld [vmem:[%s3045 + $0xa0] sm:$0xff]
    %v3067 = vld [vmem:[%s3045 + $0xa8] sm:$0xff]
    %v3068 = vld [vmem:[%s3045 + $0xb0] sm:$0xff]
    %v3069 = vld [vmem:[%s3045 + $0xb8] sm:$0xff]
    %v3070 = vld [vmem:[%s3045 + $0xc0] sm:$0xff]
    %v3071 = vld [vmem:[%s3045 + $0xc8] sm:$0xff]
    %v3072 = vld [vmem:[%s3045 + $0xd0] sm:$0xff]
    %v3073 = vld [vmem:[%s3045 + $0xd8] sm:$0xff]
    %v3074 = vld [vmem:[%s3045 + $0xe0] sm:$0xff]
    %v3075 = vld [vmem:[%s3045 + $0xe8] sm:$0xff]
    %v3076 = vld [vmem:[%s3045 + $0xf0] sm:$0xff]
    %v3077 = vld [vmem:[%s3045 + $0xf8] sm:$0xff]
    %v3078 = vld [vmem:[%s3045 + $0x100] sm:$0xff]
    %v3079 = vld [vmem:[%s3045 + $0x108] sm:$0xff]
    %v3080 = vld [vmem:[%s3045 + $0x110] sm:$0xff]
    %v3081 = vld [vmem:[%s3045 + $0x118] sm:$0xff]
    %v3082 = vld [vmem:[%s3045 + $0x120] sm:$0xff]
    %v3083 = vld [vmem:[%s3045 + $0x128] sm:$0xff]
    %v3084 = vld [vmem:[%s3045 + $0x130] sm:$0xff]
    %v3085 = vld [vmem:[%s3045 + $0x138] sm:$0xff]
    %v3086 = vld [vmem:[%s3045 + $0x140] sm:$0xff]
    %v3087 = vld [vmem:[%s3045 + $0x148] sm:$0xff]
    %v3088 = vld [vmem:[%s3045 + $0x150] sm:$0xff]
    %v3089 = vld [vmem:[%s3045 + $0x158] sm:$0xff]
    %v3090 = vld [vmem:[%s3045 + $0x160] sm:$0xff]
    %v3091 = vld [vmem:[%s3045 + $0x168] sm:$0xff]
    %v3092 = vld [vmem:[%s3045 + $0x170] sm:$0xff]
    %v3093 = vld [vmem:[%s3045 + $0x178] sm:$0xff]
    %v3094 = vld [vmem:[%s3045 + $0x180] sm:$0xff]
    %v3095 = vld [vmem:[%s3045 + $0x188] sm:$0xff]
    %v3096 = vld [vmem:[%s3045 + $0x190] sm:$0xff]
    %v3097 = vld [vmem:[%s3045 + $0x198] sm:$0xff]
    %v3098 = vld [vmem:[%s3045 + $0x1a0] sm:$0xff]
    %v3099 = vld [vmem:[%s3045 + $0x1a8] sm:$0xff]
    %v3100 = vld [vmem:[%s3045 + $0x1b0] sm:$0xff]
    %v3101 = vld [vmem:[%s3045 + $0x1b8] sm:$0xff]
    %v3102 = vld [vmem:[%s3045 + $0x1c0] sm:$0xff]
    %v3103 = vld [vmem:[%s3045 + $0x1c8] sm:$0xff]
    %v3104 = vld [vmem:[%s3045 + $0x1d0] sm:$0xff]
    %v3105 = vld [vmem:[%s3045 + $0x1d8] sm:$0xff]
    %v3106 = vld [vmem:[%s3045 + $0x1e0] sm:$0xff]
    %v3107 = vld [vmem:[%s3045 + $0x1e8] sm:$0xff]
    %v3108 = vld [vmem:[%s3045 + $0x1f0] sm:$0xff]
    %v3109 = vld [vmem:[%s3045 + $0x1f8] sm:$0xff]
    %s3110 = scalar_lea.vmem %s13, 1
    %v3111 = vld [vmem:[%s3110] sm:$0x1]
    %v3113 = vlaneseq
    %v3114 = vshrl.u32 %v3113, 7
    %v3115 = vsub.s32 0, %v3114
    %v3116 = vrot.slane %v3111, %v3115
    %3118 = vmatprep.subr.mxu0 0.0
    %3119 = vmatpush1.msra.mxu0 %v3046
    %3120 = vmatprep.subr.mxu0 0.0
    %3121 = vmatpush1.msra.mxu0 %v3047
    %3122 = vmatprep.subr.mxu0 0.0
    %3123 = vmatpush1.msra.mxu0 %v3048
    %3124 = vmatprep.subr.mxu0 0.0
    %3125 = vmatpush1.msra.mxu0 %v3049
    %3126 = vmatprep.subr.mxu0 0.0
    %3127 = vmatpush1.msra.mxu0 %v3050
    %3128 = vmatprep.subr.mxu0 0.0
    %3129 = vmatpush1.msra.mxu0 %v3051
    %3130 = vmatprep.subr.mxu0 0.0
    %3131 = vmatpush1.msra.mxu0 %v3052
    %3132 = vmatprep.subr.mxu0 0.0
    %3133 = vmatpush1.msra.mxu0 %v3053
    %3134 = vmatprep.subr.mxu0 0.0
    %3135 = vmatpush1.msra.mxu0 %v3054
    %3136 = vmatprep.subr.mxu0 0.0
    %3137 = vmatpush1.msra.mxu0 %v3055
    %3138 = vmatprep.subr.mxu0 0.0
    %3139 = vmatpush1.msra.mxu0 %v3056
    %3140 = vmatprep.subr.mxu0 0.0
    %3141 = vmatpush1.msra.mxu0 %v3057
    %3142 = vmatprep.subr.mxu0 0.0
    %3143 = vmatpush1.msra.mxu0 %v3058
    %3144 = vmatprep.subr.mxu0 0.0
    %3145 = vmatpush1.msra.mxu0 %v3059
    %3146 = vmatprep.subr.mxu0 0.0
    %3147 = vmatpush1.msra.mxu0 %v3060
    %3148 = vmatprep.subr.mxu0 0.0
    %3149 = vmatpush1.msra.mxu0 %v3061
    %3150 = vmatprep.subr.mxu0 0.0
    %3151 = vmatpush1.msra.mxu0 %v3062
    %3152 = vmatprep.subr.mxu0 0.0
    %3153 = vmatpush1.msra.mxu0 %v3063
    %3154 = vmatprep.subr.mxu0 0.0
    %3155 = vmatpush1.msra.mxu0 %v3064
    %3156 = vmatprep.subr.mxu0 0.0
    %3157 = vmatpush1.msra.mxu0 %v3065
    %3158 = vmatprep.subr.mxu0 0.0
    %3159 = vmatpush1.msra.mxu0 %v3066
    %3160 = vmatprep.subr.mxu0 0.0
    %3161 = vmatpush1.msra.mxu0 %v3067
    %3162 = vmatprep.subr.mxu0 0.0
    %3163 = vmatpush1.msra.mxu0 %v3068
    %3164 = vmatprep.subr.mxu0 0.0
    %3165 = vmatpush1.msra.mxu0 %v3069
    %3166 = vmatprep.subr.mxu0 0.0
    %3167 = vmatpush1.msra.mxu0 %v3070
    %3168 = vmatprep.subr.mxu0 0.0
    %3169 = vmatpush1.msra.mxu0 %v3071
    %3170 = vmatprep.subr.mxu0 0.0
    %3171 = vmatpush1.msra.mxu0 %v3072
    %3172 = vmatprep.subr.mxu0 0.0
    %3173 = vmatpush1.msra.mxu0 %v3073
    %3174 = vmatprep.subr.mxu0 0.0
    %3175 = vmatpush1.msra.mxu0 %v3074
    %3176 = vmatprep.subr.mxu0 0.0
    %3177 = vmatpush1.msra.mxu0 %v3075
    %3178 = vmatprep.subr.mxu0 0.0
    %3179 = vmatpush1.msra.mxu0 %v3076
    %3180 = vmatprep.subr.mxu0 0.0
    %3181 = vmatpush1.msra.mxu0 %v3077
    %3182 = vmatprep.mubr.f32.mxu0 %v3038
    %3183 = vmatmul.mubr.f32.gmra.mrb[0].mxu0 %v3037
    %v3184 = vpop.f32.mrb[0].mxu0
    %v3185 = vadd.f32 %v3116, %v3184
    %v3186 = vpop.f32.mrb[0].mxu0
    %3187 = vmatprep.mubr.f32.mxu0 %v3042
    %3188 = vmatmul.mubr.f32.gmra.mrb[0].mxu0 %v3041
    %v3189 = vpop.f32.mrb[0].mxu0
    %v3190 = vadd.f32 %v3116, %v3189
    %v3191 = vpop.f32.mrb[0].mxu0
    %3192 = vdwg.mxu0
    %3193 = vmatprep.subr.mxu0 0.0
    %3194 = vmatpush1.msra.mxu0 %v3078
    %3195 = vmatprep.subr.mxu0 0.0
    %3196 = vmatpush1.msra.mxu0 %v3079
    %3197 = vmatprep.subr.mxu0 0.0
    %3198 = vmatpush1.msra.mxu0 %v3080
    %3199 = vmatprep.subr.mxu0 0.0
    %3200 = vmatpush1.msra.mxu0 %v3081
    %3201 = vmatprep.subr.mxu0 0.0
    %3202 = vmatpush1.msra.mxu0 %v3082
    %3203 = vmatprep.subr.mxu0 0.0
    %3204 = vmatpush1.msra.mxu0 %v3083
    %3205 = vmatprep.subr.mxu0 0.0
    %3206 = vmatpush1.msra.mxu0 %v3084
    %3207 = vmatprep.subr.mxu0 0.0
    %3208 = vmatpush1.msra.mxu0 %v3085
    %3209 = vmatprep.subr.mxu0 0.0
    %3210 = vmatpush1.msra.mxu0 %v3086
    %3211 = vmatprep.subr.mxu0 0.0
    %3212 = vmatpush1.msra.mxu0 %v3087
    %3213 = vmatprep.subr.mxu0 0.0
    %3214 = vmatpush1.msra.mxu0 %v3088
    %3215 = vmatprep.subr.mxu0 0.0
    %3216 = vmatpush1.msra.mxu0 %v3089
    %3217 = vmatprep.subr.mxu0 0.0
    %3218 = vmatpush1.msra.mxu0 %v3090
    %3219 = vmatprep.subr.mxu0 0.0
    %3220 = vmatpush1.msra.mxu0 %v3091
    %3221 = vmatprep.subr.mxu0 0.0
    %3222 = vmatpush1.msra.mxu0 %v3092
    %3223 = vmatprep.subr.mxu0 0.0
    %3224 = vmatpush1.msra.mxu0 %v3093
    %3225 = vmatprep.subr.mxu0 0.0
    %3226 = vmatpush1.msra.mxu0 %v3094
    %3227 = vmatprep.subr.mxu0 0.0
    %3228 = vmatpush1.msra.mxu0 %v3095
    %3229 = vmatprep.subr.mxu0 0.0
    %3230 = vmatpush1.msra.mxu0 %v3096
    %3231 = vmatprep.subr.mxu0 0.0
    %3232 = vmatpush1.msra.mxu0 %v3097
    %3233 = vmatprep.subr.mxu0 0.0
    %3234 = vmatpush1.msra.mxu0 %v3098
    %3235 = vmatprep.subr.mxu0 0.0
    %3236 = vmatpush1.msra.mxu0 %v3099
    %3237 = vmatprep.subr.mxu0 0.0
    %3238 = vmatpush1.msra.mxu0 %v3100
    %3239 = vmatprep.subr.mxu0 0.0
    %3240 = vmatpush1.msra.mxu0 %v3101
    %3241 = vmatprep.subr.mxu0 0.0
    %3242 = vmatpush1.msra.mxu0 %v3102
    %3243 = vmatprep.subr.mxu0 0.0
    %3244 = vmatpush1.msra.mxu0 %v3103
    %3245 = vmatprep.subr.mxu0 0.0
    %3246 = vmatpush1.msra.mxu0 %v3104
    %3247 = vmatprep.subr.mxu0 0.0
    %3248 = vmatpush1.msra.mxu0 %v3105
    %3249 = vmatprep.subr.mxu0 0.0
    %3250 = vmatpush1.msra.mxu0 %v3106
    %3251 = vmatprep.subr.mxu0 0.0
    %3252 = vmatpush1.msra.mxu0 %v3107
    %3253 = vmatprep.subr.mxu0 0.0
    %3254 = vmatpush1.msra.mxu0 %v3108
    %3255 = vmatprep.subr.mxu0 0.0
    %3256 = vmatpush1.msra.mxu0 %v3109
    %3257 = vmatprep.mubr.f32.mxu0 %v3040
    %3258 = vmatmul.mubr.f32.gmra.mrb[0].mxu0 %v3039
    %v3259 = vpop.f32.mrb[0].mxu0
    %v3260 = vadd.f32 %v3185, %v3259
    %v3261 = vpop.f32.mrb[0].mxu0
    %3262 = vmatprep.mubr.f32.mxu0 %v3044
    %3263 = vmatmul.mubr.f32.gmra.mrb[0].mxu0 %v3043
    %v3264 = vpop.f32.mrb[0].mxu0
    %v3265 = vadd.f32 %v3190, %v3264
    %v3266 = vpop.f32.mrb[0].mxu0
    %3267 = vdwg.mxu0
    %v3268 = vadd.f32 %v3260, %v2627
    %v3269 = vadd.f32 %v3265, %v2628
    %s3270 = scalar_lea.vmem %s14, 1
    %v3271 = vld [vmem:[%s3270] sm:$0x1]
    %s3272 = scalar_lea.vmem %s15, 1
    %v3273 = vld [vmem:[%s3272] sm:$0x1]
    %v3274 = vsel %vm70, %v3268, 0.0
    %3275 = vadd.xlane.f32.xlu0 %v3274
    %v3276 = vpop.xlane.xlu0 %3275
    %v3277 = vsel %vm70, %v3269, 0.0
    %3278 = vadd.xlane.f32.xlu0 %v3277
    %v3279 = vpop.xlane.xlu0 %3278
    %v3280 = vmul.f32 %v3276, %v77
    %v3281 = vmul.f32 %v3279, %v77
    %v3282 = vsub.f32 %v3268, %v3280
    %v3283 = vsub.f32 %v3269, %v3281
    %v3284 = vmul.f32 %v3282, %v3282
    %v3285 = vmul.f32 %v3283, %v3283
    %v3286 = vsel %vm70, %v3284, 0.0
    %3287 = vadd.xlane.f32.xlu0 %v3286
    %v3288 = vpop.xlane.xlu0 %3287
    %v3289 = vsel %vm70, %v3285, 0.0
    %3290 = vadd.xlane.f32.xlu0 %v3289
    %v3291 = vpop.xlane.xlu0 %3290
    %v3292 = vmul.f32 %v3288, %v77
    %v3293 = vmul.f32 %v3291, %v77
    %v3294 = vadd.f32 %v3292, 1e-12
    %v3295 = vadd.f32 %v3293, 1e-12
    %v3296 = vrsqrt.pop %v3294
    %v3297 = vrsqrt.pop %v3295
    %v3298 = vmul.f32 %v3282, %v3296
    %v3299 = vmul.f32 %v3283, %v3297
    %v3301 = vlaneseq
    %v3302 = vshrl.u32 %v3301, 7
    %v3303 = vsub.s32 0, %v3302
    %v3304 = vrot.slane %v3271, %v3303
    %v3306 = vmul.f32 %v3298, %v3304
    %v3307 = vmul.f32 %v3299, %v3304
    %v3309 = vlaneseq
    %v3310 = vshrl.u32 %v3309, 7
    %v3311 = vsub.s32 0, %v3310
    %v3312 = vrot.slane %v3273, %v3311
    %v3314 = vadd.f32 %v3306, %v3312
    %v3315 = vadd.f32 %v3307, %v3312
    %v3317 = vrot.slane %v3315, 7
    %vm3319 = vcmask 1040384
    %v3320 = vsel %vm3319, %v3314, %v3317
    %v3321 = vld [vmem:[%s16] sm:$0xff]
    %v3322 = vld [vmem:[%s16 + $0x8] sm:$0xff]
    %v3323 = vld [vmem:[%s16 + $0x10] sm:$0xff]
    %v3324 = vld [vmem:[%s16 + $0x18] sm:$0xff]
    %v3325 = vld [vmem:[%s17] sm:$0x1]
    %v3327 = vlaneseq
    %v3328 = vshrl.u32 %v3327, 7
    %v3329 = vsub.s32 0, %v3328
    %v3330 = vrot.slane %v3325, %v3329
    %v3333 = vsel %vm70, %v3320, 0
    %3335 = vmatprep.subr.mxu0 0.0
    %3336 = vmatpush1.msra.mxu0 %v3321
    %3337 = vmatprep.subr.mxu0 0.0
    %3338 = vmatpush1.msra.mxu0 %v3322
    %3339 = vmatprep.subr.mxu0 0.0
    %3340 = vmatpush1.msra.mxu0 %v3323
    %3341 = vmatprep.subr.mxu0 0.0
    %3342 = vmatpush1.msra.mxu0 %v3324
    %3343 = vmatprep.subr.mxu0 0.0
    %3344 = vmatpush1.msra.mxu0 0.0
    %3345 = vmatprep.subr.mxu0 0.0
    %3346 = vmatpush1.msra.mxu0 0.0
    %3347 = vmatprep.subr.mxu0 0.0
    %3348 = vmatpush1.msra.mxu0 0.0
    %3349 = vmatprep.subr.mxu0 0.0
    %3350 = vmatpush1.msra.mxu0 0.0
    %3351 = vmatprep.subr.mxu0 0.0
    %3352 = vmatpush1.msra.mxu0 0.0
    %3353 = vmatprep.subr.mxu0 0.0
    %3354 = vmatpush1.msra.mxu0 0.0
    %3355 = vmatprep.subr.mxu0 0.0
    %3356 = vmatpush1.msra.mxu0 0.0
    %3357 = vmatprep.subr.mxu0 0.0
    %3358 = vmatpush1.msra.mxu0 0.0
    %3359 = vmatprep.subr.mxu0 0.0
    %3360 = vmatpush1.msra.mxu0 0.0
    %3361 = vmatprep.subr.mxu0 0.0
    %3362 = vmatpush1.msra.mxu0 0.0
    %3363 = vmatprep.subr.mxu0 0.0
    %3364 = vmatpush1.msra.mxu0 0.0
    %3365 = vmatprep.subr.mxu0 0.0
    %3366 = vmatpush1.msra.mxu0 0.0
    %3367 = vmatprep.subr.mxu0 0.0
    %3368 = vmatpush1.msra.mxu0 0.0
    %3369 = vmatprep.subr.mxu0 0.0
    %3370 = vmatpush1.msra.mxu0 0.0
    %3371 = vmatprep.subr.mxu0 0.0
    %3372 = vmatpush1.msra.mxu0 0.0
    %3373 = vmatprep.subr.mxu0 0.0
    %3374 = vmatpush1.msra.mxu0 0.0
    %3375 = vmatprep.subr.mxu0 0.0
    %3376 = vmatpush1.msra.mxu0 0.0
    %3377 = vmatprep.subr.mxu0 0.0
    %3378 = vmatpush1.msra.mxu0 0.0
    %3379 = vmatprep.subr.mxu0 0.0
    %3380 = vmatpush1.msra.mxu0 0.0
    %3381 = vmatprep.subr.mxu0 0.0
    %3382 = vmatpush1.msra.mxu0 0.0
    %3383 = vmatprep.subr.mxu0 0.0
    %3384 = vmatpush1.msra.mxu0 0.0
    %3385 = vmatprep.subr.mxu0 0.0
    %3386 = vmatpush1.msra.mxu0 0.0
    %3387 = vmatprep.subr.mxu0 0.0
    %3388 = vmatpush1.msra.mxu0 0.0
    %3389 = vmatprep.subr.mxu0 0.0
    %3390 = vmatpush1.msra.mxu0 0.0
    %3391 = vmatprep.subr.mxu0 0.0
    %3392 = vmatpush1.msra.mxu0 0.0
    %3393 = vmatprep.subr.mxu0 0.0
    %3394 = vmatpush1.msra.mxu0 0.0
    %3395 = vmatprep.subr.mxu0 0.0
    %3396 = vmatpush1.msra.mxu0 0.0
    %3397 = vmatprep.subr.mxu0 0.0
    %3398 = vmatpush1.msra.mxu0 0.0
    %3399 = vmatprep.mubr.f32.mxu0 0.0
    %3400 = vmatmul.mubr.f32.gmra.mrb[0].mxu0 %v3333
    %v3401 = vpop.f32.mrb[0].mxu0
    %v3402 = vadd.f32 %v3330, %v3401
    %v3403 = vpop.f32.mrb[0].mxu0
    %3404 = vdwg.mxu0
    %v3405 = vtanh.pop %v3402
    %v3406 = vld [vmem:[%s18] sm:$0xff]
    %v3407 = vld [vmem:[%s18 + $0x8] sm:$0xff]
    %v3408 = vld [vmem:[%s18 + $0x10] sm:$0xff]
    %v3409 = vld [vmem:[%s18 + $0x18] sm:$0xff]
    %v3410 = vld [vmem:[%s19] sm:$0x1]
    %v3412 = vlaneseq
    %v3413 = vshrl.u32 %v3412, 7
    %v3414 = vsub.s32 0, %v3413
    %v3415 = vrot.slane %v3410, %v3414
    %v3418 = vsel %vm70, %v3405, 0
    %3420 = vmatprep.subr.mxu0 0.0
    %3421 = vmatpush1.msra.mxu0 %v3406
    %3422 = vmatprep.subr.mxu0 0.0
    %3423 = vmatpush1.msra.mxu0 %v3407
    %3424 = vmatprep.subr.mxu0 0.0
    %3425 = vmatpush1.msra.mxu0 %v3408
    %3426 = vmatprep.subr.mxu0 0.0
    %3427 = vmatpush1.msra.mxu0 %v3409
    %3428 = vmatprep.subr.mxu0 0.0
    %3429 = vmatpush1.msra.mxu0 0.0
    %3430 = vmatprep.subr.mxu0 0.0
    %3431 = vmatpush1.msra.mxu0 0.0
    %3432 = vmatprep.subr.mxu0 0.0
    %3433 = vmatpush1.msra.mxu0 0.0
    %3434 = vmatprep.subr.mxu0 0.0
    %3435 = vmatpush1.msra.mxu0 0.0
    %3436 = vmatprep.subr.mxu0 0.0
    %3437 = vmatpush1.msra.mxu0 0.0
    %3438 = vmatprep.subr.mxu0 0.0
    %3439 = vmatpush1.msra.mxu0 0.0
    %3440 = vmatprep.subr.mxu0 0.0
    %3441 = vmatpush1.msra.mxu0 0.0
    %3442 = vmatprep.subr.mxu0 0.0
    %3443 = vmatpush1.msra.mxu0 0.0
    %3444 = vmatprep.subr.mxu0 0.0
    %3445 = vmatpush1.msra.mxu0 0.0
    %3446 = vmatprep.subr.mxu0 0.0
    %3447 = vmatpush1.msra.mxu0 0.0
    %3448 = vmatprep.subr.mxu0 0.0
    %3449 = vmatpush1.msra.mxu0 0.0
    %3450 = vmatprep.subr.mxu0 0.0
    %3451 = vmatpush1.msra.mxu0 0.0
    %3452 = vmatprep.subr.mxu0 0.0
    %3453 = vmatpush1.msra.mxu0 0.0
    %3454 = vmatprep.subr.mxu0 0.0
    %3455 = vmatpush1.msra.mxu0 0.0
    %3456 = vmatprep.subr.mxu0 0.0
    %3457 = vmatpush1.msra.mxu0 0.0
    %3458 = vmatprep.subr.mxu0 0.0
    %3459 = vmatpush1.msra.mxu0 0.0
    %3460 = vmatprep.subr.mxu0 0.0
    %3461 = vmatpush1.msra.mxu0 0.0
    %3462 = vmatprep.subr.mxu0 0.0
    %3463 = vmatpush1.msra.mxu0 0.0
    %3464 = vmatprep.subr.mxu0 0.0
    %3465 = vmatpush1.msra.mxu0 0.0
    %3466 = vmatprep.subr.mxu0 0.0
    %3467 = vmatpush1.msra.mxu0 0.0
    %3468 = vmatprep.subr.mxu0 0.0
    %3469 = vmatpush1.msra.mxu0 0.0
    %3470 = vmatprep.subr.mxu0 0.0
    %3471 = vmatpush1.msra.mxu0 0.0
    %3472 = vmatprep.subr.mxu0 0.0
    %3473 = vmatpush1.msra.mxu0 0.0
    %3474 = vmatprep.subr.mxu0 0.0
    %3475 = vmatpush1.msra.mxu0 0.0
    %3476 = vmatprep.subr.mxu0 0.0
    %3477 = vmatpush1.msra.mxu0 0.0
    %3478 = vmatprep.subr.mxu0 0.0
    %3479 = vmatpush1.msra.mxu0 0.0
    %3480 = vmatprep.subr.mxu0 0.0
    %3481 = vmatpush1.msra.mxu0 0.0
    %3482 = vmatprep.subr.mxu0 0.0
    %3483 = vmatpush1.msra.mxu0 0.0
    %3484 = vmatprep.mubr.f32.mxu0 0.0
    %3485 = vmatmul.mubr.f32.gmra.mrb[0].mxu0 %v3418
    %v3486 = vpop.f32.mrb[0].mxu0
    %v3487 = vadd.f32 %v3415, %v3486
    %v3488 = vpop.f32.mrb[0].mxu0
    %3489 = vdwg.mxu0
    %vm3490 = vcmask 25600
    %3491 = vst.msk [vmem:[#allocation2] sm:$0x3] %vm3490, %v3487
    // Predicated region
    $region82: #{my_bert_forward.1} parent=1 // pred_check
      _
    $region83: #{my_bert_forward.1} parent=1 // pred_check_branch
      %3493 = sbr.rel (0) target = $region85
    $region84: #{my_bert_forward.1} parent=1 // pred_region
      %s3495 = ssub.s32 32, 32
      %3496 = vsyncadd [#allocation3], %s3495
      %s3498 = sshll.u32 [#allocation2], 4
      %s3499 = int_to_ptr.vmem [resolvable:$true] %s3498
      %3501 = dma.vmem_to_hbm [thread:$0]  %s3499, 32, %s20, [#allocation3]
    $region85: #{my_bert_forward.1} parent=1 // pred_fallthru
      _
    // Predicated region
    $region86: #{my_bert_forward.1} parent=1 // pred_check
      _
    $region87: #{my_bert_forward.1} parent=1 // pred_check_branch
      %3503 = sbr.rel (0) target = $region89
    $region88: #{my_bert_forward.1} parent=1 // pred_region
      %3504 = dma.done [#allocation3], 32
    $region89: #{my_bert_forward.1} parent=1 // pred_fallthru
      _
    %3505 = vsyncpa [#allocation3], 1

</llo_original>
